<compile_context>
chip_gen: v7x
topology: tpu7x:2x2x1
jax: 0.10.0
libtpu: 0.0.40
codegen_flags: <defaults>
</compile_context>

<pallas_src>
import math

import jax
import jax.numpy as jnp
from jax import lax
from jax.experimental import pallas as pl
from jax.experimental.pallas import tpu as pltpu

# Constants from the reference implementation.
B_J0 = 0.01
BETA = 1.8        # isAdapt=1 path
R_M = 1.0
DT = 1.0
# TODO(synk): tau_m is an args-provided scalar in the original script; it is
# fixed here.  If it becomes a learned parameter, pass exp(-dt/tau_m) into the
# kernel as an operand instead of baking it into ALPHA.
TAU_M = 20.0
ALPHA = math.exp(-DT / TAU_M)


def _lsnn_kernel(x_ref,                       # (T*N, IN)   all timestep slabs
                 wi1_ref, b1_ref, wh1_ref,    # layer 1 (b1 = bi1 + bh1)
                 w2s_ref, b2_ref,             # layer 2: stacked [wi2; wh2], b2 = bi2 + bh2
                 wi3_ref, b3_ref,             # layer 3 (feed-forward)
                 wo_ref, bo_ref,              # readout
                 ro1_ref, ro2_ref, ro3_ref,   # exp(-dt/tau_adp) per layer
                 out_ref,                     # (N, OUT)
                 xproj_ref):                  # VMEM scratch (T*N, H1)
    TN = x_ref.shape[0]
    H1 = wh1_ref.shape[0]
    H2 = w2s_ref.shape[1]
    H3 = wi3_ref.shape[1]
    N = out_ref.shape[0]
    T = TN // N
    f32 = jnp.float32

    alpha = jnp.float32(ALPHA)
    one_m_alpha = 1.0 - alpha

    # ---- hoisted input projection: one big MXU matmul for all T steps ----
    xproj_ref[...] = (jnp.dot(x_ref[...], wi1_ref[...],
                              preferred_element_type=f32) + b1_ref[...])

    # ---- hoist + broadcast all time-invariant operands once (no per-step
    #      broadcast_in_dim re-emission) ----
    ro1 = jnp.broadcast_to(ro1_ref[...], (N, H1))
    ro2 = jnp.broadcast_to(ro2_ref[...], (N, H2))
    ro3 = jnp.broadcast_to(ro3_ref[...], (N, H3))
    bomr1 = BETA * (1.0 - ro1)          # beta folded into adaptation state
    bomr2 = BETA * (1.0 - ro2)
    bomr3 = BETA * (1.0 - ro3)
    bias2 = jnp.broadcast_to(b2_ref[...], (N, H2))
    bias3 = jnp.broadcast_to(b3_ref[...], (N, H3))

    def mem_update(inputs, mem, spike, ro, bomr, Bb):
        # mem_update_NU_adp, isAdapt=1, carrying Bb == BETA * b.
        Bb_new = ro * Bb + bomr * spike
        B = B_J0 + Bb_new
        mem_new = mem * alpha + one_m_alpha * (R_M * inputs) - B * spike * DT
        spike_new = (mem_new - B > 0.0).astype(f32)     # ActFun_adp forward
        return mem_new, spike_new, Bb_new

    def one_step(t, carry):
        m1, s1, Bb1, m2, s2, Bb2, m3, s3, Bb3, s3sum = carry

        # Weights re-read from VMEM each step: vld slots are idle and this
        # keeps vreg pressure below the spill point.
        wh1 = wh1_ref[...]
        w2s = w2s_ref[...]
        wi3 = wi3_ref[...]

        # layer 1: hoisted i2h_1(x_t) + h2h_1(spike1_old)
        base = pl.multiple_of(t * N, N)
        h1 = (xproj_ref[pl.ds(base, N), :]
              + jnp.dot(s1, wh1, preferred_element_type=f32))
        m1, s1n, Bb1 = mem_update(h1, m1, s1, ro1, bomr1, Bb1)

        # layer 2: fused i2h_2(spike1_new) + h2h_2(spike2_old) -> one K=128 matmul
        lhs2 = jnp.concatenate([s1n, s2], axis=1)
        h2 = jnp.dot(lhs2, w2s, preferred_element_type=f32) + bias2
        m2, s2n, Bb2 = mem_update(h2, m2, s2, ro2, bomr2, Bb2)

        # layer 3: i2h_3(spike2_new)  (feed-forward only)
        h3 = jnp.dot(s2n, wi3, preferred_element_type=f32) + bias3
        m3, s3n, Bb3 = mem_update(h3, m3, s3, ro3, bomr3, Bb3)

        # deferred readout: accumulate spikes only
        return (m1, s1n, Bb1, m2, s2n, Bb2, m3, s3n, Bb3, s3sum + s3n)

    bb0 = jnp.float32(BETA) * jnp.float32(B_J0)
    z1 = jnp.zeros((N, H1), f32)
    z2 = jnp.zeros((N, H2), f32)
    z3 = jnp.zeros((N, H3), f32)
    init = (z1, z1, jnp.full((N, H1), bb0, f32),
            z2, z2, jnp.full((N, H2), bb0, f32),
            z3, z3, jnp.full((N, H3), bb0, f32),
            z3)

    # Manually unrolled time loop (T is a static Python int here).
    if T % 7 == 0:
        unroll = 7
    elif T % 4 == 0:
        unroll = 4
    elif T % 2 == 0:
        unroll = 2
    else:
        unroll = 1

    def unrolled_body(i, carry):
        for u in range(unroll):
            carry = one_step(i * unroll + u, carry)
        return carry

    carry = lax.fori_loop(0, T // unroll, unrolled_body, init)
    s3sum = carry[-1]

    # Deferred readout: sum_t(s3 @ wo + bo) / T  ==  (sum_t s3) @ wo / T + bo
    out_ref[...] = (jnp.dot(s3sum, wo_ref[...], preferred_element_type=f32)
                    * jnp.float32(1.0 / T) + bo_ref[...])


def lsnn_forward(x_steps, params):
    """x_steps: (T, N, IN) float32. params: dict of transposed weights / biases."""
    T, N, IN = x_steps.shape
    H1 = params["wi1"].shape[1]
    H2 = params["wi2"].shape[1]
    H3 = params["wi3"].shape[1]
    OUT = params["wo"].shape[1]
    f32 = jnp.float32

    # Wrapper-side, one-time preprocessing of time-invariant parameters.
    x2d = x_steps.reshape(T * N, IN).astype(f32)
    b1c = (params["bi1"] + params["bh1"]).astype(f32)           # combined layer-1 bias
    b2c = (params["bi2"] + params["bh2"]).astype(f32)           # combined layer-2 bias
    w2s = jnp.concatenate([params["wi2"], params["wh2"]], axis=0).astype(f32)  # (H1+H2, H2)
    ro1 = jnp.exp(-DT / params["tau1"]).astype(f32)
    ro2 = jnp.exp(-DT / params["tau2"]).astype(f32)
    ro3 = jnp.exp(-DT / params["tau3"]).astype(f32)

    vmem = pl.BlockSpec(memory_space=pltpu.MemorySpace.VMEM)    # whole array in VMEM
    return pl.pallas_call(
        _lsnn_kernel,
        out_shape=jax.ShapeDtypeStruct((N, OUT), f32),
        in_specs=[vmem] * 13,
        out_specs=pl.BlockSpec(memory_space=pltpu.MemorySpace.VMEM),
        scratch_shapes=[pltpu.VMEM((T * N, H1), f32)],          # hoisted input projection
    )(
        x2d,
        params["wi1"].astype(f32), b1c, params["wh1"].astype(f32),
        w2s, b2c,
        params["wi3"].astype(f32), params["bi3"].astype(f32),
        params["wo"].astype(f32), params["bo"].astype(f32),
        ro1, ro2, ro3,
    )


def build_time_slabs(x_flat, input_size, stride, T):
    """Reproduce the (quirky) PyTorch slicing: the condition uses T, not 784."""
    slabs = []
    for step in range(T):
        start_idx = step * stride
        if start_idx < T - input_size:
            slabs.append(x_flat[:, start_idx:start_idx + input_size])
        else:
            slabs.append(x_flat[:, -input_size:])
    return jnp.stack(slabs, axis=0)   # (T, N, IN)


def reference_forward(x_steps, params):
    """Pure-JAX reference of LSNN_multi_2RNN.forward for correctness checking."""
    T, N, IN = x_steps.shape
    H1 = params["wi1"].shape[1]
    H2 = params["wi2"].shape[1]
    H3 = params["wi3"].shape[1]
    OUT = params["wo"].shape[1]
    alpha = jnp.float32(ALPHA)

    def mem_update(inputs, mem, spike, tau_adp, b):
        ro = jnp.exp(-DT / tau_adp)
        b = ro * b + (1.0 - ro) * spike
        B = B_J0 + BETA * b
        mem = mem * alpha + (1.0 - alpha) * R_M * inputs - B * spike * DT
        spike = (mem - B > 0.0).astype(jnp.float32)
        return mem, spike, b

    m1 = jnp.zeros((N, H1)); s1 = jnp.zeros((N, H1)); b1 = jnp.full((N, H1), B_J0)
    m2 = jnp.zeros((N, H2)); s2 = jnp.zeros((N, H2)); b2 = jnp.full((N, H2), B_J0)
    m3 = jnp.zeros((N, H3)); s3 = jnp.zeros((N, H3)); b3 = jnp.full((N, H3), B_J0)
    acc = jnp.zeros((N, OUT))
    for t in range(T):
        x = x_steps[t]
        h1 = x @ params["wi1"] + params["bi1"] + s1 @ params["wh1"] + params["bh1"]
        m1, s1, b1 = mem_update(h1, m1, s1, params["tau1"], b1)
        h2 = s1 @ params["wi2"] + params["bi2"] + s2 @ params["wh2"] + params["bh2"]
        m2, s2, b2 = mem_update(h2, m2, s2, params["tau2"], b2)
        h3 = s2 @ params["wi3"] + params["bi3"]
        m3, s3, b3 = mem_update(h3, m3, s3, params["tau3"], b3)
        acc = acc + s3 @ params["wo"] + params["bo"]
    return acc / T


def make_params(key, IN, H1, H2, H3, OUT):
    """Deterministic synthetic parameter init (shapes match the nn.Module)."""
    ks = jax.random.split(key, 6)
    f32 = jnp.float32

    def xavier_q(k, fan_in, fan_out):
        lim = math.sqrt(6.0 / (fan_in + fan_out))
        # PyTorch weight is (out, in); we store transposed (in, out).
        w = jax.random.uniform(k, (fan_in, fan_out), f32, -lim, lim)
        # Quantize weights to multiples of 2^-8 so every matmul is exact for
        # binary/8-bit-grid operands regardless of MXU pass count or XLA
        # matmul precision; keeps the 1e-5 parity check engine-agnostic.
        return jnp.round(w * 256.0) / 256.0

    params = {
        "wi1": xavier_q(ks[0], IN, H1),  "bi1": jnp.zeros((1, H1), f32),
        # TODO(synk): orthogonal init for h2h weights approximated with
        # xavier-uniform (synthetic weights only; the kernel is init-agnostic).
        "wh1": xavier_q(ks[1], H1, H1),  "bh1": jnp.zeros((1, H1), f32),
        "wi2": xavier_q(ks[2], H1, H2),  "bi2": jnp.zeros((1, H2), f32),
        "wh2": xavier_q(ks[3], H2, H2),  "bh2": jnp.zeros((1, H2), f32),
        "wi3": xavier_q(ks[4], H2, H3),  "bi3": jnp.zeros((1, H3), f32),
        "wo":  xavier_q(ks[5], H3, OUT), "bo":  jnp.zeros((1, OUT), f32),
        "tau1": jnp.full((1, H1), 700.0, f32),
        "tau2": jnp.full((1, H2), 700.0, f32),
        "tau3": jnp.full((1, H3), 700.0, f32),
    }
    return params


if __name__ == "__main__":
    # MNIST-like input (N, 1, 28, 28), input_size = stride = 28
    # -> T = 784 // 28 = 28 timesteps, cfg_fc = [64, 64, 64], output_size = 10.
    N, C, H, W = 8, 1, 28, 28
    IN = 28
    STRIDE = IN
    T = (H * W) // STRIDE
    H1 = H2 = H3 = 64
    OUT = 10

    key = jax.random.PRNGKey(0)
    k_x, k_p = jax.random.split(key)
    x_nchw = jax.random.uniform(k_x, (N, C, H, W), jnp.float32)   # layout: NCHW
    x_nchw = jnp.round(x_nchw * 256.0) / 256.0                    # exact 8-bit pixel grid
    x_flat = x_nchw.reshape(N, -1)                                # input.view(N, -1)
    x_steps = build_time_slabs(x_flat, IN, STRIDE, T)             # (T, N, IN)

    params = make_params(k_p, IN, H1, H2, H3, OUT)

    out = jax.jit(lsnn_forward)(x_steps, params)
    out = jax.block_until_ready(out)

    ref = jax.jit(reference_forward)(x_steps, params)
    ref = jax.block_until_ready(ref)

    assert out.shape == (N, OUT)
    max_err = float(jnp.max(jnp.abs(out - ref)))
    assert max_err < 1e-5, f"max abs err {max_err}"

    print("KERNEL_OK")
</pallas_src>

<mosaic_0001>
module attributes {stable_mosaic.version = 11 : i64} {
  func.func @_lsnn_kernel(%arg0: memref<224x28xf32, #tpu.memory_space<vmem>>, %arg1: memref<28x64xf32, #tpu.memory_space<vmem>>, %arg2: memref<1x64xf32, #tpu.memory_space<vmem>>, %arg3: memref<64x64xf32, #tpu.memory_space<vmem>>, %arg4: memref<128x64xf32, #tpu.memory_space<vmem>>, %arg5: memref<1x64xf32, #tpu.memory_space<vmem>>, %arg6: memref<64x64xf32, #tpu.memory_space<vmem>>, %arg7: memref<1x64xf32, #tpu.memory_space<vmem>>, %arg8: memref<64x10xf32, #tpu.memory_space<vmem>>, %arg9: memref<1x10xf32, #tpu.memory_space<vmem>>, %arg10: memref<1x64xf32, #tpu.memory_space<vmem>>, %arg11: memref<1x64xf32, #tpu.memory_space<vmem>>, %arg12: memref<1x64xf32, #tpu.memory_space<vmem>>, %arg13: memref<8x10xf32, #tpu.memory_space<vmem>>, %arg14: memref<224x64xf32, #tpu.memory_space<vmem>>) attributes {dimension_semantics = [], scalar_prefetch = 0 : i64, scratch_operands = 1 : i64, tpu.core_type = #tpu.core_type<tc>} {
    %cst = arith.constant 1.000000e+00 : f32
    %cst_0 = arith.constant 0.951229453 : f32
    %0 = arith.subf %cst, %cst_0 : f32
    %c0 = arith.constant 0 : index
    %c0_1 = arith.constant 0 : index
    %1 = vector.load %arg0[%c0, %c0_1] : memref<224x28xf32, #tpu.memory_space<vmem>>, vector<224x28xf32>
    %c0_2 = arith.constant 0 : index
    %c0_3 = arith.constant 0 : index
    %2 = vector.load %arg1[%c0_2, %c0_3] : memref<28x64xf32, #tpu.memory_space<vmem>>, vector<28x64xf32>
    %cst_4 = arith.constant dense<0.000000e+00> : vector<224x64xf32>
    %3 = tpu.matmul %1, %2, %cst_4 {dimension_numbers = #tpu.dot_dimension_numbers<[1], [0], [0], [1], [0, 0, 1, 1], [], []>} : vector<224x28xf32>, vector<28x64xf32>, vector<224x64xf32> -> vector<224x64xf32>
    %c0_5 = arith.constant 0 : index
    %c0_6 = arith.constant 0 : index
    %4 = vector.load %arg2[%c0_5, %c0_6] : memref<1x64xf32, #tpu.memory_space<vmem>>, vector<1x64xf32>
    %5 = vector.broadcast %4 : vector<1x64xf32> to vector<224x64xf32>
    %6 = arith.addf %3, %5 : vector<224x64xf32>
    %c0_7 = arith.constant 0 : index
    %c0_8 = arith.constant 0 : index
    %7 = vector.load %arg14[%c0_7, %c0_8] : memref<224x64xf32, #tpu.memory_space<vmem>>, vector<224x64xf32>
    tpu.vector_store %arg14[%c0_7, %c0_8], %6 {strides = array<i32>} : memref<224x64xf32, #tpu.memory_space<vmem>>, vector<224x64xf32>,
    %c0_9 = arith.constant 0 : index
    %c0_10 = arith.constant 0 : index
    %8 = vector.load %arg10[%c0_9, %c0_10] : memref<1x64xf32, #tpu.memory_space<vmem>>, vector<1x64xf32>
    %9 = vector.shape_cast %8 : vector<1x64xf32> to vector<1x64xf32>
    %10 = vector.broadcast %9 : vector<1x64xf32> to vector<8x64xf32>
    %c0_11 = arith.constant 0 : index
    %c0_12 = arith.constant 0 : index
    %11 = vector.load %arg11[%c0_11, %c0_12] : memref<1x64xf32, #tpu.memory_space<vmem>>, vector<1x64xf32>
    %12 = vector.shape_cast %11 : vector<1x64xf32> to vector<1x64xf32>
    %13 = vector.broadcast %12 : vector<1x64xf32> to vector<8x64xf32>
    %c0_13 = arith.constant 0 : index
    %c0_14 = arith.constant 0 : index
    %14 = vector.load %arg12[%c0_13, %c0_14] : memref<1x64xf32, #tpu.memory_space<vmem>>, vector<1x64xf32>
    %15 = vector.shape_cast %14 : vector<1x64xf32> to vector<1x64xf32>
    %16 = vector.broadcast %15 : vector<1x64xf32> to vector<8x64xf32>
    %cst_15 = arith.constant 1.000000e+00 : f32
    %17 = vector.broadcast %cst_15 : f32 to vector<8x64xf32>
    %18 = arith.subf %17, %10 : vector<8x64xf32>
    %cst_16 = arith.constant 1.800000e+00 : f32
    %19 = vector.broadcast %cst_16 : f32 to vector<8x64xf32>
    %20 = arith.mulf %19, %18 : vector<8x64xf32>
    %cst_17 = arith.constant 1.000000e+00 : f32
    %21 = vector.broadcast %cst_17 : f32 to vector<8x64xf32>
    %22 = arith.subf %21, %13 : vector<8x64xf32>
    %cst_18 = arith.constant 1.800000e+00 : f32
    %23 = vector.broadcast %cst_18 : f32 to vector<8x64xf32>
    %24 = arith.mulf %23, %22 : vector<8x64xf32>
    %cst_19 = arith.constant 1.000000e+00 : f32
    %25 = vector.broadcast %cst_19 : f32 to vector<8x64xf32>
    %26 = arith.subf %25, %16 : vector<8x64xf32>
    %cst_20 = arith.constant 1.800000e+00 : f32
    %27 = vector.broadcast %cst_20 : f32 to vector<8x64xf32>
    %28 = arith.mulf %27, %26 : vector<8x64xf32>
    %c0_21 = arith.constant 0 : index
    %c0_22 = arith.constant 0 : index
    %29 = vector.load %arg5[%c0_21, %c0_22] : memref<1x64xf32, #tpu.memory_space<vmem>>, vector<1x64xf32>
    %30 = vector.shape_cast %29 : vector<1x64xf32> to vector<1x64xf32>
    %31 = vector.broadcast %30 : vector<1x64xf32> to vector<8x64xf32>
    %c0_23 = arith.constant 0 : index
    %c0_24 = arith.constant 0 : index
    %32 = vector.load %arg7[%c0_23, %c0_24] : memref<1x64xf32, #tpu.memory_space<vmem>>, vector<1x64xf32>
    %33 = vector.shape_cast %32 : vector<1x64xf32> to vector<1x64xf32>
    %34 = vector.broadcast %33 : vector<1x64xf32> to vector<8x64xf32>
    %cst_25 = arith.constant 1.800000e+00 : f32
    %cst_26 = arith.constant 0.00999999977 : f32
    %35 = arith.mulf %cst_25, %cst_26 : f32
    %cst_27 = arith.constant 0.000000e+00 : f32
    %36 = vector.broadcast %cst_27 : f32 to vector<8x64xf32>
    %cst_28 = arith.constant 0.000000e+00 : f32
    %37 = vector.broadcast %cst_28 : f32 to vector<8x64xf32>
    %cst_29 = arith.constant 0.000000e+00 : f32
    %38 = vector.broadcast %cst_29 : f32 to vector<8x64xf32>
    %39 = vector.broadcast %35 : f32 to vector<8x64xf32>
    %40 = vector.broadcast %35 : f32 to vector<8x64xf32>
    %41 = vector.broadcast %35 : f32 to vector<8x64xf32>
    %cst_30 = arith.constant 0.951229453 : f32
    %c0_i32 = arith.constant 0 : i32
    %c4_i32 = arith.constant 4 : i32
    %42 = arith.addi %c0_i32, %c4_i32 : i32
    %c1_i32 = arith.constant 1 : i32
    %43:10 = scf.for %arg15 = %c0_i32 to %42 step %c1_i32 iter_args(%arg16 = %36, %arg17 = %36, %arg18 = %39, %arg19 = %37, %arg20 = %37, %arg21 = %40, %arg22 = %38, %arg23 = %38, %arg24 = %41, %arg25 = %38) -> (vector<8x64xf32>, vector<8x64xf32>, vector<8x64xf32>, vector<8x64xf32>, vector<8x64xf32>, vector<8x64xf32>, vector<8x64xf32>, vector<8x64xf32>, vector<8x64xf32>, vector<8x64xf32>)  : i32 {
      %c7_i32 = arith.constant 7 : i32
      %52 = arith.muli %arg15, %c7_i32 : i32
      %c0_i32_40 = arith.constant 0 : i32
      %53 = arith.addi %52, %c0_i32_40 : i32
      %c0_41 = arith.constant 0 : index
      %c0_42 = arith.constant 0 : index
      %54 = vector.load %arg3[%c0_41, %c0_42] : memref<64x64xf32, #tpu.memory_space<vmem>>, vector<64x64xf32>
      %c0_43 = arith.constant 0 : index
      %c0_44 = arith.constant 0 : index
      %55 = vector.load %arg4[%c0_43, %c0_44] : memref<128x64xf32, #tpu.memory_space<vmem>>, vector<128x64xf32>
      %c0_45 = arith.constant 0 : index
      %c0_46 = arith.constant 0 : index
      %56 = vector.load %arg6[%c0_45, %c0_46] : memref<64x64xf32, #tpu.memory_space<vmem>>, vector<64x64xf32>
      %c8_i32 = arith.constant 8 : i32
      %57 = arith.muli %53, %c8_i32 : i32
      %58 = tpu.assume_multiple %57, 8 : i32
      %59 = arith.index_cast %58 : i32 to index
      %c0_47 = arith.constant 0 : index
      %60 = vector.load %arg14[%59, %c0_47] : memref<224x64xf32, #tpu.memory_space<vmem>>, vector<8x64xf32>
      %cst_48 = arith.constant dense<0.000000e+00> : vector<8x64xf32>
      %61 = tpu.matmul %arg17, %54, %cst_48 {dimension_numbers = #tpu.dot_dimension_numbers<[1], [0], [0], [1], [0, 0, 1, 1], [], []>} : vector<8x64xf32>, vector<64x64xf32>, vector<8x64xf32> -> vector<8x64xf32>
      %62 = arith.addf %60, %61 : vector<8x64xf32>
      %63 = arith.mulf %10, %arg18 : vector<8x64xf32>
      %64 = arith.mulf %20, %arg17 : vector<8x64xf32>
      %65 = arith.addf %63, %64 : vector<8x64xf32>
      %cst_49 = arith.constant 0.00999999977 : f32
      %66 = vector.broadcast %cst_49 : f32 to vector<8x64xf32>
      %67 = arith.addf %66, %65 : vector<8x64xf32>
      %68 = vector.broadcast %cst_30 : f32 to vector<8x64xf32>
      %69 = arith.mulf %arg16, %68 : vector<8x64xf32>
      %cst_50 = arith.constant 1.000000e+00 : f32
      %70 = vector.broadcast %cst_50 : f32 to vector<8x64xf32>
      %71 = arith.mulf %70, %62 : vector<8x64xf32>
      %72 = vector.broadcast %0 : f32 to vector<8x64xf32>
      %73 = arith.mulf %72, %71 : vector<8x64xf32>
      %74 = arith.addf %69, %73 : vector<8x64xf32>
      %75 = arith.mulf %67, %arg17 : vector<8x64xf32>
      %cst_51 = arith.constant 1.000000e+00 : f32
      %76 = vector.broadcast %cst_51 : f32 to vector<8x64xf32>
      %77 = arith.mulf %75, %76 : vector<8x64xf32>
      %78 = arith.subf %74, %77 : vector<8x64xf32>
      %79 = arith.subf %78, %67 : vector<8x64xf32>
      %cst_52 = arith.constant 0.000000e+00 : f32
      %80 = vector.broadcast %cst_52 : f32 to vector<8x64xf32>
      %81 = arith.cmpf ogt, %79, %80 : vector<8x64xf32>
      %82 = arith.extui %81 : vector<8x64xi1> to vector<8x64xi32>
      %83 = arith.sitofp %82 : vector<8x64xi32> to vector<8x64xf32>
      %84 = tpu.concatenate %83, %arg20 in 1 : vector<8x64xf32>, vector<8x64xf32> -> vector<8x128xf32>
      %cst_53 = arith.constant dense<0.000000e+00> : vector<8x64xf32>
      %85 = tpu.matmul %84, %55, %cst_53 {dimension_numbers = #tpu.dot_dimension_numbers<[1], [0], [0], [1], [0, 0, 1, 1], [], []>} : vector<8x128xf32>, vector<128x64xf32>, vector<8x64xf32> -> vector<8x64xf32>
      %86 = arith.addf %85, %31 : vector<8x64xf32>
      %87 = arith.mulf %13, %arg21 : vector<8x64xf32>
      %88 = arith.mulf %24, %arg20 : vector<8x64xf32>
      %89 = arith.addf %87, %88 : vector<8x64xf32>
      %cst_54 = arith.constant 0.00999999977 : f32
      %90 = vector.broadcast %cst_54 : f32 to vector<8x64xf32>
      %91 = arith.addf %90, %89 : vector<8x64xf32>
      %92 = vector.broadcast %cst_30 : f32 to vector<8x64xf32>
      %93 = arith.mulf %arg19, %92 : vector<8x64xf32>
      %cst_55 = arith.constant 1.000000e+00 : f32
      %94 = vector.broadcast %cst_55 : f32 to vector<8x64xf32>
      %95 = arith.mulf %94, %86 : vector<8x64xf32>
      %96 = vector.broadcast %0 : f32 to vector<8x64xf32>
      %97 = arith.mulf %96, %95 : vector<8x64xf32>
      %98 = arith.addf %93, %97 : vector<8x64xf32>
      %99 = arith.mulf %91, %arg20 : vector<8x64xf32>
      %cst_56 = arith.constant 1.000000e+00 : f32
      %100 = vector.broadcast %cst_56 : f32 to vector<8x64xf32>
      %101 = arith.mulf %99, %100 : vector<8x64xf32>
      %102 = arith.subf %98, %101 : vector<8x64xf32>
      %103 = arith.subf %102, %91 : vector<8x64xf32>
      %cst_57 = arith.constant 0.000000e+00 : f32
      %104 = vector.broadcast %cst_57 : f32 to vector<8x64xf32>
      %105 = arith.cmpf ogt, %103, %104 : vector<8x64xf32>
      %106 = arith.extui %105 : vector<8x64xi1> to vector<8x64xi32>
      %107 = arith.sitofp %106 : vector<8x64xi32> to vector<8x64xf32>
      %cst_58 = arith.constant dense<0.000000e+00> : vector<8x64xf32>
      %108 = tpu.matmul %107, %56, %cst_58 {dimension_numbers = #tpu.dot_dimension_numbers<[1], [0], [0], [1], [0, 0, 1, 1], [], []>} : vector<8x64xf32>, vector<64x64xf32>, vector<8x64xf32> -> vector<8x64xf32>
      %109 = arith.addf %108, %34 : vector<8x64xf32>
      %110 = arith.mulf %16, %arg24 : vector<8x64xf32>
      %111 = arith.mulf %28, %arg23 : vector<8x64xf32>
      %112 = arith.addf %110, %111 : vector<8x64xf32>
      %cst_59 = arith.constant 0.00999999977 : f32
      %113 = vector.broadcast %cst_59 : f32 to vector<8x64xf32>
      %114 = arith.addf %113, %112 : vector<8x64xf32>
      %115 = vector.broadcast %cst_30 : f32 to vector<8x64xf32>
      %116 = arith.mulf %arg22, %115 : vector<8x64xf32>
      %cst_60 = arith.constant 1.000000e+00 : f32
      %117 = vector.broadcast %cst_60 : f32 to vector<8x64xf32>
      %118 = arith.mulf %117, %109 : vector<8x64xf32>
      %119 = vector.broadcast %0 : f32 to vector<8x64xf32>
      %120 = arith.mulf %119, %118 : vector<8x64xf32>
      %121 = arith.addf %116, %120 : vector<8x64xf32>
      %122 = arith.mulf %114, %arg23 : vector<8x64xf32>
      %cst_61 = arith.constant 1.000000e+00 : f32
      %123 = vector.broadcast %cst_61 : f32 to vector<8x64xf32>
      %124 = arith.mulf %122, %123 : vector<8x64xf32>
      %125 = arith.subf %121, %124 : vector<8x64xf32>
      %126 = arith.subf %125, %114 : vector<8x64xf32>
      %cst_62 = arith.constant 0.000000e+00 : f32
      %127 = vector.broadcast %cst_62 : f32 to vector<8x64xf32>
      %128 = arith.cmpf ogt, %126, %127 : vector<8x64xf32>
      %129 = arith.extui %128 : vector<8x64xi1> to vector<8x64xi32>
      %130 = arith.sitofp %129 : vector<8x64xi32> to vector<8x64xf32>
      %131 = arith.addf %arg25, %130 : vector<8x64xf32>
      %c7_i32_63 = arith.constant 7 : i32
      %132 = arith.muli %arg15, %c7_i32_63 : i32
      %c1_i32_64 = arith.constant 1 : i32
      %133 = arith.addi %132, %c1_i32_64 : i32
      %c0_65 = arith.constant 0 : index
      %c0_66 = arith.constant 0 : index
      %134 = vector.load %arg3[%c0_65, %c0_66] : memref<64x64xf32, #tpu.memory_space<vmem>>, vector<64x64xf32>
      %c0_67 = arith.constant 0 : index
      %c0_68 = arith.constant 0 : index
      %135 = vector.load %arg4[%c0_67, %c0_68] : memref<128x64xf32, #tpu.memory_space<vmem>>, vector<128x64xf32>
      %c0_69 = arith.constant 0 : index
      %c0_70 = arith.constant 0 : index
      %136 = vector.load %arg6[%c0_69, %c0_70] : memref<64x64xf32, #tpu.memory_space<vmem>>, vector<64x64xf32>
      %c8_i32_71 = arith.constant 8 : i32
      %137 = arith.muli %133, %c8_i32_71 : i32
      %138 = tpu.assume_multiple %137, 8 : i32
      %139 = arith.index_cast %138 : i32 to index
      %c0_72 = arith.constant 0 : index
      %140 = vector.load %arg14[%139, %c0_72] : memref<224x64xf32, #tpu.memory_space<vmem>>, vector<8x64xf32>
      %cst_73 = arith.constant dense<0.000000e+00> : vector<8x64xf32>
      %141 = tpu.matmul %83, %134, %cst_73 {dimension_numbers = #tpu.dot_dimension_numbers<[1], [0], [0], [1], [0, 0, 1, 1], [], []>} : vector<8x64xf32>, vector<64x64xf32>, vector<8x64xf32> -> vector<8x64xf32>
      %142 = arith.addf %140, %141 : vector<8x64xf32>
      %143 = arith.mulf %10, %65 : vector<8x64xf32>
      %144 = arith.mulf %20, %83 : vector<8x64xf32>
      %145 = arith.addf %143, %144 : vector<8x64xf32>
      %cst_74 = arith.constant 0.00999999977 : f32
      %146 = vector.broadcast %cst_74 : f32 to vector<8x64xf32>
      %147 = arith.addf %146, %145 : vector<8x64xf32>
      %148 = vector.broadcast %cst_30 : f32 to vector<8x64xf32>
      %149 = arith.mulf %78, %148 : vector<8x64xf32>
      %cst_75 = arith.constant 1.000000e+00 : f32
      %150 = vector.broadcast %cst_75 : f32 to vector<8x64xf32>
      %151 = arith.mulf %150, %142 : vector<8x64xf32>
      %152 = vector.broadcast %0 : f32 to vector<8x64xf32>
      %153 = arith.mulf %152, %151 : vector<8x64xf32>
      %154 = arith.addf %149, %153 : vector<8x64xf32>
      %155 = arith.mulf %147, %83 : vector<8x64xf32>
      %cst_76 = arith.constant 1.000000e+00 : f32
      %156 = vector.broadcast %cst_76 : f32 to vector<8x64xf32>
      %157 = arith.mulf %155, %156 : vector<8x64xf32>
      %158 = arith.subf %154, %157 : vector<8x64xf32>
      %159 = arith.subf %158, %147 : vector<8x64xf32>
      %cst_77 = arith.constant 0.000000e+00 : f32
      %160 = vector.broadcast %cst_77 : f32 to vector<8x64xf32>
      %161 = arith.cmpf ogt, %159, %160 : vector<8x64xf32>
      %162 = arith.extui %161 : vector<8x64xi1> to vector<8x64xi32>
      %163 = arith.sitofp %162 : vector<8x64xi32> to vector<8x64xf32>
      %164 = tpu.concatenate %163, %107 in 1 : vector<8x64xf32>, vector<8x64xf32> -> vector<8x128xf32>
      %cst_78 = arith.constant dense<0.000000e+00> : vector<8x64xf32>
      %165 = tpu.matmul %164, %135, %cst_78 {dimension_numbers = #tpu.dot_dimension_numbers<[1], [0], [0], [1], [0, 0, 1, 1], [], []>} : vector<8x128xf32>, vector<128x64xf32>, vector<8x64xf32> -> vector<8x64xf32>
      %166 = arith.addf %165, %31 : vector<8x64xf32>
      %167 = arith.mulf %13, %89 : vector<8x64xf32>
      %168 = arith.mulf %24, %107 : vector<8x64xf32>
      %169 = arith.addf %167, %168 : vector<8x64xf32>
      %cst_79 = arith.constant 0.00999999977 : f32
      %170 = vector.broadcast %cst_79 : f32 to vector<8x64xf32>
      %171 = arith.addf %170, %169 : vector<8x64xf32>
      %172 = vector.broadcast %cst_30 : f32 to vector<8x64xf32>
      %173 = arith.mulf %102, %172 : vector<8x64xf32>
      %cst_80 = arith.constant 1.000000e+00 : f32
      %174 = vector.broadcast %cst_80 : f32 to vector<8x64xf32>
      %175 = arith.mulf %174, %166 : vector<8x64xf32>
      %176 = vector.broadcast %0 : f32 to vector<8x64xf32>
      %177 = arith.mulf %176, %175 : vector<8x64xf32>
      %178 = arith.addf %173, %177 : vector<8x64xf32>
      %179 = arith.mulf %171, %107 : vector<8x64xf32>
      %cst_81 = arith.constant 1.000000e+00 : f32
      %180 = vector.broadcast %cst_81 : f32 to vector<8x64xf32>
      %181 = arith.mulf %179, %180 : vector<8x64xf32>
      %182 = arith.subf %178, %181 : vector<8x64xf32>
      %183 = arith.subf %182, %171 : vector<8x64xf32>
      %cst_82 = arith.constant 0.000000e+00 : f32
      %184 = vector.broadcast %cst_82 : f32 to vector<8x64xf32>
      %185 = arith.cmpf ogt, %183, %184 : vector<8x64xf32>
      %186 = arith.extui %185 : vector<8x64xi1> to vector<8x64xi32>
      %187 = arith.sitofp %186 : vector<8x64xi32> to vector<8x64xf32>
      %cst_83 = arith.constant dense<0.000000e+00> : vector<8x64xf32>
      %188 = tpu.matmul %187, %136, %cst_83 {dimension_numbers = #tpu.dot_dimension_numbers<[1], [0], [0], [1], [0, 0, 1, 1], [], []>} : vector<8x64xf32>, vector<64x64xf32>, vector<8x64xf32> -> vector<8x64xf32>
      %189 = arith.addf %188, %34 : vector<8x64xf32>
      %190 = arith.mulf %16, %112 : vector<8x64xf32>
      %191 = arith.mulf %28, %130 : vector<8x64xf32>
      %192 = arith.addf %190, %191 : vector<8x64xf32>
      %cst_84 = arith.constant 0.00999999977 : f32
      %193 = vector.broadcast %cst_84 : f32 to vector<8x64xf32>
      %194 = arith.addf %193, %192 : vector<8x64xf32>
      %195 = vector.broadcast %cst_30 : f32 to vector<8x64xf32>
      %196 = arith.mulf %125, %195 : vector<8x64xf32>
      %cst_85 = arith.constant 1.000000e+00 : f32
      %197 = vector.broadcast %cst_85 : f32 to vector<8x64xf32>
      %198 = arith.mulf %197, %189 : vector<8x64xf32>
      %199 = vector.broadcast %0 : f32 to vector<8x64xf32>
      %200 = arith.mulf %199, %198 : vector<8x64xf32>
      %201 = arith.addf %196, %200 : vector<8x64xf32>
      %202 = arith.mulf %194, %130 : vector<8x64xf32>
      %cst_86 = arith.constant 1.000000e+00 : f32
      %203 = vector.broadcast %cst_86 : f32 to vector<8x64xf32>
      %204 = arith.mulf %202, %203 : vector<8x64xf32>
      %205 = arith.subf %201, %204 : vector<8x64xf32>
      %206 = arith.subf %205, %194 : vector<8x64xf32>
      %cst_87 = arith.constant 0.000000e+00 : f32
      %207 = vector.broadcast %cst_87 : f32 to vector<8x64xf32>
      %208 = arith.cmpf ogt, %206, %207 : vector<8x64xf32>
      %209 = arith.extui %208 : vector<8x64xi1> to vector<8x64xi32>
      %210 = arith.sitofp %209 : vector<8x64xi32> to vector<8x64xf32>
      %211 = arith.addf %131, %210 : vector<8x64xf32>
      %c7_i32_88 = arith.constant 7 : i32
      %212 = arith.muli %arg15, %c7_i32_88 : i32
      %c2_i32 = arith.constant 2 : i32
      %213 = arith.addi %212, %c2_i32 : i32
      %c0_89 = arith.constant 0 : index
      %c0_90 = arith.constant 0 : index
      %214 = vector.load %arg3[%c0_89, %c0_90] : memref<64x64xf32, #tpu.memory_space<vmem>>, vector<64x64xf32>
      %c0_91 = arith.constant 0 : index
      %c0_92 = arith.constant 0 : index
      %215 = vector.load %arg4[%c0_91, %c0_92] : memref<128x64xf32, #tpu.memory_space<vmem>>, vector<128x64xf32>
      %c0_93 = arith.constant 0 : index
      %c0_94 = arith.constant 0 : index
      %216 = vector.load %arg6[%c0_93, %c0_94] : memref<64x64xf32, #tpu.memory_space<vmem>>, vector<64x64xf32>
      %c8_i32_95 = arith.constant 8 : i32
      %217 = arith.muli %213, %c8_i32_95 : i32
      %218 = tpu.assume_multiple %217, 8 : i32
      %219 = arith.index_cast %218 : i32 to index
      %c0_96 = arith.constant 0 : index
      %220 = vector.load %arg14[%219, %c0_96] : memref<224x64xf32, #tpu.memory_space<vmem>>, vector<8x64xf32>
      %cst_97 = arith.constant dense<0.000000e+00> : vector<8x64xf32>
      %221 = tpu.matmul %163, %214, %cst_97 {dimension_numbers = #tpu.dot_dimension_numbers<[1], [0], [0], [1], [0, 0, 1, 1], [], []>} : vector<8x64xf32>, vector<64x64xf32>, vector<8x64xf32> -> vector<8x64xf32>
      %222 = arith.addf %220, %221 : vector<8x64xf32>
      %223 = arith.mulf %10, %145 : vector<8x64xf32>
      %224 = arith.mulf %20, %163 : vector<8x64xf32>
      %225 = arith.addf %223, %224 : vector<8x64xf32>
      %cst_98 = arith.constant 0.00999999977 : f32
      %226 = vector.broadcast %cst_98 : f32 to vector<8x64xf32>
      %227 = arith.addf %226, %225 : vector<8x64xf32>
      %228 = vector.broadcast %cst_30 : f32 to vector<8x64xf32>
      %229 = arith.mulf %158, %228 : vector<8x64xf32>
      %cst_99 = arith.constant 1.000000e+00 : f32
      %230 = vector.broadcast %cst_99 : f32 to vector<8x64xf32>
      %231 = arith.mulf %230, %222 : vector<8x64xf32>
      %232 = vector.broadcast %0 : f32 to vector<8x64xf32>
      %233 = arith.mulf %232, %231 : vector<8x64xf32>
      %234 = arith.addf %229, %233 : vector<8x64xf32>
      %235 = arith.mulf %227, %163 : vector<8x64xf32>
      %cst_100 = arith.constant 1.000000e+00 : f32
      %236 = vector.broadcast %cst_100 : f32 to vector<8x64xf32>
      %237 = arith.mulf %235, %236 : vector<8x64xf32>
      %238 = arith.subf %234, %237 : vector<8x64xf32>
      %239 = arith.subf %238, %227 : vector<8x64xf32>
      %cst_101 = arith.constant 0.000000e+00 : f32
      %240 = vector.broadcast %cst_101 : f32 to vector<8x64xf32>
      %241 = arith.cmpf ogt, %239, %240 : vector<8x64xf32>
      %242 = arith.extui %241 : vector<8x64xi1> to vector<8x64xi32>
      %243 = arith.sitofp %242 : vector<8x64xi32> to vector<8x64xf32>
      %244 = tpu.concatenate %243, %187 in 1 : vector<8x64xf32>, vector<8x64xf32> -> vector<8x128xf32>
      %cst_102 = arith.constant dense<0.000000e+00> : vector<8x64xf32>
      %245 = tpu.matmul %244, %215, %cst_102 {dimension_numbers = #tpu.dot_dimension_numbers<[1], [0], [0], [1], [0, 0, 1, 1], [], []>} : vector<8x128xf32>, vector<128x64xf32>, vector<8x64xf32> -> vector<8x64xf32>
      %246 = arith.addf %245, %31 : vector<8x64xf32>
      %247 = arith.mulf %13, %169 : vector<8x64xf32>
      %248 = arith.mulf %24, %187 : vector<8x64xf32>
      %249 = arith.addf %247, %248 : vector<8x64xf32>
      %cst_103 = arith.constant 0.00999999977 : f32
      %250 = vector.broadcast %cst_103 : f32 to vector<8x64xf32>
      %251 = arith.addf %250, %249 : vector<8x64xf32>
      %252 = vector.broadcast %cst_30 : f32 to vector<8x64xf32>
      %253 = arith.mulf %182, %252 : vector<8x64xf32>
      %cst_104 = arith.constant 1.000000e+00 : f32
      %254 = vector.broadcast %cst_104 : f32 to vector<8x64xf32>
      %255 = arith.mulf %254, %246 : vector<8x64xf32>
      %256 = vector.broadcast %0 : f32 to vector<8x64xf32>
      %257 = arith.mulf %256, %255 : vector<8x64xf32>
      %258 = arith.addf %253, %257 : vector<8x64xf32>
      %259 = arith.mulf %251, %187 : vector<8x64xf32>
      %cst_105 = arith.constant 1.000000e+00 : f32
      %260 = vector.broadcast %cst_105 : f32 to vector<8x64xf32>
      %261 = arith.mulf %259, %260 : vector<8x64xf32>
      %262 = arith.subf %258, %261 : vector<8x64xf32>
      %263 = arith.subf %262, %251 : vector<8x64xf32>
      %cst_106 = arith.constant 0.000000e+00 : f32
      %264 = vector.broadcast %cst_106 : f32 to vector<8x64xf32>
      %265 = arith.cmpf ogt, %263, %264 : vector<8x64xf32>
      %266 = arith.extui %265 : vector<8x64xi1> to vector<8x64xi32>
      %267 = arith.sitofp %266 : vector<8x64xi32> to vector<8x64xf32>
      %cst_107 = arith.constant dense<0.000000e+00> : vector<8x64xf32>
      %268 = tpu.matmul %267, %216, %cst_107 {dimension_numbers = #tpu.dot_dimension_numbers<[1], [0], [0], [1], [0, 0, 1, 1], [], []>} : vector<8x64xf32>, vector<64x64xf32>, vector<8x64xf32> -> vector<8x64xf32>
      %269 = arith.addf %268, %34 : vector<8x64xf32>
      %270 = arith.mulf %16, %192 : vector<8x64xf32>
      %271 = arith.mulf %28, %210 : vector<8x64xf32>
      %272 = arith.addf %270, %271 : vector<8x64xf32>
      %cst_108 = arith.constant 0.00999999977 : f32
      %273 = vector.broadcast %cst_108 : f32 to vector<8x64xf32>
      %274 = arith.addf %273, %272 : vector<8x64xf32>
      %275 = vector.broadcast %cst_30 : f32 to vector<8x64xf32>
      %276 = arith.mulf %205, %275 : vector<8x64xf32>
      %cst_109 = arith.constant 1.000000e+00 : f32
      %277 = vector.broadcast %cst_109 : f32 to vector<8x64xf32>
      %278 = arith.mulf %277, %269 : vector<8x64xf32>
      %279 = vector.broadcast %0 : f32 to vector<8x64xf32>
      %280 = arith.mulf %279, %278 : vector<8x64xf32>
      %281 = arith.addf %276, %280 : vector<8x64xf32>
      %282 = arith.mulf %274, %210 : vector<8x64xf32>
      %cst_110 = arith.constant 1.000000e+00 : f32
      %283 = vector.broadcast %cst_110 : f32 to vector<8x64xf32>
      %284 = arith.mulf %282, %283 : vector<8x64xf32>
      %285 = arith.subf %281, %284 : vector<8x64xf32>
      %286 = arith.subf %285, %274 : vector<8x64xf32>
      %cst_111 = arith.constant 0.000000e+00 : f32
      %287 = vector.broadcast %cst_111 : f32 to vector<8x64xf32>
      %288 = arith.cmpf ogt, %286, %287 : vector<8x64xf32>
      %289 = arith.extui %288 : vector<8x64xi1> to vector<8x64xi32>
      %290 = arith.sitofp %289 : vector<8x64xi32> to vector<8x64xf32>
      %291 = arith.addf %211, %290 : vector<8x64xf32>
      %c7_i32_112 = arith.constant 7 : i32
      %292 = arith.muli %arg15, %c7_i32_112 : i32
      %c3_i32 = arith.constant 3 : i32
      %293 = arith.addi %292, %c3_i32 : i32
      %c0_113 = arith.constant 0 : index
      %c0_114 = arith.constant 0 : index
      %294 = vector.load %arg3[%c0_113, %c0_114] : memref<64x64xf32, #tpu.memory_space<vmem>>, vector<64x64xf32>
      %c0_115 = arith.constant 0 : index
      %c0_116 = arith.constant 0 : index
      %295 = vector.load %arg4[%c0_115, %c0_116] : memref<128x64xf32, #tpu.memory_space<vmem>>, vector<128x64xf32>
      %c0_117 = arith.constant 0 : index
      %c0_118 = arith.constant 0 : index
      %296 = vector.load %arg6[%c0_117, %c0_118] : memref<64x64xf32, #tpu.memory_space<vmem>>, vector<64x64xf32>
      %c8_i32_119 = arith.constant 8 : i32
      %297 = arith.muli %293, %c8_i32_119 : i32
      %298 = tpu.assume_multiple %297, 8 : i32
      %299 = arith.index_cast %298 : i32 to index
      %c0_120 = arith.constant 0 : index
      %300 = vector.load %arg14[%299, %c0_120] : memref<224x64xf32, #tpu.memory_space<vmem>>, vector<8x64xf32>
      %cst_121 = arith.constant dense<0.000000e+00> : vector<8x64xf32>
      %301 = tpu.matmul %243, %294, %cst_121 {dimension_numbers = #tpu.dot_dimension_numbers<[1], [0], [0], [1], [0, 0, 1, 1], [], []>} : vector<8x64xf32>, vector<64x64xf32>, vector<8x64xf32> -> vector<8x64xf32>
      %302 = arith.addf %300, %301 : vector<8x64xf32>
      %303 = arith.mulf %10, %225 : vector<8x64xf32>
      %304 = arith.mulf %20, %243 : vector<8x64xf32>
      %305 = arith.addf %303, %304 : vector<8x64xf32>
      %cst_122 = arith.constant 0.00999999977 : f32
      %306 = vector.broadcast %cst_122 : f32 to vector<8x64xf32>
      %307 = arith.addf %306, %305 : vector<8x64xf32>
      %308 = vector.broadcast %cst_30 : f32 to vector<8x64xf32>
      %309 = arith.mulf %238, %308 : vector<8x64xf32>
      %cst_123 = arith.constant 1.000000e+00 : f32
      %310 = vector.broadcast %cst_123 : f32 to vector<8x64xf32>
      %311 = arith.mulf %310, %302 : vector<8x64xf32>
      %312 = vector.broadcast %0 : f32 to vector<8x64xf32>
      %313 = arith.mulf %312, %311 : vector<8x64xf32>
      %314 = arith.addf %309, %313 : vector<8x64xf32>
      %315 = arith.mulf %307, %243 : vector<8x64xf32>
      %cst_124 = arith.constant 1.000000e+00 : f32
      %316 = vector.broadcast %cst_124 : f32 to vector<8x64xf32>
      %317 = arith.mulf %315, %316 : vector<8x64xf32>
      %318 = arith.subf %314, %317 : vector<8x64xf32>
      %319 = arith.subf %318, %307 : vector<8x64xf32>
      %cst_125 = arith.constant 0.000000e+00 : f32
      %320 = vector.broadcast %cst_125 : f32 to vector<8x64xf32>
      %321 = arith.cmpf ogt, %319, %320 : vector<8x64xf32>
      %322 = arith.extui %321 : vector<8x64xi1> to vector<8x64xi32>
      %323 = arith.sitofp %322 : vector<8x64xi32> to vector<8x64xf32>
      %324 = tpu.concatenate %323, %267 in 1 : vector<8x64xf32>, vector<8x64xf32> -> vector<8x128xf32>
      %cst_126 = arith.constant dense<0.000000e+00> : vector<8x64xf32>
      %325 = tpu.matmul %324, %295, %cst_126 {dimension_numbers = #tpu.dot_dimension_numbers<[1], [0], [0], [1], [0, 0, 1, 1], [], []>} : vector<8x128xf32>, vector<128x64xf32>, vector<8x64xf32> -> vector<8x64xf32>
      %326 = arith.addf %325, %31 : vector<8x64xf32>
      %327 = arith.mulf %13, %249 : vector<8x64xf32>
      %328 = arith.mulf %24, %267 : vector<8x64xf32>
      %329 = arith.addf %327, %328 : vector<8x64xf32>
      %cst_127 = arith.constant 0.00999999977 : f32
      %330 = vector.broadcast %cst_127 : f32 to vector<8x64xf32>
      %331 = arith.addf %330, %329 : vector<8x64xf32>
      %332 = vector.broadcast %cst_30 : f32 to vector<8x64xf32>
      %333 = arith.mulf %262, %332 : vector<8x64xf32>
      %cst_128 = arith.constant 1.000000e+00 : f32
      %334 = vector.broadcast %cst_128 : f32 to vector<8x64xf32>
      %335 = arith.mulf %334, %326 : vector<8x64xf32>
      %336 = vector.broadcast %0 : f32 to vector<8x64xf32>
      %337 = arith.mulf %336, %335 : vector<8x64xf32>
      %338 = arith.addf %333, %337 : vector<8x64xf32>
      %339 = arith.mulf %331, %267 : vector<8x64xf32>
      %cst_129 = arith.constant 1.000000e+00 : f32
      %340 = vector.broadcast %cst_129 : f32 to vector<8x64xf32>
      %341 = arith.mulf %339, %340 : vector<8x64xf32>
      %342 = arith.subf %338, %341 : vector<8x64xf32>
      %343 = arith.subf %342, %331 : vector<8x64xf32>
      %cst_130 = arith.constant 0.000000e+00 : f32
      %344 = vector.broadcast %cst_130 : f32 to vector<8x64xf32>
      %345 = arith.cmpf ogt, %343, %344 : vector<8x64xf32>
      %346 = arith.extui %345 : vector<8x64xi1> to vector<8x64xi32>
      %347 = arith.sitofp %346 : vector<8x64xi32> to vector<8x64xf32>
      %cst_131 = arith.constant dense<0.000000e+00> : vector<8x64xf32>
      %348 = tpu.matmul %347, %296, %cst_131 {dimension_numbers = #tpu.dot_dimension_numbers<[1], [0], [0], [1], [0, 0, 1, 1], [], []>} : vector<8x64xf32>, vector<64x64xf32>, vector<8x64xf32> -> vector<8x64xf32>
      %349 = arith.addf %348, %34 : vector<8x64xf32>
      %350 = arith.mulf %16, %272 : vector<8x64xf32>
      %351 = arith.mulf %28, %290 : vector<8x64xf32>
      %352 = arith.addf %350, %351 : vector<8x64xf32>
      %cst_132 = arith.constant 0.00999999977 : f32
      %353 = vector.broadcast %cst_132 : f32 to vector<8x64xf32>
      %354 = arith.addf %353, %352 : vector<8x64xf32>
      %355 = vector.broadcast %cst_30 : f32 to vector<8x64xf32>
      %356 = arith.mulf %285, %355 : vector<8x64xf32>
      %cst_133 = arith.constant 1.000000e+00 : f32
      %357 = vector.broadcast %cst_133 : f32 to vector<8x64xf32>
      %358 = arith.mulf %357, %349 : vector<8x64xf32>
      %359 = vector.broadcast %0 : f32 to vector<8x64xf32>
      %360 = arith.mulf %359, %358 : vector<8x64xf32>
      %361 = arith.addf %356, %360 : vector<8x64xf32>
      %362 = arith.mulf %354, %290 : vector<8x64xf32>
      %cst_134 = arith.constant 1.000000e+00 : f32
      %363 = vector.broadcast %cst_134 : f32 to vector<8x64xf32>
      %364 = arith.mulf %362, %363 : vector<8x64xf32>
      %365 = arith.subf %361, %364 : vector<8x64xf32>
      %366 = arith.subf %365, %354 : vector<8x64xf32>
      %cst_135 = arith.constant 0.000000e+00 : f32
      %367 = vector.broadcast %cst_135 : f32 to vector<8x64xf32>
      %368 = arith.cmpf ogt, %366, %367 : vector<8x64xf32>
      %369 = arith.extui %368 : vector<8x64xi1> to vector<8x64xi32>
      %370 = arith.sitofp %369 : vector<8x64xi32> to vector<8x64xf32>
      %371 = arith.addf %291, %370 : vector<8x64xf32>
      %c7_i32_136 = arith.constant 7 : i32
      %372 = arith.muli %arg15, %c7_i32_136 : i32
      %c4_i32_137 = arith.constant 4 : i32
      %373 = arith.addi %372, %c4_i32_137 : i32
      %c0_138 = arith.constant 0 : index
      %c0_139 = arith.constant 0 : index
      %374 = vector.load %arg3[%c0_138, %c0_139] : memref<64x64xf32, #tpu.memory_space<vmem>>, vector<64x64xf32>
      %c0_140 = arith.constant 0 : index
      %c0_141 = arith.constant 0 : index
      %375 = vector.load %arg4[%c0_140, %c0_141] : memref<128x64xf32, #tpu.memory_space<vmem>>, vector<128x64xf32>
      %c0_142 = arith.constant 0 : index
      %c0_143 = arith.constant 0 : index
      %376 = vector.load %arg6[%c0_142, %c0_143] : memref<64x64xf32, #tpu.memory_space<vmem>>, vector<64x64xf32>
      %c8_i32_144 = arith.constant 8 : i32
      %377 = arith.muli %373, %c8_i32_144 : i32
      %378 = tpu.assume_multiple %377, 8 : i32
      %379 = arith.index_cast %378 : i32 to index
      %c0_145 = arith.constant 0 : index
      %380 = vector.load %arg14[%379, %c0_145] : memref<224x64xf32, #tpu.memory_space<vmem>>, vector<8x64xf32>
      %cst_146 = arith.constant dense<0.000000e+00> : vector<8x64xf32>
      %381 = tpu.matmul %323, %374, %cst_146 {dimension_numbers = #tpu.dot_dimension_numbers<[1], [0], [0], [1], [0, 0, 1, 1], [], []>} : vector<8x64xf32>, vector<64x64xf32>, vector<8x64xf32> -> vector<8x64xf32>
      %382 = arith.addf %380, %381 : vector<8x64xf32>
      %383 = arith.mulf %10, %305 : vector<8x64xf32>
      %384 = arith.mulf %20, %323 : vector<8x64xf32>
      %385 = arith.addf %383, %384 : vector<8x64xf32>
      %cst_147 = arith.constant 0.00999999977 : f32
      %386 = vector.broadcast %cst_147 : f32 to vector<8x64xf32>
      %387 = arith.addf %386, %385 : vector<8x64xf32>
      %388 = vector.broadcast %cst_30 : f32 to vector<8x64xf32>
      %389 = arith.mulf %318, %388 : vector<8x64xf32>
      %cst_148 = arith.constant 1.000000e+00 : f32
      %390 = vector.broadcast %cst_148 : f32 to vector<8x64xf32>
      %391 = arith.mulf %390, %382 : vector<8x64xf32>
      %392 = vector.broadcast %0 : f32 to vector<8x64xf32>
      %393 = arith.mulf %392, %391 : vector<8x64xf32>
      %394 = arith.addf %389, %393 : vector<8x64xf32>
      %395 = arith.mulf %387, %323 : vector<8x64xf32>
      %cst_149 = arith.constant 1.000000e+00 : f32
      %396 = vector.broadcast %cst_149 : f32 to vector<8x64xf32>
      %397 = arith.mulf %395, %396 : vector<8x64xf32>
      %398 = arith.subf %394, %397 : vector<8x64xf32>
      %399 = arith.subf %398, %387 : vector<8x64xf32>
      %cst_150 = arith.constant 0.000000e+00 : f32
      %400 = vector.broadcast %cst_150 : f32 to vector<8x64xf32>
      %401 = arith.cmpf ogt, %399, %400 : vector<8x64xf32>
      %402 = arith.extui %401 : vector<8x64xi1> to vector<8x64xi32>
      %403 = arith.sitofp %402 : vector<8x64xi32> to vector<8x64xf32>
      %404 = tpu.concatenate %403, %347 in 1 : vector<8x64xf32>, vector<8x64xf32> -> vector<8x128xf32>
      %cst_151 = arith.constant dense<0.000000e+00> : vector<8x64xf32>
      %405 = tpu.matmul %404, %375, %cst_151 {dimension_numbers = #tpu.dot_dimension_numbers<[1], [0], [0], [1], [0, 0, 1, 1], [], []>} : vector<8x128xf32>, vector<128x64xf32>, vector<8x64xf32> -> vector<8x64xf32>
      %406 = arith.addf %405, %31 : vector<8x64xf32>
      %407 = arith.mulf %13, %329 : vector<8x64xf32>
      %408 = arith.mulf %24, %347 : vector<8x64xf32>
      %409 = arith.addf %407, %408 : vector<8x64xf32>
      %cst_152 = arith.constant 0.00999999977 : f32
      %410 = vector.broadcast %cst_152 : f32 to vector<8x64xf32>
      %411 = arith.addf %410, %409 : vector<8x64xf32>
      %412 = vector.broadcast %cst_30 : f32 to vector<8x64xf32>
      %413 = arith.mulf %342, %412 : vector<8x64xf32>
      %cst_153 = arith.constant 1.000000e+00 : f32
      %414 = vector.broadcast %cst_153 : f32 to vector<8x64xf32>
      %415 = arith.mulf %414, %406 : vector<8x64xf32>
      %416 = vector.broadcast %0 : f32 to vector<8x64xf32>
      %417 = arith.mulf %416, %415 : vector<8x64xf32>
      %418 = arith.addf %413, %417 : vector<8x64xf32>
      %419 = arith.mulf %411, %347 : vector<8x64xf32>
      %cst_154 = arith.constant 1.000000e+00 : f32
      %420 = vector.broadcast %cst_154 : f32 to vector<8x64xf32>
      %421 = arith.mulf %419, %420 : vector<8x64xf32>
      %422 = arith.subf %418, %421 : vector<8x64xf32>
      %423 = arith.subf %422, %411 : vector<8x64xf32>
      %cst_155 = arith.constant 0.000000e+00 : f32
      %424 = vector.broadcast %cst_155 : f32 to vector<8x64xf32>
      %425 = arith.cmpf ogt, %423, %424 : vector<8x64xf32>
      %426 = arith.extui %425 : vector<8x64xi1> to vector<8x64xi32>
      %427 = arith.sitofp %426 : vector<8x64xi32> to vector<8x64xf32>
      %cst_156 = arith.constant dense<0.000000e+00> : vector<8x64xf32>
      %428 = tpu.matmul %427, %376, %cst_156 {dimension_numbers = #tpu.dot_dimension_numbers<[1], [0], [0], [1], [0, 0, 1, 1], [], []>} : vector<8x64xf32>, vector<64x64xf32>, vector<8x64xf32> -> vector<8x64xf32>
      %429 = arith.addf %428, %34 : vector<8x64xf32>
      %430 = arith.mulf %16, %352 : vector<8x64xf32>
      %431 = arith.mulf %28, %370 : vector<8x64xf32>
      %432 = arith.addf %430, %431 : vector<8x64xf32>
      %cst_157 = arith.constant 0.00999999977 : f32
      %433 = vector.broadcast %cst_157 : f32 to vector<8x64xf32>
      %434 = arith.addf %433, %432 : vector<8x64xf32>
      %435 = vector.broadcast %cst_30 : f32 to vector<8x64xf32>
      %436 = arith.mulf %365, %435 : vector<8x64xf32>
      %cst_158 = arith.constant 1.000000e+00 : f32
      %437 = vector.broadcast %cst_158 : f32 to vector<8x64xf32>
      %438 = arith.mulf %437, %429 : vector<8x64xf32>
      %439 = vector.broadcast %0 : f32 to vector<8x64xf32>
      %440 = arith.mulf %439, %438 : vector<8x64xf32>
      %441 = arith.addf %436, %440 : vector<8x64xf32>
      %442 = arith.mulf %434, %370 : vector<8x64xf32>
      %cst_159 = arith.constant 1.000000e+00 : f32
      %443 = vector.broadcast %cst_159 : f32 to vector<8x64xf32>
      %444 = arith.mulf %442, %443 : vector<8x64xf32>
      %445 = arith.subf %441, %444 : vector<8x64xf32>
      %446 = arith.subf %445, %434 : vector<8x64xf32>
      %cst_160 = arith.constant 0.000000e+00 : f32
      %447 = vector.broadcast %cst_160 : f32 to vector<8x64xf32>
      %448 = arith.cmpf ogt, %446, %447 : vector<8x64xf32>
      %449 = arith.extui %448 : vector<8x64xi1> to vector<8x64xi32>
      %450 = arith.sitofp %449 : vector<8x64xi32> to vector<8x64xf32>
      %451 = arith.addf %371, %450 : vector<8x64xf32>
      %c7_i32_161 = arith.constant 7 : i32
      %452 = arith.muli %arg15, %c7_i32_161 : i32
      %c5_i32 = arith.constant 5 : i32
      %453 = arith.addi %452, %c5_i32 : i32
      %c0_162 = arith.constant 0 : index
      %c0_163 = arith.constant 0 : index
      %454 = vector.load %arg3[%c0_162, %c0_163] : memref<64x64xf32, #tpu.memory_space<vmem>>, vector<64x64xf32>
      %c0_164 = arith.constant 0 : index
      %c0_165 = arith.constant 0 : index
      %455 = vector.load %arg4[%c0_164, %c0_165] : memref<128x64xf32, #tpu.memory_space<vmem>>, vector<128x64xf32>
      %c0_166 = arith.constant 0 : index
      %c0_167 = arith.constant 0 : index
      %456 = vector.load %arg6[%c0_166, %c0_167] : memref<64x64xf32, #tpu.memory_space<vmem>>, vector<64x64xf32>
      %c8_i32_168 = arith.constant 8 : i32
      %457 = arith.muli %453, %c8_i32_168 : i32
      %458 = tpu.assume_multiple %457, 8 : i32
      %459 = arith.index_cast %458 : i32 to index
      %c0_169 = arith.constant 0 : index
      %460 = vector.load %arg14[%459, %c0_169] : memref<224x64xf32, #tpu.memory_space<vmem>>, vector<8x64xf32>
      %cst_170 = arith.constant dense<0.000000e+00> : vector<8x64xf32>
      %461 = tpu.matmul %403, %454, %cst_170 {dimension_numbers = #tpu.dot_dimension_numbers<[1], [0], [0], [1], [0, 0, 1, 1], [], []>} : vector<8x64xf32>, vector<64x64xf32>, vector<8x64xf32> -> vector<8x64xf32>
      %462 = arith.addf %460, %461 : vector<8x64xf32>
      %463 = arith.mulf %10, %385 : vector<8x64xf32>
      %464 = arith.mulf %20, %403 : vector<8x64xf32>
      %465 = arith.addf %463, %464 : vector<8x64xf32>
      %cst_171 = arith.constant 0.00999999977 : f32
      %466 = vector.broadcast %cst_171 : f32 to vector<8x64xf32>
      %467 = arith.addf %466, %465 : vector<8x64xf32>
      %468 = vector.broadcast %cst_30 : f32 to vector<8x64xf32>
      %469 = arith.mulf %398, %468 : vector<8x64xf32>
      %cst_172 = arith.constant 1.000000e+00 : f32
      %470 = vector.broadcast %cst_172 : f32 to vector<8x64xf32>
      %471 = arith.mulf %470, %462 : vector<8x64xf32>
      %472 = vector.broadcast %0 : f32 to vector<8x64xf32>
      %473 = arith.mulf %472, %471 : vector<8x64xf32>
      %474 = arith.addf %469, %473 : vector<8x64xf32>
      %475 = arith.mulf %467, %403 : vector<8x64xf32>
      %cst_173 = arith.constant 1.000000e+00 : f32
      %476 = vector.broadcast %cst_173 : f32 to vector<8x64xf32>
      %477 = arith.mulf %475, %476 : vector<8x64xf32>
      %478 = arith.subf %474, %477 : vector<8x64xf32>
      %479 = arith.subf %478, %467 : vector<8x64xf32>
      %cst_174 = arith.constant 0.000000e+00 : f32
      %480 = vector.broadcast %cst_174 : f32 to vector<8x64xf32>
      %481 = arith.cmpf ogt, %479, %480 : vector<8x64xf32>
      %482 = arith.extui %481 : vector<8x64xi1> to vector<8x64xi32>
      %483 = arith.sitofp %482 : vector<8x64xi32> to vector<8x64xf32>
      %484 = tpu.concatenate %483, %427 in 1 : vector<8x64xf32>, vector<8x64xf32> -> vector<8x128xf32>
      %cst_175 = arith.constant dense<0.000000e+00> : vector<8x64xf32>
      %485 = tpu.matmul %484, %455, %cst_175 {dimension_numbers = #tpu.dot_dimension_numbers<[1], [0], [0], [1], [0, 0, 1, 1], [], []>} : vector<8x128xf32>, vector<128x64xf32>, vector<8x64xf32> -> vector<8x64xf32>
      %486 = arith.addf %485, %31 : vector<8x64xf32>
      %487 = arith.mulf %13, %409 : vector<8x64xf32>
      %488 = arith.mulf %24, %427 : vector<8x64xf32>
      %489 = arith.addf %487, %488 : vector<8x64xf32>
      %cst_176 = arith.constant 0.00999999977 : f32
      %490 = vector.broadcast %cst_176 : f32 to vector<8x64xf32>
      %491 = arith.addf %490, %489 : vector<8x64xf32>
      %492 = vector.broadcast %cst_30 : f32 to vector<8x64xf32>
      %493 = arith.mulf %422, %492 : vector<8x64xf32>
      %cst_177 = arith.constant 1.000000e+00 : f32
      %494 = vector.broadcast %cst_177 : f32 to vector<8x64xf32>
      %495 = arith.mulf %494, %486 : vector<8x64xf32>
      %496 = vector.broadcast %0 : f32 to vector<8x64xf32>
      %497 = arith.mulf %496, %495 : vector<8x64xf32>
      %498 = arith.addf %493, %497 : vector<8x64xf32>
      %499 = arith.mulf %491, %427 : vector<8x64xf32>
      %cst_178 = arith.constant 1.000000e+00 : f32
      %500 = vector.broadcast %cst_178 : f32 to vector<8x64xf32>
      %501 = arith.mulf %499, %500 : vector<8x64xf32>
      %502 = arith.subf %498, %501 : vector<8x64xf32>
      %503 = arith.subf %502, %491 : vector<8x64xf32>
      %cst_179 = arith.constant 0.000000e+00 : f32
      %504 = vector.broadcast %cst_179 : f32 to vector<8x64xf32>
      %505 = arith.cmpf ogt, %503, %504 : vector<8x64xf32>
      %506 = arith.extui %505 : vector<8x64xi1> to vector<8x64xi32>
      %507 = arith.sitofp %506 : vector<8x64xi32> to vector<8x64xf32>
      %cst_180 = arith.constant dense<0.000000e+00> : vector<8x64xf32>
      %508 = tpu.matmul %507, %456, %cst_180 {dimension_numbers = #tpu.dot_dimension_numbers<[1], [0], [0], [1], [0, 0, 1, 1], [], []>} : vector<8x64xf32>, vector<64x64xf32>, vector<8x64xf32> -> vector<8x64xf32>
      %509 = arith.addf %508, %34 : vector<8x64xf32>
      %510 = arith.mulf %16, %432 : vector<8x64xf32>
      %511 = arith.mulf %28, %450 : vector<8x64xf32>
      %512 = arith.addf %510, %511 : vector<8x64xf32>
      %cst_181 = arith.constant 0.00999999977 : f32
      %513 = vector.broadcast %cst_181 : f32 to vector<8x64xf32>
      %514 = arith.addf %513, %512 : vector<8x64xf32>
      %515 = vector.broadcast %cst_30 : f32 to vector<8x64xf32>
      %516 = arith.mulf %445, %515 : vector<8x64xf32>
      %cst_182 = arith.constant 1.000000e+00 : f32
      %517 = vector.broadcast %cst_182 : f32 to vector<8x64xf32>
      %518 = arith.mulf %517, %509 : vector<8x64xf32>
      %519 = vector.broadcast %0 : f32 to vector<8x64xf32>
      %520 = arith.mulf %519, %518 : vector<8x64xf32>
      %521 = arith.addf %516, %520 : vector<8x64xf32>
      %522 = arith.mulf %514, %450 : vector<8x64xf32>
      %cst_183 = arith.constant 1.000000e+00 : f32
      %523 = vector.broadcast %cst_183 : f32 to vector<8x64xf32>
      %524 = arith.mulf %522, %523 : vector<8x64xf32>
      %525 = arith.subf %521, %524 : vector<8x64xf32>
      %526 = arith.subf %525, %514 : vector<8x64xf32>
      %cst_184 = arith.constant 0.000000e+00 : f32
      %527 = vector.broadcast %cst_184 : f32 to vector<8x64xf32>
      %528 = arith.cmpf ogt, %526, %527 : vector<8x64xf32>
      %529 = arith.extui %528 : vector<8x64xi1> to vector<8x64xi32>
      %530 = arith.sitofp %529 : vector<8x64xi32> to vector<8x64xf32>
      %531 = arith.addf %451, %530 : vector<8x64xf32>
      %c7_i32_185 = arith.constant 7 : i32
      %532 = arith.muli %arg15, %c7_i32_185 : i32
      %c6_i32 = arith.constant 6 : i32
      %533 = arith.addi %532, %c6_i32 : i32
      %c0_186 = arith.constant 0 : index
      %c0_187 = arith.constant 0 : index
      %534 = vector.load %arg3[%c0_186, %c0_187] : memref<64x64xf32, #tpu.memory_space<vmem>>, vector<64x64xf32>
      %c0_188 = arith.constant 0 : index
      %c0_189 = arith.constant 0 : index
      %535 = vector.load %arg4[%c0_188, %c0_189] : memref<128x64xf32, #tpu.memory_space<vmem>>, vector<128x64xf32>
      %c0_190 = arith.constant 0 : index
      %c0_191 = arith.constant 0 : index
      %536 = vector.load %arg6[%c0_190, %c0_191] : memref<64x64xf32, #tpu.memory_space<vmem>>, vector<64x64xf32>
      %c8_i32_192 = arith.constant 8 : i32
      %537 = arith.muli %533, %c8_i32_192 : i32
      %538 = tpu.assume_multiple %537, 8 : i32
      %539 = arith.index_cast %538 : i32 to index
      %c0_193 = arith.constant 0 : index
      %540 = vector.load %arg14[%539, %c0_193] : memref<224x64xf32, #tpu.memory_space<vmem>>, vector<8x64xf32>
      %cst_194 = arith.constant dense<0.000000e+00> : vector<8x64xf32>
      %541 = tpu.matmul %483, %534, %cst_194 {dimension_numbers = #tpu.dot_dimension_numbers<[1], [0], [0], [1], [0, 0, 1, 1], [], []>} : vector<8x64xf32>, vector<64x64xf32>, vector<8x64xf32> -> vector<8x64xf32>
      %542 = arith.addf %540, %541 : vector<8x64xf32>
      %543 = arith.mulf %10, %465 : vector<8x64xf32>
      %544 = arith.mulf %20, %483 : vector<8x64xf32>
      %545 = arith.addf %543, %544 : vector<8x64xf32>
      %cst_195 = arith.constant 0.00999999977 : f32
      %546 = vector.broadcast %cst_195 : f32 to vector<8x64xf32>
      %547 = arith.addf %546, %545 : vector<8x64xf32>
      %548 = vector.broadcast %cst_30 : f32 to vector<8x64xf32>
      %549 = arith.mulf %478, %548 : vector<8x64xf32>
      %cst_196 = arith.constant 1.000000e+00 : f32
      %550 = vector.broadcast %cst_196 : f32 to vector<8x64xf32>
      %551 = arith.mulf %550, %542 : vector<8x64xf32>
      %552 = vector.broadcast %0 : f32 to vector<8x64xf32>
      %553 = arith.mulf %552, %551 : vector<8x64xf32>
      %554 = arith.addf %549, %553 : vector<8x64xf32>
      %555 = arith.mulf %547, %483 : vector<8x64xf32>
      %cst_197 = arith.constant 1.000000e+00 : f32
      %556 = vector.broadcast %cst_197 : f32 to vector<8x64xf32>
      %557 = arith.mulf %555, %556 : vector<8x64xf32>
      %558 = arith.subf %554, %557 : vector<8x64xf32>
      %559 = arith.subf %558, %547 : vector<8x64xf32>
      %cst_198 = arith.constant 0.000000e+00 : f32
      %560 = vector.broadcast %cst_198 : f32 to vector<8x64xf32>
      %561 = arith.cmpf ogt, %559, %560 : vector<8x64xf32>
      %562 = arith.extui %561 : vector<8x64xi1> to vector<8x64xi32>
      %563 = arith.sitofp %562 : vector<8x64xi32> to vector<8x64xf32>
      %564 = tpu.concatenate %563, %507 in 1 : vector<8x64xf32>, vector<8x64xf32> -> vector<8x128xf32>
      %cst_199 = arith.constant dense<0.000000e+00> : vector<8x64xf32>
      %565 = tpu.matmul %564, %535, %cst_199 {dimension_numbers = #tpu.dot_dimension_numbers<[1], [0], [0], [1], [0, 0, 1, 1], [], []>} : vector<8x128xf32>, vector<128x64xf32>, vector<8x64xf32> -> vector<8x64xf32>
      %566 = arith.addf %565, %31 : vector<8x64xf32>
      %567 = arith.mulf %13, %489 : vector<8x64xf32>
      %568 = arith.mulf %24, %507 : vector<8x64xf32>
      %569 = arith.addf %567, %568 : vector<8x64xf32>
      %cst_200 = arith.constant 0.00999999977 : f32
      %570 = vector.broadcast %cst_200 : f32 to vector<8x64xf32>
      %571 = arith.addf %570, %569 : vector<8x64xf32>
      %572 = vector.broadcast %cst_30 : f32 to vector<8x64xf32>
      %573 = arith.mulf %502, %572 : vector<8x64xf32>
      %cst_201 = arith.constant 1.000000e+00 : f32
      %574 = vector.broadcast %cst_201 : f32 to vector<8x64xf32>
      %575 = arith.mulf %574, %566 : vector<8x64xf32>
      %576 = vector.broadcast %0 : f32 to vector<8x64xf32>
      %577 = arith.mulf %576, %575 : vector<8x64xf32>
      %578 = arith.addf %573, %577 : vector<8x64xf32>
      %579 = arith.mulf %571, %507 : vector<8x64xf32>
      %cst_202 = arith.constant 1.000000e+00 : f32
      %580 = vector.broadcast %cst_202 : f32 to vector<8x64xf32>
      %581 = arith.mulf %579, %580 : vector<8x64xf32>
      %582 = arith.subf %578, %581 : vector<8x64xf32>
      %583 = arith.subf %582, %571 : vector<8x64xf32>
      %cst_203 = arith.constant 0.000000e+00 : f32
      %584 = vector.broadcast %cst_203 : f32 to vector<8x64xf32>
      %585 = arith.cmpf ogt, %583, %584 : vector<8x64xf32>
      %586 = arith.extui %585 : vector<8x64xi1> to vector<8x64xi32>
      %587 = arith.sitofp %586 : vector<8x64xi32> to vector<8x64xf32>
      %cst_204 = arith.constant dense<0.000000e+00> : vector<8x64xf32>
      %588 = tpu.matmul %587, %536, %cst_204 {dimension_numbers = #tpu.dot_dimension_numbers<[1], [0], [0], [1], [0, 0, 1, 1], [], []>} : vector<8x64xf32>, vector<64x64xf32>, vector<8x64xf32> -> vector<8x64xf32>
      %589 = arith.addf %588, %34 : vector<8x64xf32>
      %590 = arith.mulf %16, %512 : vector<8x64xf32>
      %591 = arith.mulf %28, %530 : vector<8x64xf32>
      %592 = arith.addf %590, %591 : vector<8x64xf32>
      %cst_205 = arith.constant 0.00999999977 : f32
      %593 = vector.broadcast %cst_205 : f32 to vector<8x64xf32>
      %594 = arith.addf %593, %592 : vector<8x64xf32>
      %595 = vector.broadcast %cst_30 : f32 to vector<8x64xf32>
      %596 = arith.mulf %525, %595 : vector<8x64xf32>
      %cst_206 = arith.constant 1.000000e+00 : f32
      %597 = vector.broadcast %cst_206 : f32 to vector<8x64xf32>
      %598 = arith.mulf %597, %589 : vector<8x64xf32>
      %599 = vector.broadcast %0 : f32 to vector<8x64xf32>
      %600 = arith.mulf %599, %598 : vector<8x64xf32>
      %601 = arith.addf %596, %600 : vector<8x64xf32>
      %602 = arith.mulf %594, %530 : vector<8x64xf32>
      %cst_207 = arith.constant 1.000000e+00 : f32
      %603 = vector.broadcast %cst_207 : f32 to vector<8x64xf32>
      %604 = arith.mulf %602, %603 : vector<8x64xf32>
      %605 = arith.subf %601, %604 : vector<8x64xf32>
      %606 = arith.subf %605, %594 : vector<8x64xf32>
      %cst_208 = arith.constant 0.000000e+00 : f32
      %607 = vector.broadcast %cst_208 : f32 to vector<8x64xf32>
      %608 = arith.cmpf ogt, %606, %607 : vector<8x64xf32>
      %609 = arith.extui %608 : vector<8x64xi1> to vector<8x64xi32>
      %610 = arith.sitofp %609 : vector<8x64xi32> to vector<8x64xf32>
      %611 = arith.addf %531, %610 : vector<8x64xf32>
      scf.yield %558, %563, %545, %582, %587, %569, %605, %610, %592, %611 : vector<8x64xf32>, vector<8x64xf32>, vector<8x64xf32>, vector<8x64xf32>, vector<8x64xf32>, vector<8x64xf32>, vector<8x64xf32>, vector<8x64xf32>, vector<8x64xf32>, vector<8x64xf32>
    }
    %c4_i32_31 = arith.constant 4 : i32
    %c0_32 = arith.constant 0 : index
    %c0_33 = arith.constant 0 : index
    %44 = vector.load %arg8[%c0_32, %c0_33] : memref<64x10xf32, #tpu.memory_space<vmem>>, vector<64x10xf32>
    %cst_34 = arith.constant dense<0.000000e+00> : vector<8x10xf32>
    %45 = tpu.matmul %43#9, %44, %cst_34 {dimension_numbers = #tpu.dot_dimension_numbers<[1], [0], [0], [1], [0, 0, 1, 1], [], []>} : vector<8x64xf32>, vector<64x10xf32>, vector<8x10xf32> -> vector<8x10xf32>
    %cst_35 = arith.constant 0.0357142873 : f32
    %46 = vector.broadcast %cst_35 : f32 to vector<8x10xf32>
    %47 = arith.mulf %45, %46 : vector<8x10xf32>
    %c0_36 = arith.constant 0 : index
    %c0_37 = arith.constant 0 : index
    %48 = vector.load %arg9[%c0_36, %c0_37] : memref<1x10xf32, #tpu.memory_space<vmem>>, vector<1x10xf32>
    %49 = vector.broadcast %48 : vector<1x10xf32> to vector<8x10xf32>
    %50 = arith.addf %47, %49 : vector<8x10xf32>
    %c0_38 = arith.constant 0 : index
    %c0_39 = arith.constant 0 : index
    %51 = vector.load %arg13[%c0_38, %c0_39] : memref<8x10xf32, #tpu.memory_space<vmem>>, vector<8x10xf32>
    tpu.vector_store %arg13[%c0_38, %c0_39], %50 {strides = array<i32>} : memref<8x10xf32, #tpu.memory_space<vmem>>, vector<8x10xf32>,
    return
  }
}

</mosaic_0001>

<llo_original>
// kernel: lsnn_forward.1
$region0: #{lsnn_forward.1}
  #allocation0 [shape = 'u32[]', space=smem, size = 0x4, offset = 0x4, fixed_abs, tag = 'smem constant byte address 0x4 - core index']
  #allocation1 [shape = 'u32[144,128]{1,0:T(1,128)}', space=vmem, size = 0x12000, scoped, tag = 'internal scratch']
  #allocation2 [shape = 'f32[224,64]{1,0:T(8,128)}', space=vmem, size = 0x1c000, scoped, tag = 'scratch operand']
  %s0 = inlined_call_operand.vmem [shape: f32[224,28], index: 0, kind: input, shape index: {}]
  %s1 = inlined_call_operand.vmem [shape: f32[28,64], index: 1, kind: input, shape index: {}]
  %s2 = inlined_call_operand.vmem [shape: f32[1,64], index: 2, kind: input, shape index: {}]
  %s3 = inlined_call_operand.vmem [shape: f32[64,64], index: 3, kind: input, shape index: {}]
  %s4 = inlined_call_operand.vmem [shape: f32[128,64], index: 4, kind: input, shape index: {}]
  %s5 = inlined_call_operand.vmem [shape: f32[1,64], index: 5, kind: input, shape index: {}]
  %s6 = inlined_call_operand.vmem [shape: f32[64,64], index: 6, kind: input, shape index: {}]
  %s7 = inlined_call_operand.hbm [shape: f32[1,64], index: 7, kind: input, shape index: {}]
  %s8 = inlined_call_operand.vmem [shape: f32[64,10], index: 8, kind: input, shape index: {}]
  %s9 = inlined_call_operand.hbm [shape: f32[1,10], index: 9, kind: input, shape index: {}]
  %s10 = inlined_call_operand.vmem [shape: f32[1,64], index: 10, kind: input, shape index: {}]
  %s11 = inlined_call_operand.vmem [shape: f32[1,64], index: 11, kind: input, shape index: {}]
  %s12 = inlined_call_operand.vmem [shape: f32[1,64], index: 12, kind: input, shape index: {}]
  %s13 = inlined_call_operand.hbm [shape: f32[8,10], index: 13, kind: output, shape index: {}]
  %s14 = sld [smem:[#allocation0]]
  $region77: #{lsnn_forward.1} parent=0
    _
  %s16 = ssub.s32 1, %s14
  %s17 = scalar_select 0, %s16, %s14
  $region1: #{lsnn_forward.1} parent=0
    #allocation3 [shape = 'u8[512]{0}', space=vmem, size = 0x400, scoped, tag = 'input window, operand 7, single buffered']
    #allocation4 [shape = 's32[1]{0}', space=sflag, size = 0x4, scoped, tag = 'scoped memory for lsnn_forward.1']
    #allocation5 [shape = 's32[1]{0}', space=sflag, size = 0x4, scoped, tag = 'scoped memory for lsnn_forward.1']
    #allocation6 [shape = 'u8[512]{0}', space=vmem, size = 0x400, scoped, tag = 'input window, operand 9, single buffered']
    #allocation7 [shape = 's32[1]{0}', space=sflag, size = 0x4, scoped, tag = 'scoped memory for lsnn_forward.1']
    #allocation8 [shape = 'u8[4096]{0}', space=vmem, size = 0x1000, scoped, tag = 'output window, operand 0, single buffered']
    %18 = vsyncpa [#allocation4], 0
    %19 = vsyncpa [#allocation7], 0
    %20 = vsyncpa [#allocation5], 0
    // Predicated region
    $region2: #{lsnn_forward.1} parent=1 // pred_check
      _
    $region3: #{lsnn_forward.1} parent=1 // pred_check_branch
      %22 = sbr.rel (0) target = $region5
    $region4: #{lsnn_forward.1} parent=1 // pred_region
      _
    $region5: #{lsnn_forward.1} parent=1 // pred_fallthru
      _
    // Predicated region
    $region6: #{lsnn_forward.1} parent=1 // pred_check
      _
    $region7: #{lsnn_forward.1} parent=1 // pred_check_branch
      %24 = sbr.rel (0) target = $region9
    $region8: #{lsnn_forward.1} parent=1 // pred_region
      _
    $region9: #{lsnn_forward.1} parent=1 // pred_fallthru
      _
    // Predicated region
    $region10: #{lsnn_forward.1} parent=1 // pred_check
      _
    $region11: #{lsnn_forward.1} parent=1 // pred_check_branch
      %26 = sbr.rel (0) target = $region13
    $region12: #{lsnn_forward.1} parent=1 // pred_region
      _
    $region13: #{lsnn_forward.1} parent=1 // pred_fallthru
      _
    // Predicated region
    $region14: #{lsnn_forward.1} parent=1 // pred_check
      _
    $region15: #{lsnn_forward.1} parent=1 // pred_check_branch
      %28 = sbr.rel (0) target = $region17
    $region16: #{lsnn_forward.1} parent=1 // pred_region
      _
    $region17: #{lsnn_forward.1} parent=1 // pred_fallthru
      _
    // Predicated region
    $region18: #{lsnn_forward.1} parent=1 // pred_check
      _
    $region19: #{lsnn_forward.1} parent=1 // pred_check_branch
      %30 = sbr.rel (0) target = $region21
    $region20: #{lsnn_forward.1} parent=1 // pred_region
      _
    $region21: #{lsnn_forward.1} parent=1 // pred_fallthru
      _
    // Predicated region
    $region22: #{lsnn_forward.1} parent=1 // pred_check
      _
    $region23: #{lsnn_forward.1} parent=1 // pred_check_branch
      %32 = sbr.rel (0) target = $region25
    $region24: #{lsnn_forward.1} parent=1 // pred_region
      _
    $region25: #{lsnn_forward.1} parent=1 // pred_fallthru
      _
    // Predicated region
    $region26: #{lsnn_forward.1} parent=1 // pred_check
      _
    $region27: #{lsnn_forward.1} parent=1 // pred_check_branch
      %34 = sbr.rel (0) target = $region29
    $region28: #{lsnn_forward.1} parent=1 // pred_region
      _
    $region29: #{lsnn_forward.1} parent=1 // pred_fallthru
      _
    // Predicated region
    $region30: #{lsnn_forward.1} parent=1 // pred_check
      _
    $region31: #{lsnn_forward.1} parent=1 // pred_check_branch
      %36 = sbr.rel (0) target = $region33
    $region32: #{lsnn_forward.1} parent=1 // pred_region
      %s38 = ssub.s32 16, 16
      %39 = vsyncadd [#allocation4], %s38
      %s41 = sshll.u32 [#allocation3], 4
      %s42 = int_to_ptr.vmem [resolvable:$true] %s41
      %44 = dma.hbm_to_vmem [thread:$0]  %s7, 16, %s42, [#allocation4]
    $region33: #{lsnn_forward.1} parent=1 // pred_fallthru
      _
    // Predicated region
    $region34: #{lsnn_forward.1} parent=1 // pred_check
      _
    $region35: #{lsnn_forward.1} parent=1 // pred_check_branch
      %46 = sbr.rel (0) target = $region37
    $region36: #{lsnn_forward.1} parent=1 // pred_region
      _
    $region37: #{lsnn_forward.1} parent=1 // pred_fallthru
      _
    // Predicated region
    $region38: #{lsnn_forward.1} parent=1 // pred_check
      _
    $region39: #{lsnn_forward.1} parent=1 // pred_check_branch
      %48 = sbr.rel (0) target = $region41
    $region40: #{lsnn_forward.1} parent=1 // pred_region
      %s50 = ssub.s32 16, 16
      %51 = vsyncadd [#allocation7], %s50
      %s53 = sshll.u32 [#allocation6], 4
      %s54 = int_to_ptr.vmem [resolvable:$true] %s53
      %56 = dma.hbm_to_vmem [thread:$0]  %s9, 16, %s54, [#allocation7]
    $region41: #{lsnn_forward.1} parent=1 // pred_fallthru
      _
    // Predicated region
    $region42: #{lsnn_forward.1} parent=1 // pred_check
      _
    $region43: #{lsnn_forward.1} parent=1 // pred_check_branch
      %58 = sbr.rel (0) target = $region45
    $region44: #{lsnn_forward.1} parent=1 // pred_region
      _
    $region45: #{lsnn_forward.1} parent=1 // pred_fallthru
      _
    // Predicated region
    $region46: #{lsnn_forward.1} parent=1 // pred_check
      _
    $region47: #{lsnn_forward.1} parent=1 // pred_check_branch
      %60 = sbr.rel (0) target = $region49
    $region48: #{lsnn_forward.1} parent=1 // pred_region
      _
    $region49: #{lsnn_forward.1} parent=1 // pred_fallthru
      _
    // Predicated region
    $region50: #{lsnn_forward.1} parent=1 // pred_check
      _
    $region51: #{lsnn_forward.1} parent=1 // pred_check_branch
      %62 = sbr.rel (0) target = $region53
    $region52: #{lsnn_forward.1} parent=1 // pred_region
      _
    $region53: #{lsnn_forward.1} parent=1 // pred_fallthru
      _
    // Predicated region
    $region54: #{lsnn_forward.1} parent=1 // pred_check
      _
    $region55: #{lsnn_forward.1} parent=1 // pred_check_branch
      %64 = sbr.rel (0) target = $region57
    $region56: #{lsnn_forward.1} parent=1 // pred_region
      %65 = dma.done [#allocation4], 16
    $region57: #{lsnn_forward.1} parent=1 // pred_fallthru
      _
    // Predicated region
    $region58: #{lsnn_forward.1} parent=1 // pred_check
      _
    $region59: #{lsnn_forward.1} parent=1 // pred_check_branch
      %67 = sbr.rel (0) target = $region61
    $region60: #{lsnn_forward.1} parent=1 // pred_region
      %68 = dma.done [#allocation7], 16
    $region61: #{lsnn_forward.1} parent=1 // pred_fallthru
      _
    %v69 = vld [vmem:[%s0] sm:$0xff]
    %v70 = vld [vmem:[%s0 + $0x8] sm:$0xff]
    %v71 = vld [vmem:[%s0 + $0x10] sm:$0xff]
    %v72 = vld [vmem:[%s0 + $0x18] sm:$0xff]
    %v73 = vld [vmem:[%s0 + $0x20] sm:$0xff]
    %v74 = vld [vmem:[%s0 + $0x28] sm:$0xff]
    %v75 = vld [vmem:[%s0 + $0x30] sm:$0xff]
    %v76 = vld [vmem:[%s0 + $0x38] sm:$0xff]
    %v77 = vld [vmem:[%s0 + $0x40] sm:$0xff]
    %v78 = vld [vmem:[%s0 + $0x48] sm:$0xff]
    %v79 = vld [vmem:[%s0 + $0x50] sm:$0xff]
    %v80 = vld [vmem:[%s0 + $0x58] sm:$0xff]
    %v81 = vld [vmem:[%s0 + $0x60] sm:$0xff]
    %v82 = vld [vmem:[%s0 + $0x68] sm:$0xff]
    %v83 = vld [vmem:[%s0 + $0x70] sm:$0xff]
    %v84 = vld [vmem:[%s0 + $0x78] sm:$0xff]
    %v85 = vld [vmem:[%s0 + $0x80] sm:$0xff]
    %v86 = vld [vmem:[%s0 + $0x88] sm:$0xff]
    %v87 = vld [vmem:[%s0 + $0x90] sm:$0xff]
    %v88 = vld [vmem:[%s0 + $0x98] sm:$0xff]
    %v89 = vld [vmem:[%s0 + $0xa0] sm:$0xff]
    %v90 = vld [vmem:[%s0 + $0xa8] sm:$0xff]
    %v91 = vld [vmem:[%s0 + $0xb0] sm:$0xff]
    %v92 = vld [vmem:[%s0 + $0xb8] sm:$0xff]
    %v93 = vld [vmem:[%s0 + $0xc0] sm:$0xff]
    %v94 = vld [vmem:[%s0 + $0xc8] sm:$0xff]
    %v95 = vld [vmem:[%s0 + $0xd0] sm:$0xff]
    %v96 = vld [vmem:[%s0 + $0xd8] sm:$0xff]
    %v97 = vld [vmem:[%s1] sm:$0xff]
    %v98 = vld [vmem:[%s1 + $0x8] sm:$0xff]
    %v99 = vld [vmem:[%s1 + $0x10] sm:$0xff]
    %v100 = vld [vmem:[%s1 + $0x18] sm:$0xf]
    %v101 = vld [vmem:[%s2] sm:$0x1]
    %v103 = vlaneseq
    %v104 = vshrl.u32 %v103, 7
    %v105 = vsub.s32 0, %v104
    %v106 = vrot.slane %v101, %v105
    %vm108 = vcmask 228352
    %v110 = vsel %vm108, %v69, 0
    %v113 = vsel %vm108, %v70, 0
    %v116 = vsel %vm108, %v71, 0
    %v119 = vsel %vm108, %v72, 0
    %v122 = vsel %vm108, %v73, 0
    %v125 = vsel %vm108, %v74, 0
    %v128 = vsel %vm108, %v75, 0
    %v131 = vsel %vm108, %v76, 0
    %v134 = vsel %vm108, %v77, 0
    %v137 = vsel %vm108, %v78, 0
    %v140 = vsel %vm108, %v79, 0
    %v143 = vsel %vm108, %v80, 0
    %v146 = vsel %vm108, %v81, 0
    %v149 = vsel %vm108, %v82, 0
    %v152 = vsel %vm108, %v83, 0
    %v155 = vsel %vm108, %v84, 0
    %v158 = vsel %vm108, %v85, 0
    %v161 = vsel %vm108, %v86, 0
    %v164 = vsel %vm108, %v87, 0
    %v167 = vsel %vm108, %v88, 0
    %v170 = vsel %vm108, %v89, 0
    %v173 = vsel %vm108, %v90, 0
    %v176 = vsel %vm108, %v91, 0
    %v179 = vsel %vm108, %v92, 0
    %v182 = vsel %vm108, %v93, 0
    %v185 = vsel %vm108, %v94, 0
    %v188 = vsel %vm108, %v95, 0
    %v191 = vsel %vm108, %v96, 0
    %vm193 = vcmask 1043456
    %v195 = vsel %vm193, %v100, 0
    %197 = vmatprep.subr.mxu0 0.0
    %198 = vmatpush1.msra.mxu0 %v97
    %199 = vmatprep.subr.mxu0 0.0
    %200 = vmatpush1.msra.mxu0 %v98
    %201 = vmatprep.subr.mxu0 0.0
    %202 = vmatpush1.msra.mxu0 %v99
    %203 = vmatprep.subr.mxu0 0.0
    %204 = vmatpush1.msra.mxu0 %v195
    %205 = vmatprep.subr.mxu0 0.0
    %206 = vmatpush1.msra.mxu0 0.0
    %207 = vmatprep.subr.mxu0 0.0
    %208 = vmatpush1.msra.mxu0 0.0
    %209 = vmatprep.subr.mxu0 0.0
    %210 = vmatpush1.msra.mxu0 0.0
    %211 = vmatprep.subr.mxu0 0.0
    %212 = vmatpush1.msra.mxu0 0.0
    %213 = vmatprep.subr.mxu0 0.0
    %214 = vmatpush1.msra.mxu0 0.0
    %215 = vmatprep.subr.mxu0 0.0
    %216 = vmatpush1.msra.mxu0 0.0
    %217 = vmatprep.subr.mxu0 0.0
    %218 = vmatpush1.msra.mxu0 0.0
    %219 = vmatprep.subr.mxu0 0.0
    %220 = vmatpush1.msra.mxu0 0.0
    %221 = vmatprep.subr.mxu0 0.0
    %222 = vmatpush1.msra.mxu0 0.0
    %223 = vmatprep.subr.mxu0 0.0
    %224 = vmatpush1.msra.mxu0 0.0
    %225 = vmatprep.subr.mxu0 0.0
    %226 = vmatpush1.msra.mxu0 0.0
    %227 = vmatprep.subr.mxu0 0.0
    %228 = vmatpush1.msra.mxu0 0.0
    %229 = vmatprep.subr.mxu0 0.0
    %230 = vmatpush1.msra.mxu0 0.0
    %231 = vmatprep.subr.mxu0 0.0
    %232 = vmatpush1.msra.mxu0 0.0
    %233 = vmatprep.subr.mxu0 0.0
    %234 = vmatpush1.msra.mxu0 0.0
    %235 = vmatprep.subr.mxu0 0.0
    %236 = vmatpush1.msra.mxu0 0.0
    %237 = vmatprep.subr.mxu0 0.0
    %238 = vmatpush1.msra.mxu0 0.0
    %239 = vmatprep.subr.mxu0 0.0
    %240 = vmatpush1.msra.mxu0 0.0
    %241 = vmatprep.subr.mxu0 0.0
    %242 = vmatpush1.msra.mxu0 0.0
    %243 = vmatprep.subr.mxu0 0.0
    %244 = vmatpush1.msra.mxu0 0.0
    %245 = vmatprep.subr.mxu0 0.0
    %246 = vmatpush1.msra.mxu0 0.0
    %247 = vmatprep.subr.mxu0 0.0
    %248 = vmatpush1.msra.mxu0 0.0
    %249 = vmatprep.subr.mxu0 0.0
    %250 = vmatpush1.msra.mxu0 0.0
    %251 = vmatprep.subr.mxu0 0.0
    %252 = vmatpush1.msra.mxu0 0.0
    %253 = vmatprep.subr.mxu0 0.0
    %254 = vmatpush1.msra.mxu0 0.0
    %255 = vmatprep.subr.mxu0 0.0
    %256 = vmatpush1.msra.mxu0 0.0
    %257 = vmatprep.subr.mxu0 0.0
    %258 = vmatpush1.msra.mxu0 0.0
    %259 = vmatprep.subr.mxu0 0.0
    %260 = vmatpush1.msra.mxu0 0.0
    %261 = vmatprep.mubr.f32.mxu0 0.0
    %262 = vmatmul.mubr.f32.gmra.mrb[0].mxu0 %v110
    %v263 = vpop.f32.mrb[0].mxu0
    %v264 = vadd.f32 %v106, %v263
    %v265 = vpop.f32.mrb[0].mxu0
    %266 = vmatprep.mubr.f32.mxu0 0.0
    %267 = vmatmul.mubr.f32.gmra.mrb[0].mxu0 %v113
    %v268 = vpop.f32.mrb[0].mxu0
    %v269 = vadd.f32 %v106, %v268
    %v270 = vpop.f32.mrb[0].mxu0
    %271 = vmatprep.mubr.f32.mxu0 0.0
    %272 = vmatmul.mubr.f32.gmra.mrb[0].mxu0 %v116
    %v273 = vpop.f32.mrb[0].mxu0
    %v274 = vadd.f32 %v106, %v273
    %v275 = vpop.f32.mrb[0].mxu0
    %276 = vmatprep.mubr.f32.mxu0 0.0
    %277 = vmatmul.mubr.f32.gmra.mrb[0].mxu0 %v119
    %v278 = vpop.f32.mrb[0].mxu0
    %v279 = vadd.f32 %v106, %v278
    %v280 = vpop.f32.mrb[0].mxu0
    %281 = vmatprep.mubr.f32.mxu0 0.0
    %282 = vmatmul.mubr.f32.gmra.mrb[0].mxu0 %v122
    %v283 = vpop.f32.mrb[0].mxu0
    %v284 = vadd.f32 %v106, %v283
    %v285 = vpop.f32.mrb[0].mxu0
    %286 = vmatprep.mubr.f32.mxu0 0.0
    %287 = vmatmul.mubr.f32.gmra.mrb[0].mxu0 %v125
    %v288 = vpop.f32.mrb[0].mxu0
    %v289 = vadd.f32 %v106, %v288
    %v290 = vpop.f32.mrb[0].mxu0
    %291 = vmatprep.mubr.f32.mxu0 0.0
    %292 = vmatmul.mubr.f32.gmra.mrb[0].mxu0 %v128
    %v293 = vpop.f32.mrb[0].mxu0
    %v294 = vadd.f32 %v106, %v293
    %v295 = vpop.f32.mrb[0].mxu0
    %296 = vmatprep.mubr.f32.mxu0 0.0
    %297 = vmatmul.mubr.f32.gmra.mrb[0].mxu0 %v131
    %v298 = vpop.f32.mrb[0].mxu0
    %v299 = vadd.f32 %v106, %v298
    %v300 = vpop.f32.mrb[0].mxu0
    %301 = vmatprep.mubr.f32.mxu0 0.0
    %302 = vmatmul.mubr.f32.gmra.mrb[0].mxu0 %v134
    %v303 = vpop.f32.mrb[0].mxu0
    %v304 = vadd.f32 %v106, %v303
    %v305 = vpop.f32.mrb[0].mxu0
    %306 = vmatprep.mubr.f32.mxu0 0.0
    %307 = vmatmul.mubr.f32.gmra.mrb[0].mxu0 %v137
    %v308 = vpop.f32.mrb[0].mxu0
    %v309 = vadd.f32 %v106, %v308
    %v310 = vpop.f32.mrb[0].mxu0
    %311 = vmatprep.mubr.f32.mxu0 0.0
    %312 = vmatmul.mubr.f32.gmra.mrb[0].mxu0 %v140
    %v313 = vpop.f32.mrb[0].mxu0
    %v314 = vadd.f32 %v106, %v313
    %v315 = vpop.f32.mrb[0].mxu0
    %316 = vmatprep.mubr.f32.mxu0 0.0
    %317 = vmatmul.mubr.f32.gmra.mrb[0].mxu0 %v143
    %v318 = vpop.f32.mrb[0].mxu0
    %v319 = vadd.f32 %v106, %v318
    %v320 = vpop.f32.mrb[0].mxu0
    %321 = vmatprep.mubr.f32.mxu0 0.0
    %322 = vmatmul.mubr.f32.gmra.mrb[0].mxu0 %v146
    %v323 = vpop.f32.mrb[0].mxu0
    %v324 = vadd.f32 %v106, %v323
    %v325 = vpop.f32.mrb[0].mxu0
    %326 = vmatprep.mubr.f32.mxu0 0.0
    %327 = vmatmul.mubr.f32.gmra.mrb[0].mxu0 %v149
    %v328 = vpop.f32.mrb[0].mxu0
    %v329 = vadd.f32 %v106, %v328
    %v330 = vpop.f32.mrb[0].mxu0
    %331 = vmatprep.mubr.f32.mxu0 0.0
    %332 = vmatmul.mubr.f32.gmra.mrb[0].mxu0 %v152
    %v333 = vpop.f32.mrb[0].mxu0
    %v334 = vadd.f32 %v106, %v333
    %v335 = vpop.f32.mrb[0].mxu0
    %336 = vmatprep.mubr.f32.mxu0 0.0
    %337 = vmatmul.mubr.f32.gmra.mrb[0].mxu0 %v155
    %v338 = vpop.f32.mrb[0].mxu0
    %v339 = vadd.f32 %v106, %v338
    %v340 = vpop.f32.mrb[0].mxu0
    %341 = vmatprep.mubr.f32.mxu0 0.0
    %342 = vmatmul.mubr.f32.gmra.mrb[0].mxu0 %v158
    %v343 = vpop.f32.mrb[0].mxu0
    %v344 = vadd.f32 %v106, %v343
    %v345 = vpop.f32.mrb[0].mxu0
    %346 = vmatprep.mubr.f32.mxu0 0.0
    %347 = vmatmul.mubr.f32.gmra.mrb[0].mxu0 %v161
    %v348 = vpop.f32.mrb[0].mxu0
    %v349 = vadd.f32 %v106, %v348
    %v350 = vpop.f32.mrb[0].mxu0
    %351 = vmatprep.mubr.f32.mxu0 0.0
    %352 = vmatmul.mubr.f32.gmra.mrb[0].mxu0 %v164
    %v353 = vpop.f32.mrb[0].mxu0
    %v354 = vadd.f32 %v106, %v353
    %v355 = vpop.f32.mrb[0].mxu0
    %356 = vmatprep.mubr.f32.mxu0 0.0
    %357 = vmatmul.mubr.f32.gmra.mrb[0].mxu0 %v167
    %v358 = vpop.f32.mrb[0].mxu0
    %v359 = vadd.f32 %v106, %v358
    %v360 = vpop.f32.mrb[0].mxu0
    %361 = vmatprep.mubr.f32.mxu0 0.0
    %362 = vmatmul.mubr.f32.gmra.mrb[0].mxu0 %v170
    %v363 = vpop.f32.mrb[0].mxu0
    %v364 = vadd.f32 %v106, %v363
    %v365 = vpop.f32.mrb[0].mxu0
    %366 = vmatprep.mubr.f32.mxu0 0.0
    %367 = vmatmul.mubr.f32.gmra.mrb[0].mxu0 %v173
    %v368 = vpop.f32.mrb[0].mxu0
    %v369 = vadd.f32 %v106, %v368
    %v370 = vpop.f32.mrb[0].mxu0
    %371 = vmatprep.mubr.f32.mxu0 0.0
    %372 = vmatmul.mubr.f32.gmra.mrb[0].mxu0 %v176
    %v373 = vpop.f32.mrb[0].mxu0
    %v374 = vadd.f32 %v106, %v373
    %v375 = vpop.f32.mrb[0].mxu0
    %376 = vmatprep.mubr.f32.mxu0 0.0
    %377 = vmatmul.mubr.f32.gmra.mrb[0].mxu0 %v179
    %v378 = vpop.f32.mrb[0].mxu0
    %v379 = vadd.f32 %v106, %v378
    %v380 = vpop.f32.mrb[0].mxu0
    %381 = vmatprep.mubr.f32.mxu0 0.0
    %382 = vmatmul.mubr.f32.gmra.mrb[0].mxu0 %v182
    %v383 = vpop.f32.mrb[0].mxu0
    %v384 = vadd.f32 %v106, %v383
    %v385 = vpop.f32.mrb[0].mxu0
    %386 = vmatprep.mubr.f32.mxu0 0.0
    %387 = vmatmul.mubr.f32.gmra.mrb[0].mxu0 %v185
    %v388 = vpop.f32.mrb[0].mxu0
    %v389 = vadd.f32 %v106, %v388
    %v390 = vpop.f32.mrb[0].mxu0
    %391 = vmatprep.mubr.f32.mxu0 0.0
    %392 = vmatmul.mubr.f32.gmra.mrb[0].mxu0 %v188
    %v393 = vpop.f32.mrb[0].mxu0
    %v394 = vadd.f32 %v106, %v393
    %v395 = vpop.f32.mrb[0].mxu0
    %396 = vmatprep.mubr.f32.mxu0 0.0
    %397 = vmatmul.mubr.f32.gmra.mrb[0].mxu0 %v191
    %v398 = vpop.f32.mrb[0].mxu0
    %v399 = vadd.f32 %v106, %v398
    %v400 = vpop.f32.mrb[0].mxu0
    %401 = vdwg.mxu0
    %vm402 = vcmask 523264
    %403 = vst.msk [vmem:[#allocation2] sm:$0xff] %vm402, %v264
    %404 = vst.msk [vmem:[#allocation2 + $0x8] sm:$0xff] %vm402, %v269
    %405 = vst.msk [vmem:[#allocation2 + $0x10] sm:$0xff] %vm402, %v274
    %406 = vst.msk [vmem:[#allocation2 + $0x18] sm:$0xff] %vm402, %v279
    %407 = vst.msk [vmem:[#allocation2 + $0x20] sm:$0xff] %vm402, %v284
    %408 = vst.msk [vmem:[#allocation2 + $0x28] sm:$0xff] %vm402, %v289
    %409 = vst.msk [vmem:[#allocation2 + $0x30] sm:$0xff] %vm402, %v294
    %410 = vst.msk [vmem:[#allocation2 + $0x38] sm:$0xff] %vm402, %v299
    %411 = vst.msk [vmem:[#allocation2 + $0x40] sm:$0xff] %vm402, %v304
    %412 = vst.msk [vmem:[#allocation2 + $0x48] sm:$0xff] %vm402, %v309
    %413 = vst.msk [vmem:[#allocation2 + $0x50] sm:$0xff] %vm402, %v314
    %414 = vst.msk [vmem:[#allocation2 + $0x58] sm:$0xff] %vm402, %v319
    %415 = vst.msk [vmem:[#allocation2 + $0x60] sm:$0xff] %vm402, %v324
    %416 = vst.msk [vmem:[#allocation2 + $0x68] sm:$0xff] %vm402, %v329
    %417 = vst.msk [vmem:[#allocation2 + $0x70] sm:$0xff] %vm402, %v334
    %418 = vst.msk [vmem:[#allocation2 + $0x78] sm:$0xff] %vm402, %v339
    %419 = vst.msk [vmem:[#allocation2 + $0x80] sm:$0xff] %vm402, %v344
    %420 = vst.msk [vmem:[#allocation2 + $0x88] sm:$0xff] %vm402, %v349
    %421 = vst.msk [vmem:[#allocation2 + $0x90] sm:$0xff] %vm402, %v354
    %422 = vst.msk [vmem:[#allocation2 + $0x98] sm:$0xff] %vm402, %v359
    %423 = vst.msk [vmem:[#allocation2 + $0xa0] sm:$0xff] %vm402, %v364
    %424 = vst.msk [vmem:[#allocation2 + $0xa8] sm:$0xff] %vm402, %v369
    %425 = vst.msk [vmem:[#allocation2 + $0xb0] sm:$0xff] %vm402, %v374
    %426 = vst.msk [vmem:[#allocation2 + $0xb8] sm:$0xff] %vm402, %v379
    %427 = vst.msk [vmem:[#allocation2 + $0xc0] sm:$0xff] %vm402, %v384
    %428 = vst.msk [vmem:[#allocation2 + $0xc8] sm:$0xff] %vm402, %v389
    %429 = vst.msk [vmem:[#allocation2 + $0xd0] sm:$0xff] %vm402, %v394
    %430 = vst.msk [vmem:[#allocation2 + $0xd8] sm:$0xff] %vm402, %v399
    %v431 = vld [vmem:[%s10] sm:$0x1]
    %v433 = vlaneseq
    %v434 = vshrl.u32 %v433, 7
    %v435 = vsub.s32 0, %v434
    %v436 = vrot.slane %v431, %v435
    %v438 = vld [vmem:[%s11] sm:$0x1]
    %v440 = vlaneseq
    %v441 = vshrl.u32 %v440, 7
    %v442 = vsub.s32 0, %v441
    %v443 = vrot.slane %v438, %v442
    %v445 = vld [vmem:[%s12] sm:$0x1]
    %v447 = vlaneseq
    %v448 = vshrl.u32 %v447, 7
    %v449 = vsub.s32 0, %v448
    %v450 = vrot.slane %v445, %v449
    %v452 = vsub.f32 1.0, %v436
    %v453 = vmul.f32 %v452, 1.8
    %v454 = vsub.f32 1.0, %v443
    %v455 = vmul.f32 %v454, 1.8
    %v456 = vsub.f32 1.0, %v450
    %v457 = vmul.f32 %v456, 1.8
    %v458 = vld [vmem:[%s5] sm:$0x1]
    %v460 = vlaneseq
    %v461 = vshrl.u32 %v460, 7
    %v462 = vsub.s32 0, %v461
    %v463 = vrot.slane %v458, %v462
    %v465 = vld [vmem:[#allocation3] sm:$0x1]
    %v467 = vlaneseq
    %v468 = vshrl.u32 %v467, 7
    %v469 = vsub.s32 0, %v468
    %v470 = vrot.slane %v465, %v469
    loop: start=0, step=1, limit=4
    $region62: #{lsnn_forward.1} parent=1 // loop_pre_header
      _
    $region63: #{lsnn_forward.1} parent=1 // loop_header
      %s473 = sphi 0, %s477
      %p474 = scmp.ge.s32.totalorder %s473, 4
      %v478 = vphi 0.0, %v2197
      %v479 = vphi 0.0, %v2201
      %v480 = vphi 0.018, %v2191
      %v481 = vphi 0.0, %v2284
      %v482 = vphi 0.0, %v2288
      %v483 = vphi 0.018, %v2278
      %v484 = vphi 0.0, %v2370
      %v485 = vphi 0.0, %v2374
      %v486 = vphi 0.018, %v2364
      %v487 = vphi 0.0, %v2375
    $region64: #{lsnn_forward.1} parent=1 // loop_header_branch
      %476 = sbr.rel (%p474) target = $region68
    $region65: #{lsnn_forward.1} parent=1 // loop_body
      %v488 = vld [vmem:[%s3] sm:$0xff]
      %v489 = vld [vmem:[%s3 + $0x8] sm:$0xff]
      %v490 = vld [vmem:[%s3 + $0x10] sm:$0xff]
      %v491 = vld [vmem:[%s3 + $0x18] sm:$0xff]
      %v492 = vld [vmem:[%s3 + $0x20] sm:$0xff]
      %v493 = vld [vmem:[%s3 + $0x28] sm:$0xff]
      %v494 = vld [vmem:[%s3 + $0x30] sm:$0xff]
      %v495 = vld [vmem:[%s3 + $0x38] sm:$0xff]
      %v496 = vld [vmem:[%s4] sm:$0xff]
      %v497 = vld [vmem:[%s4 + $0x8] sm:$0xff]
      %v498 = vld [vmem:[%s4 + $0x10] sm:$0xff]
      %v499 = vld [vmem:[%s4 + $0x18] sm:$0xff]
      %v500 = vld [vmem:[%s4 + $0x20] sm:$0xff]
      %v501 = vld [vmem:[%s4 + $0x28] sm:$0xff]
      %v502 = vld [vmem:[%s4 + $0x30] sm:$0xff]
      %v503 = vld [vmem:[%s4 + $0x38] sm:$0xff]
      %v504 = vld [vmem:[%s4 + $0x40] sm:$0xff]
      %v505 = vld [vmem:[%s4 + $0x48] sm:$0xff]
      %v506 = vld [vmem:[%s4 + $0x50] sm:$0xff]
      %v507 = vld [vmem:[%s4 + $0x58] sm:$0xff]
      %v508 = vld [vmem:[%s4 + $0x60] sm:$0xff]
      %v509 = vld [vmem:[%s4 + $0x68] sm:$0xff]
      %v510 = vld [vmem:[%s4 + $0x70] sm:$0xff]
      %v511 = vld [vmem:[%s4 + $0x78] sm:$0xff]
      %v512 = vld [vmem:[%s6] sm:$0xff]
      %v513 = vld [vmem:[%s6 + $0x8] sm:$0xff]
      %v514 = vld [vmem:[%s6 + $0x10] sm:$0xff]
      %v515 = vld [vmem:[%s6 + $0x18] sm:$0xff]
      %v516 = vld [vmem:[%s6 + $0x20] sm:$0xff]
      %v517 = vld [vmem:[%s6 + $0x28] sm:$0xff]
      %v518 = vld [vmem:[%s6 + $0x30] sm:$0xff]
      %v519 = vld [vmem:[%s6 + $0x38] sm:$0xff]
      %s520 = smul.u32 %s473, 56
      %s521 = scalar_lea.vmem [#allocation2], %s520
      %v522 = vld [vmem:[%s521] sm:$0xff]
      %v524 = vsel %vm402, %v479, 0
      %526 = vmatprep.subr.mxu0 0.0
      %527 = vmatpush1.msra.mxu0 %v488
      %528 = vmatprep.subr.mxu0 0.0
      %529 = vmatpush1.msra.mxu0 %v489
      %530 = vmatprep.subr.mxu0 0.0
      %531 = vmatpush1.msra.mxu0 %v490
      %532 = vmatprep.subr.mxu0 0.0
      %533 = vmatpush1.msra.mxu0 %v491
      %534 = vmatprep.subr.mxu0 0.0
      %535 = vmatpush1.msra.mxu0 %v492
      %536 = vmatprep.subr.mxu0 0.0
      %537 = vmatpush1.msra.mxu0 %v493
      %538 = vmatprep.subr.mxu0 0.0
      %539 = vmatpush1.msra.mxu0 %v494
      %540 = vmatprep.subr.mxu0 0.0
      %541 = vmatpush1.msra.mxu0 %v495
      %542 = vmatprep.subr.mxu0 0.0
      %543 = vmatpush1.msra.mxu0 0.0
      %544 = vmatprep.subr.mxu0 0.0
      %545 = vmatpush1.msra.mxu0 0.0
      %546 = vmatprep.subr.mxu0 0.0
      %547 = vmatpush1.msra.mxu0 0.0
      %548 = vmatprep.subr.mxu0 0.0
      %549 = vmatpush1.msra.mxu0 0.0
      %550 = vmatprep.subr.mxu0 0.0
      %551 = vmatpush1.msra.mxu0 0.0
      %552 = vmatprep.subr.mxu0 0.0
      %553 = vmatpush1.msra.mxu0 0.0
      %554 = vmatprep.subr.mxu0 0.0
      %555 = vmatpush1.msra.mxu0 0.0
      %556 = vmatprep.subr.mxu0 0.0
      %557 = vmatpush1.msra.mxu0 0.0
      %558 = vmatprep.subr.mxu0 0.0
      %559 = vmatpush1.msra.mxu0 0.0
      %560 = vmatprep.subr.mxu0 0.0
      %561 = vmatpush1.msra.mxu0 0.0
      %562 = vmatprep.subr.mxu0 0.0
      %563 = vmatpush1.msra.mxu0 0.0
      %564 = vmatprep.subr.mxu0 0.0
      %565 = vmatpush1.msra.mxu0 0.0
      %566 = vmatprep.subr.mxu0 0.0
      %567 = vmatpush1.msra.mxu0 0.0
      %568 = vmatprep.subr.mxu0 0.0
      %569 = vmatpush1.msra.mxu0 0.0
      %570 = vmatprep.subr.mxu0 0.0
      %571 = vmatpush1.msra.mxu0 0.0
      %572 = vmatprep.subr.mxu0 0.0
      %573 = vmatpush1.msra.mxu0 0.0
      %574 = vmatprep.subr.mxu0 0.0
      %575 = vmatpush1.msra.mxu0 0.0
      %576 = vmatprep.subr.mxu0 0.0
      %577 = vmatpush1.msra.mxu0 0.0
      %578 = vmatprep.subr.mxu0 0.0
      %579 = vmatpush1.msra.mxu0 0.0
      %580 = vmatprep.subr.mxu0 0.0
      %581 = vmatpush1.msra.mxu0 0.0
      %582 = vmatprep.subr.mxu0 0.0
      %583 = vmatpush1.msra.mxu0 0.0
      %584 = vmatprep.subr.mxu0 0.0
      %585 = vmatpush1.msra.mxu0 0.0
      %586 = vmatprep.subr.mxu0 0.0
      %587 = vmatpush1.msra.mxu0 0.0
      %588 = vmatprep.subr.mxu0 0.0
      %589 = vmatpush1.msra.mxu0 0.0
      %590 = vmatprep.mubr.f32.mxu0 0.0
      %591 = vmatmul.mubr.f32.gmra.mrb[0].mxu0 %v524
      %v592 = vpop.f32.mrb[0].mxu0
      %v593 = vadd.f32 0.0, %v592
      %v594 = vpop.f32.mrb[0].mxu0
      %595 = vdwg.mxu0
      %v596 = vadd.f32 %v522, %v593
      %v597 = vmul.f32 %v436, %v480
      %v598 = vmul.f32 %v453, %v479
      %v599 = vadd.f32 %v597, %v598
      %v600 = vadd.f32 %v599, 0.01
      %v601 = vmul.f32 %v478, 0.95122945
      %v602 = vmul.f32 %v596, 0.048770547
      %v603 = vadd.f32 %v601, %v602
      %v604 = vmul.f32 %v600, %v479
      %v605 = vsub.f32 %v603, %v604
      %v606 = vsub.f32 %v605, %v600
      %vm607 = vcmp.gt.f32.partialorder %v606, 0.0
      %v608 = vsel %vm607, 1, 0
      %v609 = vcvt.s32.f32 %v608
      %611 = vrot.lane.b32.xlu0 %v482, 64
      %v612 = vpop.permute.xlu0 %611
      %v614 = vsel %vm402, %v609, %v612
      %615 = vmatprep.subr.mxu0 0.0
      %616 = vmatpush1.msra.mxu0 %v496
      %617 = vmatprep.subr.mxu0 0.0
      %618 = vmatpush1.msra.mxu0 %v497
      %619 = vmatprep.subr.mxu0 0.0
      %620 = vmatpush1.msra.mxu0 %v498
      %621 = vmatprep.subr.mxu0 0.0
      %622 = vmatpush1.msra.mxu0 %v499
      %623 = vmatprep.subr.mxu0 0.0
      %624 = vmatpush1.msra.mxu0 %v500
      %625 = vmatprep.subr.mxu0 0.0
      %626 = vmatpush1.msra.mxu0 %v501
      %627 = vmatprep.subr.mxu0 0.0
      %628 = vmatpush1.msra.mxu0 %v502
      %629 = vmatprep.subr.mxu0 0.0
      %630 = vmatpush1.msra.mxu0 %v503
      %631 = vmatprep.subr.mxu0 0.0
      %632 = vmatpush1.msra.mxu0 %v504
      %633 = vmatprep.subr.mxu0 0.0
      %634 = vmatpush1.msra.mxu0 %v505
      %635 = vmatprep.subr.mxu0 0.0
      %636 = vmatpush1.msra.mxu0 %v506
      %637 = vmatprep.subr.mxu0 0.0
      %638 = vmatpush1.msra.mxu0 %v507
      %639 = vmatprep.subr.mxu0 0.0
      %640 = vmatpush1.msra.mxu0 %v508
      %641 = vmatprep.subr.mxu0 0.0
      %642 = vmatpush1.msra.mxu0 %v509
      %643 = vmatprep.subr.mxu0 0.0
      %644 = vmatpush1.msra.mxu0 %v510
      %645 = vmatprep.subr.mxu0 0.0
      %646 = vmatpush1.msra.mxu0 %v511
      %647 = vmatprep.subr.mxu0 0.0
      %648 = vmatpush1.msra.mxu0 0.0
      %649 = vmatprep.subr.mxu0 0.0
      %650 = vmatpush1.msra.mxu0 0.0
      %651 = vmatprep.subr.mxu0 0.0
      %652 = vmatpush1.msra.mxu0 0.0
      %653 = vmatprep.subr.mxu0 0.0
      %654 = vmatpush1.msra.mxu0 0.0
      %655 = vmatprep.subr.mxu0 0.0
      %656 = vmatpush1.msra.mxu0 0.0
      %657 = vmatprep.subr.mxu0 0.0
      %658 = vmatpush1.msra.mxu0 0.0
      %659 = vmatprep.subr.mxu0 0.0
      %660 = vmatpush1.msra.mxu0 0.0
      %661 = vmatprep.subr.mxu0 0.0
      %662 = vmatpush1.msra.mxu0 0.0
      %663 = vmatprep.subr.mxu0 0.0
      %664 = vmatpush1.msra.mxu0 0.0
      %665 = vmatprep.subr.mxu0 0.0
      %666 = vmatpush1.msra.mxu0 0.0
      %667 = vmatprep.subr.mxu0 0.0
      %668 = vmatpush1.msra.mxu0 0.0
      %669 = vmatprep.subr.mxu0 0.0
      %670 = vmatpush1.msra.mxu0 0.0
      %671 = vmatprep.subr.mxu0 0.0
      %672 = vmatpush1.msra.mxu0 0.0
      %673 = vmatprep.subr.mxu0 0.0
      %674 = vmatpush1.msra.mxu0 0.0
      %675 = vmatprep.subr.mxu0 0.0
      %676 = vmatpush1.msra.mxu0 0.0
      %677 = vmatprep.subr.mxu0 0.0
      %678 = vmatpush1.msra.mxu0 0.0
      %679 = vmatprep.mubr.f32.mxu0 0.0
      %680 = vmatmul.mubr.f32.gmra.mrb[0].mxu0 %v614
      %v681 = vpop.f32.mrb[0].mxu0
      %v682 = vadd.f32 %v463, %v681
      %v683 = vpop.f32.mrb[0].mxu0
      %684 = vdwg.mxu0
      %v685 = vmul.f32 %v443, %v483
      %v686 = vmul.f32 %v455, %v482
      %v687 = vadd.f32 %v685, %v686
      %v688 = vadd.f32 %v687, 0.01
      %v689 = vmul.f32 %v481, 0.95122945
      %v690 = vmul.f32 %v682, 0.048770547
      %v691 = vadd.f32 %v689, %v690
      %v692 = vmul.f32 %v688, %v482
      %v693 = vsub.f32 %v691, %v692
      %v694 = vsub.f32 %v693, %v688
      %vm695 = vcmp.gt.f32.partialorder %v694, 0.0
      %v696 = vsel %vm695, 1, 0
      %v697 = vcvt.s32.f32 %v696
      %v699 = vsel %vm402, %v697, 0
      %701 = vmatprep.subr.mxu0 0.0
      %702 = vmatpush1.msra.mxu0 %v512
      %703 = vmatprep.subr.mxu0 0.0
      %704 = vmatpush1.msra.mxu0 %v513
      %705 = vmatprep.subr.mxu0 0.0
      %706 = vmatpush1.msra.mxu0 %v514
      %707 = vmatprep.subr.mxu0 0.0
      %708 = vmatpush1.msra.mxu0 %v515
      %709 = vmatprep.subr.mxu0 0.0
      %710 = vmatpush1.msra.mxu0 %v516
      %711 = vmatprep.subr.mxu0 0.0
      %712 = vmatpush1.msra.mxu0 %v517
      %713 = vmatprep.subr.mxu0 0.0
      %714 = vmatpush1.msra.mxu0 %v518
      %715 = vmatprep.subr.mxu0 0.0
      %716 = vmatpush1.msra.mxu0 %v519
      %717 = vmatprep.subr.mxu0 0.0
      %718 = vmatpush1.msra.mxu0 0.0
      %719 = vmatprep.subr.mxu0 0.0
      %720 = vmatpush1.msra.mxu0 0.0
      %721 = vmatprep.subr.mxu0 0.0
      %722 = vmatpush1.msra.mxu0 0.0
      %723 = vmatprep.subr.mxu0 0.0
      %724 = vmatpush1.msra.mxu0 0.0
      %725 = vmatprep.subr.mxu0 0.0
      %726 = vmatpush1.msra.mxu0 0.0
      %727 = vmatprep.subr.mxu0 0.0
      %728 = vmatpush1.msra.mxu0 0.0
      %729 = vmatprep.subr.mxu0 0.0
      %730 = vmatpush1.msra.mxu0 0.0
      %731 = vmatprep.subr.mxu0 0.0
      %732 = vmatpush1.msra.mxu0 0.0
      %733 = vmatprep.subr.mxu0 0.0
      %734 = vmatpush1.msra.mxu0 0.0
      %735 = vmatprep.subr.mxu0 0.0
      %736 = vmatpush1.msra.mxu0 0.0
      %737 = vmatprep.subr.mxu0 0.0
      %738 = vmatpush1.msra.mxu0 0.0
      %739 = vmatprep.subr.mxu0 0.0
      %740 = vmatpush1.msra.mxu0 0.0
      %741 = vmatprep.subr.mxu0 0.0
      %742 = vmatpush1.msra.mxu0 0.0
      %743 = vmatprep.subr.mxu0 0.0
      %744 = vmatpush1.msra.mxu0 0.0
      %745 = vmatprep.subr.mxu0 0.0
      %746 = vmatpush1.msra.mxu0 0.0
      %747 = vmatprep.subr.mxu0 0.0
      %748 = vmatpush1.msra.mxu0 0.0
      %749 = vmatprep.subr.mxu0 0.0
      %750 = vmatpush1.msra.mxu0 0.0
      %751 = vmatprep.subr.mxu0 0.0
      %752 = vmatpush1.msra.mxu0 0.0
      %753 = vmatprep.subr.mxu0 0.0
      %754 = vmatpush1.msra.mxu0 0.0
      %755 = vmatprep.subr.mxu0 0.0
      %756 = vmatpush1.msra.mxu0 0.0
      %757 = vmatprep.subr.mxu0 0.0
      %758 = vmatpush1.msra.mxu0 0.0
      %759 = vmatprep.subr.mxu0 0.0
      %760 = vmatpush1.msra.mxu0 0.0
      %761 = vmatprep.subr.mxu0 0.0
      %762 = vmatpush1.msra.mxu0 0.0
      %763 = vmatprep.subr.mxu0 0.0
      %764 = vmatpush1.msra.mxu0 0.0
      %765 = vmatprep.mubr.f32.mxu0 0.0
      %766 = vmatmul.mubr.f32.gmra.mrb[0].mxu0 %v699
      %v767 = vpop.f32.mrb[0].mxu0
      %v768 = vadd.f32 %v470, %v767
      %v769 = vpop.f32.mrb[0].mxu0
      %770 = vdwg.mxu0
      %v771 = vmul.f32 %v450, %v486
      %v772 = vmul.f32 %v457, %v485
      %v773 = vadd.f32 %v771, %v772
      %v774 = vadd.f32 %v773, 0.01
      %v775 = vmul.f32 %v484, 0.95122945
      %v776 = vmul.f32 %v768, 0.048770547
      %v777 = vadd.f32 %v775, %v776
      %v778 = vmul.f32 %v774, %v485
      %v779 = vsub.f32 %v777, %v778
      %v780 = vsub.f32 %v779, %v774
      %vm781 = vcmp.gt.f32.partialorder %v780, 0.0
      %v782 = vsel %vm781, 1, 0
      %v783 = vcvt.s32.f32 %v782
      %v784 = vadd.f32 %v487, %v783
      %s785 = smul.u32 %s473, 7
      %s786 = sadd.s32 %s785, 1
      %s787 = smul.u32 %s786, 8
      %s788 = scalar_lea.vmem [#allocation2], %s787
      %v789 = vld [vmem:[%s788] sm:$0xff]
      %v791 = vsel %vm402, %v609, 0
      %793 = vmatprep.subr.mxu0 0.0
      %794 = vmatpush1.msra.mxu0 %v488
      %795 = vmatprep.subr.mxu0 0.0
      %796 = vmatpush1.msra.mxu0 %v489
      %797 = vmatprep.subr.mxu0 0.0
      %798 = vmatpush1.msra.mxu0 %v490
      %799 = vmatprep.subr.mxu0 0.0
      %800 = vmatpush1.msra.mxu0 %v491
      %801 = vmatprep.subr.mxu0 0.0
      %802 = vmatpush1.msra.mxu0 %v492
      %803 = vmatprep.subr.mxu0 0.0
      %804 = vmatpush1.msra.mxu0 %v493
      %805 = vmatprep.subr.mxu0 0.0
      %806 = vmatpush1.msra.mxu0 %v494
      %807 = vmatprep.subr.mxu0 0.0
      %808 = vmatpush1.msra.mxu0 %v495
      %809 = vmatprep.subr.mxu0 0.0
      %810 = vmatpush1.msra.mxu0 0.0
      %811 = vmatprep.subr.mxu0 0.0
      %812 = vmatpush1.msra.mxu0 0.0
      %813 = vmatprep.subr.mxu0 0.0
      %814 = vmatpush1.msra.mxu0 0.0
      %815 = vmatprep.subr.mxu0 0.0
      %816 = vmatpush1.msra.mxu0 0.0
      %817 = vmatprep.subr.mxu0 0.0
      %818 = vmatpush1.msra.mxu0 0.0
      %819 = vmatprep.subr.mxu0 0.0
      %820 = vmatpush1.msra.mxu0 0.0
      %821 = vmatprep.subr.mxu0 0.0
      %822 = vmatpush1.msra.mxu0 0.0
      %823 = vmatprep.subr.mxu0 0.0
      %824 = vmatpush1.msra.mxu0 0.0
      %825 = vmatprep.subr.mxu0 0.0
      %826 = vmatpush1.msra.mxu0 0.0
      %827 = vmatprep.subr.mxu0 0.0
      %828 = vmatpush1.msra.mxu0 0.0
      %829 = vmatprep.subr.mxu0 0.0
      %830 = vmatpush1.msra.mxu0 0.0
      %831 = vmatprep.subr.mxu0 0.0
      %832 = vmatpush1.msra.mxu0 0.0
      %833 = vmatprep.subr.mxu0 0.0
      %834 = vmatpush1.msra.mxu0 0.0
      %835 = vmatprep.subr.mxu0 0.0
      %836 = vmatpush1.msra.mxu0 0.0
      %837 = vmatprep.subr.mxu0 0.0
      %838 = vmatpush1.msra.mxu0 0.0
      %839 = vmatprep.subr.mxu0 0.0
      %840 = vmatpush1.msra.mxu0 0.0
      %841 = vmatprep.subr.mxu0 0.0
      %842 = vmatpush1.msra.mxu0 0.0
      %843 = vmatprep.subr.mxu0 0.0
      %844 = vmatpush1.msra.mxu0 0.0
      %845 = vmatprep.subr.mxu0 0.0
      %846 = vmatpush1.msra.mxu0 0.0
      %847 = vmatprep.subr.mxu0 0.0
      %848 = vmatpush1.msra.mxu0 0.0
      %849 = vmatprep.subr.mxu0 0.0
      %850 = vmatpush1.msra.mxu0 0.0
      %851 = vmatprep.subr.mxu0 0.0
      %852 = vmatpush1.msra.mxu0 0.0
      %853 = vmatprep.subr.mxu0 0.0
      %854 = vmatpush1.msra.mxu0 0.0
      %855 = vmatprep.subr.mxu0 0.0
      %856 = vmatpush1.msra.mxu0 0.0
      %857 = vmatprep.mubr.f32.mxu0 0.0
      %858 = vmatmul.mubr.f32.gmra.mrb[0].mxu0 %v791
      %v859 = vpop.f32.mrb[0].mxu0
      %v860 = vadd.f32 0.0, %v859
      %v861 = vpop.f32.mrb[0].mxu0
      %862 = vdwg.mxu0
      %v863 = vadd.f32 %v789, %v860
      %v864 = vmul.f32 %v436, %v599
      %v865 = vmul.f32 %v453, %v609
      %v866 = vadd.f32 %v864, %v865
      %v867 = vadd.f32 %v866, 0.01
      %v868 = vmul.f32 %v605, 0.95122945
      %v869 = vmul.f32 %v863, 0.048770547
      %v870 = vadd.f32 %v868, %v869
      %v871 = vmul.f32 %v867, %v609
      %v872 = vsub.f32 %v870, %v871
      %v873 = vsub.f32 %v872, %v867
      %vm874 = vcmp.gt.f32.partialorder %v873, 0.0
      %v875 = vsel %vm874, 1, 0
      %v876 = vcvt.s32.f32 %v875
      %877 = vrot.lane.b32.xlu0 %v697, 64
      %v878 = vpop.permute.xlu0 %877
      %v880 = vsel %vm402, %v876, %v878
      %881 = vmatprep.subr.mxu0 0.0
      %882 = vmatpush1.msra.mxu0 %v496
      %883 = vmatprep.subr.mxu0 0.0
      %884 = vmatpush1.msra.mxu0 %v497
      %885 = vmatprep.subr.mxu0 0.0
      %886 = vmatpush1.msra.mxu0 %v498
      %887 = vmatprep.subr.mxu0 0.0
      %888 = vmatpush1.msra.mxu0 %v499
      %889 = vmatprep.subr.mxu0 0.0
      %890 = vmatpush1.msra.mxu0 %v500
      %891 = vmatprep.subr.mxu0 0.0
      %892 = vmatpush1.msra.mxu0 %v501
      %893 = vmatprep.subr.mxu0 0.0
      %894 = vmatpush1.msra.mxu0 %v502
      %895 = vmatprep.subr.mxu0 0.0
      %896 = vmatpush1.msra.mxu0 %v503
      %897 = vmatprep.subr.mxu0 0.0
      %898 = vmatpush1.msra.mxu0 %v504
      %899 = vmatprep.subr.mxu0 0.0
      %900 = vmatpush1.msra.mxu0 %v505
      %901 = vmatprep.subr.mxu0 0.0
      %902 = vmatpush1.msra.mxu0 %v506
      %903 = vmatprep.subr.mxu0 0.0
      %904 = vmatpush1.msra.mxu0 %v507
      %905 = vmatprep.subr.mxu0 0.0
      %906 = vmatpush1.msra.mxu0 %v508
      %907 = vmatprep.subr.mxu0 0.0
      %908 = vmatpush1.msra.mxu0 %v509
      %909 = vmatprep.subr.mxu0 0.0
      %910 = vmatpush1.msra.mxu0 %v510
      %911 = vmatprep.subr.mxu0 0.0
      %912 = vmatpush1.msra.mxu0 %v511
      %913 = vmatprep.subr.mxu0 0.0
      %914 = vmatpush1.msra.mxu0 0.0
      %915 = vmatprep.subr.mxu0 0.0
      %916 = vmatpush1.msra.mxu0 0.0
      %917 = vmatprep.subr.mxu0 0.0
      %918 = vmatpush1.msra.mxu0 0.0
      %919 = vmatprep.subr.mxu0 0.0
      %920 = vmatpush1.msra.mxu0 0.0
      %921 = vmatprep.subr.mxu0 0.0
      %922 = vmatpush1.msra.mxu0 0.0
      %923 = vmatprep.subr.mxu0 0.0
      %924 = vmatpush1.msra.mxu0 0.0
      %925 = vmatprep.subr.mxu0 0.0
      %926 = vmatpush1.msra.mxu0 0.0
      %927 = vmatprep.subr.mxu0 0.0
      %928 = vmatpush1.msra.mxu0 0.0
      %929 = vmatprep.subr.mxu0 0.0
      %930 = vmatpush1.msra.mxu0 0.0
      %931 = vmatprep.subr.mxu0 0.0
      %932 = vmatpush1.msra.mxu0 0.0
      %933 = vmatprep.subr.mxu0 0.0
      %934 = vmatpush1.msra.mxu0 0.0
      %935 = vmatprep.subr.mxu0 0.0
      %936 = vmatpush1.msra.mxu0 0.0
      %937 = vmatprep.subr.mxu0 0.0
      %938 = vmatpush1.msra.mxu0 0.0
      %939 = vmatprep.subr.mxu0 0.0
      %940 = vmatpush1.msra.mxu0 0.0
      %941 = vmatprep.subr.mxu0 0.0
      %942 = vmatpush1.msra.mxu0 0.0
      %943 = vmatprep.subr.mxu0 0.0
      %944 = vmatpush1.msra.mxu0 0.0
      %945 = vmatprep.mubr.f32.mxu0 0.0
      %946 = vmatmul.mubr.f32.gmra.mrb[0].mxu0 %v880
      %v947 = vpop.f32.mrb[0].mxu0
      %v948 = vadd.f32 %v463, %v947
      %v949 = vpop.f32.mrb[0].mxu0
      %950 = vdwg.mxu0
      %v951 = vmul.f32 %v443, %v687
      %v952 = vmul.f32 %v455, %v697
      %v953 = vadd.f32 %v951, %v952
      %v954 = vadd.f32 %v953, 0.01
      %v955 = vmul.f32 %v693, 0.95122945
      %v956 = vmul.f32 %v948, 0.048770547
      %v957 = vadd.f32 %v955, %v956
      %v958 = vmul.f32 %v954, %v697
      %v959 = vsub.f32 %v957, %v958
      %v960 = vsub.f32 %v959, %v954
      %vm961 = vcmp.gt.f32.partialorder %v960, 0.0
      %v962 = vsel %vm961, 1, 0
      %v963 = vcvt.s32.f32 %v962
      %v965 = vsel %vm402, %v963, 0
      %967 = vmatprep.subr.mxu0 0.0
      %968 = vmatpush1.msra.mxu0 %v512
      %969 = vmatprep.subr.mxu0 0.0
      %970 = vmatpush1.msra.mxu0 %v513
      %971 = vmatprep.subr.mxu0 0.0
      %972 = vmatpush1.msra.mxu0 %v514
      %973 = vmatprep.subr.mxu0 0.0
      %974 = vmatpush1.msra.mxu0 %v515
      %975 = vmatprep.subr.mxu0 0.0
      %976 = vmatpush1.msra.mxu0 %v516
      %977 = vmatprep.subr.mxu0 0.0
      %978 = vmatpush1.msra.mxu0 %v517
      %979 = vmatprep.subr.mxu0 0.0
      %980 = vmatpush1.msra.mxu0 %v518
      %981 = vmatprep.subr.mxu0 0.0
      %982 = vmatpush1.msra.mxu0 %v519
      %983 = vmatprep.subr.mxu0 0.0
      %984 = vmatpush1.msra.mxu0 0.0
      %985 = vmatprep.subr.mxu0 0.0
      %986 = vmatpush1.msra.mxu0 0.0
      %987 = vmatprep.subr.mxu0 0.0
      %988 = vmatpush1.msra.mxu0 0.0
      %989 = vmatprep.subr.mxu0 0.0
      %990 = vmatpush1.msra.mxu0 0.0
      %991 = vmatprep.subr.mxu0 0.0
      %992 = vmatpush1.msra.mxu0 0.0
      %993 = vmatprep.subr.mxu0 0.0
      %994 = vmatpush1.msra.mxu0 0.0
      %995 = vmatprep.subr.mxu0 0.0
      %996 = vmatpush1.msra.mxu0 0.0
      %997 = vmatprep.subr.mxu0 0.0
      %998 = vmatpush1.msra.mxu0 0.0
      %999 = vmatprep.subr.mxu0 0.0
      %1000 = vmatpush1.msra.mxu0 0.0
      %1001 = vmatprep.subr.mxu0 0.0
      %1002 = vmatpush1.msra.mxu0 0.0
      %1003 = vmatprep.subr.mxu0 0.0
      %1004 = vmatpush1.msra.mxu0 0.0
      %1005 = vmatprep.subr.mxu0 0.0
      %1006 = vmatpush1.msra.mxu0 0.0
      %1007 = vmatprep.subr.mxu0 0.0
      %1008 = vmatpush1.msra.mxu0 0.0
      %1009 = vmatprep.subr.mxu0 0.0
      %1010 = vmatpush1.msra.mxu0 0.0
      %1011 = vmatprep.subr.mxu0 0.0
      %1012 = vmatpush1.msra.mxu0 0.0
      %1013 = vmatprep.subr.mxu0 0.0
      %1014 = vmatpush1.msra.mxu0 0.0
      %1015 = vmatprep.subr.mxu0 0.0
      %1016 = vmatpush1.msra.mxu0 0.0
      %1017 = vmatprep.subr.mxu0 0.0
      %1018 = vmatpush1.msra.mxu0 0.0
      %1019 = vmatprep.subr.mxu0 0.0
      %1020 = vmatpush1.msra.mxu0 0.0
      %1021 = vmatprep.subr.mxu0 0.0
      %1022 = vmatpush1.msra.mxu0 0.0
      %1023 = vmatprep.subr.mxu0 0.0
      %1024 = vmatpush1.msra.mxu0 0.0
      %1025 = vmatprep.subr.mxu0 0.0
      %1026 = vmatpush1.msra.mxu0 0.0
      %1027 = vmatprep.subr.mxu0 0.0
      %1028 = vmatpush1.msra.mxu0 0.0
      %1029 = vmatprep.subr.mxu0 0.0
      %1030 = vmatpush1.msra.mxu0 0.0
      %1031 = vmatprep.mubr.f32.mxu0 0.0
      %1032 = vmatmul.mubr.f32.gmra.mrb[0].mxu0 %v965
      %v1033 = vpop.f32.mrb[0].mxu0
      %v1034 = vadd.f32 %v470, %v1033
      %v1035 = vpop.f32.mrb[0].mxu0
      %1036 = vdwg.mxu0
      %v1037 = vmul.f32 %v450, %v773
      %v1038 = vmul.f32 %v457, %v783
      %v1039 = vadd.f32 %v1037, %v1038
      %v1040 = vadd.f32 %v1039, 0.01
      %v1041 = vmul.f32 %v779, 0.95122945
      %v1042 = vmul.f32 %v1034, 0.048770547
      %v1043 = vadd.f32 %v1041, %v1042
      %v1044 = vmul.f32 %v1040, %v783
      %v1045 = vsub.f32 %v1043, %v1044
      %v1046 = vsub.f32 %v1045, %v1040
      %vm1047 = vcmp.gt.f32.partialorder %v1046, 0.0
      %v1048 = vsel %vm1047, 1, 0
      %v1049 = vcvt.s32.f32 %v1048
      %v1050 = vadd.f32 %v784, %v1049
      %s1051 = sadd.s32 %s785, 2
      %s1052 = smul.u32 %s1051, 8
      %s1053 = scalar_lea.vmem [#allocation2], %s1052
      %v1054 = vld [vmem:[%s1053] sm:$0xff]
      %v1056 = vsel %vm402, %v876, 0
      %1058 = vmatprep.subr.mxu0 0.0
      %1059 = vmatpush1.msra.mxu0 %v488
      %1060 = vmatprep.subr.mxu0 0.0
      %1061 = vmatpush1.msra.mxu0 %v489
      %1062 = vmatprep.subr.mxu0 0.0
      %1063 = vmatpush1.msra.mxu0 %v490
      %1064 = vmatprep.subr.mxu0 0.0
      %1065 = vmatpush1.msra.mxu0 %v491
      %1066 = vmatprep.subr.mxu0 0.0
      %1067 = vmatpush1.msra.mxu0 %v492
      %1068 = vmatprep.subr.mxu0 0.0
      %1069 = vmatpush1.msra.mxu0 %v493
      %1070 = vmatprep.subr.mxu0 0.0
      %1071 = vmatpush1.msra.mxu0 %v494
      %1072 = vmatprep.subr.mxu0 0.0
      %1073 = vmatpush1.msra.mxu0 %v495
      %1074 = vmatprep.subr.mxu0 0.0
      %1075 = vmatpush1.msra.mxu0 0.0
      %1076 = vmatprep.subr.mxu0 0.0
      %1077 = vmatpush1.msra.mxu0 0.0
      %1078 = vmatprep.subr.mxu0 0.0
      %1079 = vmatpush1.msra.mxu0 0.0
      %1080 = vmatprep.subr.mxu0 0.0
      %1081 = vmatpush1.msra.mxu0 0.0
      %1082 = vmatprep.subr.mxu0 0.0
      %1083 = vmatpush1.msra.mxu0 0.0
      %1084 = vmatprep.subr.mxu0 0.0
      %1085 = vmatpush1.msra.mxu0 0.0
      %1086 = vmatprep.subr.mxu0 0.0
      %1087 = vmatpush1.msra.mxu0 0.0
      %1088 = vmatprep.subr.mxu0 0.0
      %1089 = vmatpush1.msra.mxu0 0.0
      %1090 = vmatprep.subr.mxu0 0.0
      %1091 = vmatpush1.msra.mxu0 0.0
      %1092 = vmatprep.subr.mxu0 0.0
      %1093 = vmatpush1.msra.mxu0 0.0
      %1094 = vmatprep.subr.mxu0 0.0
      %1095 = vmatpush1.msra.mxu0 0.0
      %1096 = vmatprep.subr.mxu0 0.0
      %1097 = vmatpush1.msra.mxu0 0.0
      %1098 = vmatprep.subr.mxu0 0.0
      %1099 = vmatpush1.msra.mxu0 0.0
      %1100 = vmatprep.subr.mxu0 0.0
      %1101 = vmatpush1.msra.mxu0 0.0
      %1102 = vmatprep.subr.mxu0 0.0
      %1103 = vmatpush1.msra.mxu0 0.0
      %1104 = vmatprep.subr.mxu0 0.0
      %1105 = vmatpush1.msra.mxu0 0.0
      %1106 = vmatprep.subr.mxu0 0.0
      %1107 = vmatpush1.msra.mxu0 0.0
      %1108 = vmatprep.subr.mxu0 0.0
      %1109 = vmatpush1.msra.mxu0 0.0
      %1110 = vmatprep.subr.mxu0 0.0
      %1111 = vmatpush1.msra.mxu0 0.0
      %1112 = vmatprep.subr.mxu0 0.0
      %1113 = vmatpush1.msra.mxu0 0.0
      %1114 = vmatprep.subr.mxu0 0.0
      %1115 = vmatpush1.msra.mxu0 0.0
      %1116 = vmatprep.subr.mxu0 0.0
      %1117 = vmatpush1.msra.mxu0 0.0
      %1118 = vmatprep.subr.mxu0 0.0
      %1119 = vmatpush1.msra.mxu0 0.0
      %1120 = vmatprep.subr.mxu0 0.0
      %1121 = vmatpush1.msra.mxu0 0.0
      %1122 = vmatprep.mubr.f32.mxu0 0.0
      %1123 = vmatmul.mubr.f32.gmra.mrb[0].mxu0 %v1056
      %v1124 = vpop.f32.mrb[0].mxu0
      %v1125 = vadd.f32 0.0, %v1124
      %v1126 = vpop.f32.mrb[0].mxu0
      %1127 = vdwg.mxu0
      %v1128 = vadd.f32 %v1054, %v1125
      %v1129 = vmul.f32 %v436, %v866
      %v1130 = vmul.f32 %v453, %v876
      %v1131 = vadd.f32 %v1129, %v1130
      %v1132 = vadd.f32 %v1131, 0.01
      %v1133 = vmul.f32 %v872, 0.95122945
      %v1134 = vmul.f32 %v1128, 0.048770547
      %v1135 = vadd.f32 %v1133, %v1134
      %v1136 = vmul.f32 %v1132, %v876
      %v1137 = vsub.f32 %v1135, %v1136
      %v1138 = vsub.f32 %v1137, %v1132
      %vm1139 = vcmp.gt.f32.partialorder %v1138, 0.0
      %v1140 = vsel %vm1139, 1, 0
      %v1141 = vcvt.s32.f32 %v1140
      %1142 = vrot.lane.b32.xlu0 %v963, 64
      %v1143 = vpop.permute.xlu0 %1142
      %v1145 = vsel %vm402, %v1141, %v1143
      %1146 = vmatprep.subr.mxu0 0.0
      %1147 = vmatpush1.msra.mxu0 %v496
      %1148 = vmatprep.subr.mxu0 0.0
      %1149 = vmatpush1.msra.mxu0 %v497
      %1150 = vmatprep.subr.mxu0 0.0
      %1151 = vmatpush1.msra.mxu0 %v498
      %1152 = vmatprep.subr.mxu0 0.0
      %1153 = vmatpush1.msra.mxu0 %v499
      %1154 = vmatprep.subr.mxu0 0.0
      %1155 = vmatpush1.msra.mxu0 %v500
      %1156 = vmatprep.subr.mxu0 0.0
      %1157 = vmatpush1.msra.mxu0 %v501
      %1158 = vmatprep.subr.mxu0 0.0
      %1159 = vmatpush1.msra.mxu0 %v502
      %1160 = vmatprep.subr.mxu0 0.0
      %1161 = vmatpush1.msra.mxu0 %v503
      %1162 = vmatprep.subr.mxu0 0.0
      %1163 = vmatpush1.msra.mxu0 %v504
      %1164 = vmatprep.subr.mxu0 0.0
      %1165 = vmatpush1.msra.mxu0 %v505
      %1166 = vmatprep.subr.mxu0 0.0
      %1167 = vmatpush1.msra.mxu0 %v506
      %1168 = vmatprep.subr.mxu0 0.0
      %1169 = vmatpush1.msra.mxu0 %v507
      %1170 = vmatprep.subr.mxu0 0.0
      %1171 = vmatpush1.msra.mxu0 %v508
      %1172 = vmatprep.subr.mxu0 0.0
      %1173 = vmatpush1.msra.mxu0 %v509
      %1174 = vmatprep.subr.mxu0 0.0
      %1175 = vmatpush1.msra.mxu0 %v510
      %1176 = vmatprep.subr.mxu0 0.0
      %1177 = vmatpush1.msra.mxu0 %v511
      %1178 = vmatprep.subr.mxu0 0.0
      %1179 = vmatpush1.msra.mxu0 0.0
      %1180 = vmatprep.subr.mxu0 0.0
      %1181 = vmatpush1.msra.mxu0 0.0
      %1182 = vmatprep.subr.mxu0 0.0
      %1183 = vmatpush1.msra.mxu0 0.0
      %1184 = vmatprep.subr.mxu0 0.0
      %1185 = vmatpush1.msra.mxu0 0.0
      %1186 = vmatprep.subr.mxu0 0.0
      %1187 = vmatpush1.msra.mxu0 0.0
      %1188 = vmatprep.subr.mxu0 0.0
      %1189 = vmatpush1.msra.mxu0 0.0
      %1190 = vmatprep.subr.mxu0 0.0
      %1191 = vmatpush1.msra.mxu0 0.0
      %1192 = vmatprep.subr.mxu0 0.0
      %1193 = vmatpush1.msra.mxu0 0.0
      %1194 = vmatprep.subr.mxu0 0.0
      %1195 = vmatpush1.msra.mxu0 0.0
      %1196 = vmatprep.subr.mxu0 0.0
      %1197 = vmatpush1.msra.mxu0 0.0
      %1198 = vmatprep.subr.mxu0 0.0
      %1199 = vmatpush1.msra.mxu0 0.0
      %1200 = vmatprep.subr.mxu0 0.0
      %1201 = vmatpush1.msra.mxu0 0.0
      %1202 = vmatprep.subr.mxu0 0.0
      %1203 = vmatpush1.msra.mxu0 0.0
      %1204 = vmatprep.subr.mxu0 0.0
      %1205 = vmatpush1.msra.mxu0 0.0
      %1206 = vmatprep.subr.mxu0 0.0
      %1207 = vmatpush1.msra.mxu0 0.0
      %1208 = vmatprep.subr.mxu0 0.0
      %1209 = vmatpush1.msra.mxu0 0.0
      %1210 = vmatprep.mubr.f32.mxu0 0.0
      %1211 = vmatmul.mubr.f32.gmra.mrb[0].mxu0 %v1145
      %v1212 = vpop.f32.mrb[0].mxu0
      %v1213 = vadd.f32 %v463, %v1212
      %v1214 = vpop.f32.mrb[0].mxu0
      %1215 = vdwg.mxu0
      %v1216 = vmul.f32 %v443, %v953
      %v1217 = vmul.f32 %v455, %v963
      %v1218 = vadd.f32 %v1216, %v1217
      %v1219 = vadd.f32 %v1218, 0.01
      %v1220 = vmul.f32 %v959, 0.95122945
      %v1221 = vmul.f32 %v1213, 0.048770547
      %v1222 = vadd.f32 %v1220, %v1221
      %v1223 = vmul.f32 %v1219, %v963
      %v1224 = vsub.f32 %v1222, %v1223
      %v1225 = vsub.f32 %v1224, %v1219
      %vm1226 = vcmp.gt.f32.partialorder %v1225, 0.0
      %v1227 = vsel %vm1226, 1, 0
      %v1228 = vcvt.s32.f32 %v1227
      %v1230 = vsel %vm402, %v1228, 0
      %1232 = vmatprep.subr.mxu0 0.0
      %1233 = vmatpush1.msra.mxu0 %v512
      %1234 = vmatprep.subr.mxu0 0.0
      %1235 = vmatpush1.msra.mxu0 %v513
      %1236 = vmatprep.subr.mxu0 0.0
      %1237 = vmatpush1.msra.mxu0 %v514
      %1238 = vmatprep.subr.mxu0 0.0
      %1239 = vmatpush1.msra.mxu0 %v515
      %1240 = vmatprep.subr.mxu0 0.0
      %1241 = vmatpush1.msra.mxu0 %v516
      %1242 = vmatprep.subr.mxu0 0.0
      %1243 = vmatpush1.msra.mxu0 %v517
      %1244 = vmatprep.subr.mxu0 0.0
      %1245 = vmatpush1.msra.mxu0 %v518
      %1246 = vmatprep.subr.mxu0 0.0
      %1247 = vmatpush1.msra.mxu0 %v519
      %1248 = vmatprep.subr.mxu0 0.0
      %1249 = vmatpush1.msra.mxu0 0.0
      %1250 = vmatprep.subr.mxu0 0.0
      %1251 = vmatpush1.msra.mxu0 0.0
      %1252 = vmatprep.subr.mxu0 0.0
      %1253 = vmatpush1.msra.mxu0 0.0
      %1254 = vmatprep.subr.mxu0 0.0
      %1255 = vmatpush1.msra.mxu0 0.0
      %1256 = vmatprep.subr.mxu0 0.0
      %1257 = vmatpush1.msra.mxu0 0.0
      %1258 = vmatprep.subr.mxu0 0.0
      %1259 = vmatpush1.msra.mxu0 0.0
      %1260 = vmatprep.subr.mxu0 0.0
      %1261 = vmatpush1.msra.mxu0 0.0
      %1262 = vmatprep.subr.mxu0 0.0
      %1263 = vmatpush1.msra.mxu0 0.0
      %1264 = vmatprep.subr.mxu0 0.0
      %1265 = vmatpush1.msra.mxu0 0.0
      %1266 = vmatprep.subr.mxu0 0.0
      %1267 = vmatpush1.msra.mxu0 0.0
      %1268 = vmatprep.subr.mxu0 0.0
      %1269 = vmatpush1.msra.mxu0 0.0
      %1270 = vmatprep.subr.mxu0 0.0
      %1271 = vmatpush1.msra.mxu0 0.0
      %1272 = vmatprep.subr.mxu0 0.0
      %1273 = vmatpush1.msra.mxu0 0.0
      %1274 = vmatprep.subr.mxu0 0.0
      %1275 = vmatpush1.msra.mxu0 0.0
      %1276 = vmatprep.subr.mxu0 0.0
      %1277 = vmatpush1.msra.mxu0 0.0
      %1278 = vmatprep.subr.mxu0 0.0
      %1279 = vmatpush1.msra.mxu0 0.0
      %1280 = vmatprep.subr.mxu0 0.0
      %1281 = vmatpush1.msra.mxu0 0.0
      %1282 = vmatprep.subr.mxu0 0.0
      %1283 = vmatpush1.msra.mxu0 0.0
      %1284 = vmatprep.subr.mxu0 0.0
      %1285 = vmatpush1.msra.mxu0 0.0
      %1286 = vmatprep.subr.mxu0 0.0
      %1287 = vmatpush1.msra.mxu0 0.0
      %1288 = vmatprep.subr.mxu0 0.0
      %1289 = vmatpush1.msra.mxu0 0.0
      %1290 = vmatprep.subr.mxu0 0.0
      %1291 = vmatpush1.msra.mxu0 0.0
      %1292 = vmatprep.subr.mxu0 0.0
      %1293 = vmatpush1.msra.mxu0 0.0
      %1294 = vmatprep.subr.mxu0 0.0
      %1295 = vmatpush1.msra.mxu0 0.0
      %1296 = vmatprep.mubr.f32.mxu0 0.0
      %1297 = vmatmul.mubr.f32.gmra.mrb[0].mxu0 %v1230
      %v1298 = vpop.f32.mrb[0].mxu0
      %v1299 = vadd.f32 %v470, %v1298
      %v1300 = vpop.f32.mrb[0].mxu0
      %1301 = vdwg.mxu0
      %v1302 = vmul.f32 %v450, %v1039
      %v1303 = vmul.f32 %v457, %v1049
      %v1304 = vadd.f32 %v1302, %v1303
      %v1305 = vadd.f32 %v1304, 0.01
      %v1306 = vmul.f32 %v1045, 0.95122945
      %v1307 = vmul.f32 %v1299, 0.048770547
      %v1308 = vadd.f32 %v1306, %v1307
      %v1309 = vmul.f32 %v1305, %v1049
      %v1310 = vsub.f32 %v1308, %v1309
      %v1311 = vsub.f32 %v1310, %v1305
      %vm1312 = vcmp.gt.f32.partialorder %v1311, 0.0
      %v1313 = vsel %vm1312, 1, 0
      %v1314 = vcvt.s32.f32 %v1313
      %v1315 = vadd.f32 %v1050, %v1314
      %s1316 = sadd.s32 %s785, 3
      %s1317 = smul.u32 %s1316, 8
      %s1318 = scalar_lea.vmem [#allocation2], %s1317
      %v1319 = vld [vmem:[%s1318] sm:$0xff]
      %v1321 = vsel %vm402, %v1141, 0
      %1323 = vmatprep.subr.mxu0 0.0
      %1324 = vmatpush1.msra.mxu0 %v488
      %1325 = vmatprep.subr.mxu0 0.0
      %1326 = vmatpush1.msra.mxu0 %v489
      %1327 = vmatprep.subr.mxu0 0.0
      %1328 = vmatpush1.msra.mxu0 %v490
      %1329 = vmatprep.subr.mxu0 0.0
      %1330 = vmatpush1.msra.mxu0 %v491
      %1331 = vmatprep.subr.mxu0 0.0
      %1332 = vmatpush1.msra.mxu0 %v492
      %1333 = vmatprep.subr.mxu0 0.0
      %1334 = vmatpush1.msra.mxu0 %v493
      %1335 = vmatprep.subr.mxu0 0.0
      %1336 = vmatpush1.msra.mxu0 %v494
      %1337 = vmatprep.subr.mxu0 0.0
      %1338 = vmatpush1.msra.mxu0 %v495
      %1339 = vmatprep.subr.mxu0 0.0
      %1340 = vmatpush1.msra.mxu0 0.0
      %1341 = vmatprep.subr.mxu0 0.0
      %1342 = vmatpush1.msra.mxu0 0.0
      %1343 = vmatprep.subr.mxu0 0.0
      %1344 = vmatpush1.msra.mxu0 0.0
      %1345 = vmatprep.subr.mxu0 0.0
      %1346 = vmatpush1.msra.mxu0 0.0
      %1347 = vmatprep.subr.mxu0 0.0
      %1348 = vmatpush1.msra.mxu0 0.0
      %1349 = vmatprep.subr.mxu0 0.0
      %1350 = vmatpush1.msra.mxu0 0.0
      %1351 = vmatprep.subr.mxu0 0.0
      %1352 = vmatpush1.msra.mxu0 0.0
      %1353 = vmatprep.subr.mxu0 0.0
      %1354 = vmatpush1.msra.mxu0 0.0
      %1355 = vmatprep.subr.mxu0 0.0
      %1356 = vmatpush1.msra.mxu0 0.0
      %1357 = vmatprep.subr.mxu0 0.0
      %1358 = vmatpush1.msra.mxu0 0.0
      %1359 = vmatprep.subr.mxu0 0.0
      %1360 = vmatpush1.msra.mxu0 0.0
      %1361 = vmatprep.subr.mxu0 0.0
      %1362 = vmatpush1.msra.mxu0 0.0
      %1363 = vmatprep.subr.mxu0 0.0
      %1364 = vmatpush1.msra.mxu0 0.0
      %1365 = vmatprep.subr.mxu0 0.0
      %1366 = vmatpush1.msra.mxu0 0.0
      %1367 = vmatprep.subr.mxu0 0.0
      %1368 = vmatpush1.msra.mxu0 0.0
      %1369 = vmatprep.subr.mxu0 0.0
      %1370 = vmatpush1.msra.mxu0 0.0
      %1371 = vmatprep.subr.mxu0 0.0
      %1372 = vmatpush1.msra.mxu0 0.0
      %1373 = vmatprep.subr.mxu0 0.0
      %1374 = vmatpush1.msra.mxu0 0.0
      %1375 = vmatprep.subr.mxu0 0.0
      %1376 = vmatpush1.msra.mxu0 0.0
      %1377 = vmatprep.subr.mxu0 0.0
      %1378 = vmatpush1.msra.mxu0 0.0
      %1379 = vmatprep.subr.mxu0 0.0
      %1380 = vmatpush1.msra.mxu0 0.0
      %1381 = vmatprep.subr.mxu0 0.0
      %1382 = vmatpush1.msra.mxu0 0.0
      %1383 = vmatprep.subr.mxu0 0.0
      %1384 = vmatpush1.msra.mxu0 0.0
      %1385 = vmatprep.subr.mxu0 0.0
      %1386 = vmatpush1.msra.mxu0 0.0
      %1387 = vmatprep.mubr.f32.mxu0 0.0
      %1388 = vmatmul.mubr.f32.gmra.mrb[0].mxu0 %v1321
      %v1389 = vpop.f32.mrb[0].mxu0
      %v1390 = vadd.f32 0.0, %v1389
      %v1391 = vpop.f32.mrb[0].mxu0
      %1392 = vdwg.mxu0
      %v1393 = vadd.f32 %v1319, %v1390
      %v1394 = vmul.f32 %v436, %v1131
      %v1395 = vmul.f32 %v453, %v1141
      %v1396 = vadd.f32 %v1394, %v1395
      %v1397 = vadd.f32 %v1396, 0.01
      %v1398 = vmul.f32 %v1137, 0.95122945
      %v1399 = vmul.f32 %v1393, 0.048770547
      %v1400 = vadd.f32 %v1398, %v1399
      %v1401 = vmul.f32 %v1397, %v1141
      %v1402 = vsub.f32 %v1400, %v1401
      %v1403 = vsub.f32 %v1402, %v1397
      %vm1404 = vcmp.gt.f32.partialorder %v1403, 0.0
      %v1405 = vsel %vm1404, 1, 0
      %v1406 = vcvt.s32.f32 %v1405
      %1407 = vrot.lane.b32.xlu0 %v1228, 64
      %v1408 = vpop.permute.xlu0 %1407
      %v1410 = vsel %vm402, %v1406, %v1408
      %1411 = vmatprep.subr.mxu0 0.0
      %1412 = vmatpush1.msra.mxu0 %v496
      %1413 = vmatprep.subr.mxu0 0.0
      %1414 = vmatpush1.msra.mxu0 %v497
      %1415 = vmatprep.subr.mxu0 0.0
      %1416 = vmatpush1.msra.mxu0 %v498
      %1417 = vmatprep.subr.mxu0 0.0
      %1418 = vmatpush1.msra.mxu0 %v499
      %1419 = vmatprep.subr.mxu0 0.0
      %1420 = vmatpush1.msra.mxu0 %v500
      %1421 = vmatprep.subr.mxu0 0.0
      %1422 = vmatpush1.msra.mxu0 %v501
      %1423 = vmatprep.subr.mxu0 0.0
      %1424 = vmatpush1.msra.mxu0 %v502
      %1425 = vmatprep.subr.mxu0 0.0
      %1426 = vmatpush1.msra.mxu0 %v503
      %1427 = vmatprep.subr.mxu0 0.0
      %1428 = vmatpush1.msra.mxu0 %v504
      %1429 = vmatprep.subr.mxu0 0.0
      %1430 = vmatpush1.msra.mxu0 %v505
      %1431 = vmatprep.subr.mxu0 0.0
      %1432 = vmatpush1.msra.mxu0 %v506
      %1433 = vmatprep.subr.mxu0 0.0
      %1434 = vmatpush1.msra.mxu0 %v507
      %1435 = vmatprep.subr.mxu0 0.0
      %1436 = vmatpush1.msra.mxu0 %v508
      %1437 = vmatprep.subr.mxu0 0.0
      %1438 = vmatpush1.msra.mxu0 %v509
      %1439 = vmatprep.subr.mxu0 0.0
      %1440 = vmatpush1.msra.mxu0 %v510
      %1441 = vmatprep.subr.mxu0 0.0
      %1442 = vmatpush1.msra.mxu0 %v511
      %1443 = vmatprep.subr.mxu0 0.0
      %1444 = vmatpush1.msra.mxu0 0.0
      %1445 = vmatprep.subr.mxu0 0.0
      %1446 = vmatpush1.msra.mxu0 0.0
      %1447 = vmatprep.subr.mxu0 0.0
      %1448 = vmatpush1.msra.mxu0 0.0
      %1449 = vmatprep.subr.mxu0 0.0
      %1450 = vmatpush1.msra.mxu0 0.0
      %1451 = vmatprep.subr.mxu0 0.0
      %1452 = vmatpush1.msra.mxu0 0.0
      %1453 = vmatprep.subr.mxu0 0.0
      %1454 = vmatpush1.msra.mxu0 0.0
      %1455 = vmatprep.subr.mxu0 0.0
      %1456 = vmatpush1.msra.mxu0 0.0
      %1457 = vmatprep.subr.mxu0 0.0
      %1458 = vmatpush1.msra.mxu0 0.0
      %1459 = vmatprep.subr.mxu0 0.0
      %1460 = vmatpush1.msra.mxu0 0.0
      %1461 = vmatprep.subr.mxu0 0.0
      %1462 = vmatpush1.msra.mxu0 0.0
      %1463 = vmatprep.subr.mxu0 0.0
      %1464 = vmatpush1.msra.mxu0 0.0
      %1465 = vmatprep.subr.mxu0 0.0
      %1466 = vmatpush1.msra.mxu0 0.0
      %1467 = vmatprep.subr.mxu0 0.0
      %1468 = vmatpush1.msra.mxu0 0.0
      %1469 = vmatprep.subr.mxu0 0.0
      %1470 = vmatpush1.msra.mxu0 0.0
      %1471 = vmatprep.subr.mxu0 0.0
      %1472 = vmatpush1.msra.mxu0 0.0
      %1473 = vmatprep.subr.mxu0 0.0
      %1474 = vmatpush1.msra.mxu0 0.0
      %1475 = vmatprep.mubr.f32.mxu0 0.0
      %1476 = vmatmul.mubr.f32.gmra.mrb[0].mxu0 %v1410
      %v1477 = vpop.f32.mrb[0].mxu0
      %v1478 = vadd.f32 %v463, %v1477
      %v1479 = vpop.f32.mrb[0].mxu0
      %1480 = vdwg.mxu0
      %v1481 = vmul.f32 %v443, %v1218
      %v1482 = vmul.f32 %v455, %v1228
      %v1483 = vadd.f32 %v1481, %v1482
      %v1484 = vadd.f32 %v1483, 0.01
      %v1485 = vmul.f32 %v1224, 0.95122945
      %v1486 = vmul.f32 %v1478, 0.048770547
      %v1487 = vadd.f32 %v1485, %v1486
      %v1488 = vmul.f32 %v1484, %v1228
      %v1489 = vsub.f32 %v1487, %v1488
      %v1490 = vsub.f32 %v1489, %v1484
      %vm1491 = vcmp.gt.f32.partialorder %v1490, 0.0
      %v1492 = vsel %vm1491, 1, 0
      %v1493 = vcvt.s32.f32 %v1492
      %v1495 = vsel %vm402, %v1493, 0
      %1497 = vmatprep.subr.mxu0 0.0
      %1498 = vmatpush1.msra.mxu0 %v512
      %1499 = vmatprep.subr.mxu0 0.0
      %1500 = vmatpush1.msra.mxu0 %v513
      %1501 = vmatprep.subr.mxu0 0.0
      %1502 = vmatpush1.msra.mxu0 %v514
      %1503 = vmatprep.subr.mxu0 0.0
      %1504 = vmatpush1.msra.mxu0 %v515
      %1505 = vmatprep.subr.mxu0 0.0
      %1506 = vmatpush1.msra.mxu0 %v516
      %1507 = vmatprep.subr.mxu0 0.0
      %1508 = vmatpush1.msra.mxu0 %v517
      %1509 = vmatprep.subr.mxu0 0.0
      %1510 = vmatpush1.msra.mxu0 %v518
      %1511 = vmatprep.subr.mxu0 0.0
      %1512 = vmatpush1.msra.mxu0 %v519
      %1513 = vmatprep.subr.mxu0 0.0
      %1514 = vmatpush1.msra.mxu0 0.0
      %1515 = vmatprep.subr.mxu0 0.0
      %1516 = vmatpush1.msra.mxu0 0.0
      %1517 = vmatprep.subr.mxu0 0.0
      %1518 = vmatpush1.msra.mxu0 0.0
      %1519 = vmatprep.subr.mxu0 0.0
      %1520 = vmatpush1.msra.mxu0 0.0
      %1521 = vmatprep.subr.mxu0 0.0
      %1522 = vmatpush1.msra.mxu0 0.0
      %1523 = vmatprep.subr.mxu0 0.0
      %1524 = vmatpush1.msra.mxu0 0.0
      %1525 = vmatprep.subr.mxu0 0.0
      %1526 = vmatpush1.msra.mxu0 0.0
      %1527 = vmatprep.subr.mxu0 0.0
      %1528 = vmatpush1.msra.mxu0 0.0
      %1529 = vmatprep.subr.mxu0 0.0
      %1530 = vmatpush1.msra.mxu0 0.0
      %1531 = vmatprep.subr.mxu0 0.0
      %1532 = vmatpush1.msra.mxu0 0.0
      %1533 = vmatprep.subr.mxu0 0.0
      %1534 = vmatpush1.msra.mxu0 0.0
      %1535 = vmatprep.subr.mxu0 0.0
      %1536 = vmatpush1.msra.mxu0 0.0
      %1537 = vmatprep.subr.mxu0 0.0
      %1538 = vmatpush1.msra.mxu0 0.0
      %1539 = vmatprep.subr.mxu0 0.0
      %1540 = vmatpush1.msra.mxu0 0.0
      %1541 = vmatprep.subr.mxu0 0.0
      %1542 = vmatpush1.msra.mxu0 0.0
      %1543 = vmatprep.subr.mxu0 0.0
      %1544 = vmatpush1.msra.mxu0 0.0
      %1545 = vmatprep.subr.mxu0 0.0
      %1546 = vmatpush1.msra.mxu0 0.0
      %1547 = vmatprep.subr.mxu0 0.0
      %1548 = vmatpush1.msra.mxu0 0.0
      %1549 = vmatprep.subr.mxu0 0.0
      %1550 = vmatpush1.msra.mxu0 0.0
      %1551 = vmatprep.subr.mxu0 0.0
      %1552 = vmatpush1.msra.mxu0 0.0
      %1553 = vmatprep.subr.mxu0 0.0
      %1554 = vmatpush1.msra.mxu0 0.0
      %1555 = vmatprep.subr.mxu0 0.0
      %1556 = vmatpush1.msra.mxu0 0.0
      %1557 = vmatprep.subr.mxu0 0.0
      %1558 = vmatpush1.msra.mxu0 0.0
      %1559 = vmatprep.subr.mxu0 0.0
      %1560 = vmatpush1.msra.mxu0 0.0
      %1561 = vmatprep.mubr.f32.mxu0 0.0
      %1562 = vmatmul.mubr.f32.gmra.mrb[0].mxu0 %v1495
      %v1563 = vpop.f32.mrb[0].mxu0
      %v1564 = vadd.f32 %v470, %v1563
      %v1565 = vpop.f32.mrb[0].mxu0
      %1566 = vdwg.mxu0
      %v1567 = vmul.f32 %v450, %v1304
      %v1568 = vmul.f32 %v457, %v1314
      %v1569 = vadd.f32 %v1567, %v1568
      %v1570 = vadd.f32 %v1569, 0.01
      %v1571 = vmul.f32 %v1310, 0.95122945
      %v1572 = vmul.f32 %v1564, 0.048770547
      %v1573 = vadd.f32 %v1571, %v1572
      %v1574 = vmul.f32 %v1570, %v1314
      %v1575 = vsub.f32 %v1573, %v1574
      %v1576 = vsub.f32 %v1575, %v1570
      %vm1577 = vcmp.gt.f32.partialorder %v1576, 0.0
      %v1578 = vsel %vm1577, 1, 0
      %v1579 = vcvt.s32.f32 %v1578
      %v1580 = vadd.f32 %v1315, %v1579
      %s1581 = sadd.s32 %s785, 4
      %s1582 = smul.u32 %s1581, 8
      %s1583 = scalar_lea.vmem [#allocation2], %s1582
      %v1584 = vld [vmem:[%s1583] sm:$0xff]
      %v1586 = vsel %vm402, %v1406, 0
      %1588 = vmatprep.subr.mxu0 0.0
      %1589 = vmatpush1.msra.mxu0 %v488
      %1590 = vmatprep.subr.mxu0 0.0
      %1591 = vmatpush1.msra.mxu0 %v489
      %1592 = vmatprep.subr.mxu0 0.0
      %1593 = vmatpush1.msra.mxu0 %v490
      %1594 = vmatprep.subr.mxu0 0.0
      %1595 = vmatpush1.msra.mxu0 %v491
      %1596 = vmatprep.subr.mxu0 0.0
      %1597 = vmatpush1.msra.mxu0 %v492
      %1598 = vmatprep.subr.mxu0 0.0
      %1599 = vmatpush1.msra.mxu0 %v493
      %1600 = vmatprep.subr.mxu0 0.0
      %1601 = vmatpush1.msra.mxu0 %v494
      %1602 = vmatprep.subr.mxu0 0.0
      %1603 = vmatpush1.msra.mxu0 %v495
      %1604 = vmatprep.subr.mxu0 0.0
      %1605 = vmatpush1.msra.mxu0 0.0
      %1606 = vmatprep.subr.mxu0 0.0
      %1607 = vmatpush1.msra.mxu0 0.0
      %1608 = vmatprep.subr.mxu0 0.0
      %1609 = vmatpush1.msra.mxu0 0.0
      %1610 = vmatprep.subr.mxu0 0.0
      %1611 = vmatpush1.msra.mxu0 0.0
      %1612 = vmatprep.subr.mxu0 0.0
      %1613 = vmatpush1.msra.mxu0 0.0
      %1614 = vmatprep.subr.mxu0 0.0
      %1615 = vmatpush1.msra.mxu0 0.0
      %1616 = vmatprep.subr.mxu0 0.0
      %1617 = vmatpush1.msra.mxu0 0.0
      %1618 = vmatprep.subr.mxu0 0.0
      %1619 = vmatpush1.msra.mxu0 0.0
      %1620 = vmatprep.subr.mxu0 0.0
      %1621 = vmatpush1.msra.mxu0 0.0
      %1622 = vmatprep.subr.mxu0 0.0
      %1623 = vmatpush1.msra.mxu0 0.0
      %1624 = vmatprep.subr.mxu0 0.0
      %1625 = vmatpush1.msra.mxu0 0.0
      %1626 = vmatprep.subr.mxu0 0.0
      %1627 = vmatpush1.msra.mxu0 0.0
      %1628 = vmatprep.subr.mxu0 0.0
      %1629 = vmatpush1.msra.mxu0 0.0
      %1630 = vmatprep.subr.mxu0 0.0
      %1631 = vmatpush1.msra.mxu0 0.0
      %1632 = vmatprep.subr.mxu0 0.0
      %1633 = vmatpush1.msra.mxu0 0.0
      %1634 = vmatprep.subr.mxu0 0.0
      %1635 = vmatpush1.msra.mxu0 0.0
      %1636 = vmatprep.subr.mxu0 0.0
      %1637 = vmatpush1.msra.mxu0 0.0
      %1638 = vmatprep.subr.mxu0 0.0
      %1639 = vmatpush1.msra.mxu0 0.0
      %1640 = vmatprep.subr.mxu0 0.0
      %1641 = vmatpush1.msra.mxu0 0.0
      %1642 = vmatprep.subr.mxu0 0.0
      %1643 = vmatpush1.msra.mxu0 0.0
      %1644 = vmatprep.subr.mxu0 0.0
      %1645 = vmatpush1.msra.mxu0 0.0
      %1646 = vmatprep.subr.mxu0 0.0
      %1647 = vmatpush1.msra.mxu0 0.0
      %1648 = vmatprep.subr.mxu0 0.0
      %1649 = vmatpush1.msra.mxu0 0.0
      %1650 = vmatprep.subr.mxu0 0.0
      %1651 = vmatpush1.msra.mxu0 0.0
      %1652 = vmatprep.mubr.f32.mxu0 0.0
      %1653 = vmatmul.mubr.f32.gmra.mrb[0].mxu0 %v1586
      %v1654 = vpop.f32.mrb[0].mxu0
      %v1655 = vadd.f32 0.0, %v1654
      %v1656 = vpop.f32.mrb[0].mxu0
      %1657 = vdwg.mxu0
      %v1658 = vadd.f32 %v1584, %v1655
      %v1659 = vmul.f32 %v436, %v1396
      %v1660 = vmul.f32 %v453, %v1406
      %v1661 = vadd.f32 %v1659, %v1660
      %v1662 = vadd.f32 %v1661, 0.01
      %v1663 = vmul.f32 %v1402, 0.95122945
      %v1664 = vmul.f32 %v1658, 0.048770547
      %v1665 = vadd.f32 %v1663, %v1664
      %v1666 = vmul.f32 %v1662, %v1406
      %v1667 = vsub.f32 %v1665, %v1666
      %v1668 = vsub.f32 %v1667, %v1662
      %vm1669 = vcmp.gt.f32.partialorder %v1668, 0.0
      %v1670 = vsel %vm1669, 1, 0
      %v1671 = vcvt.s32.f32 %v1670
      %1672 = vrot.lane.b32.xlu0 %v1493, 64
      %v1673 = vpop.permute.xlu0 %1672
      %v1675 = vsel %vm402, %v1671, %v1673
      %1676 = vmatprep.subr.mxu0 0.0
      %1677 = vmatpush1.msra.mxu0 %v496
      %1678 = vmatprep.subr.mxu0 0.0
      %1679 = vmatpush1.msra.mxu0 %v497
      %1680 = vmatprep.subr.mxu0 0.0
      %1681 = vmatpush1.msra.mxu0 %v498
      %1682 = vmatprep.subr.mxu0 0.0
      %1683 = vmatpush1.msra.mxu0 %v499
      %1684 = vmatprep.subr.mxu0 0.0
      %1685 = vmatpush1.msra.mxu0 %v500
      %1686 = vmatprep.subr.mxu0 0.0
      %1687 = vmatpush1.msra.mxu0 %v501
      %1688 = vmatprep.subr.mxu0 0.0
      %1689 = vmatpush1.msra.mxu0 %v502
      %1690 = vmatprep.subr.mxu0 0.0
      %1691 = vmatpush1.msra.mxu0 %v503
      %1692 = vmatprep.subr.mxu0 0.0
      %1693 = vmatpush1.msra.mxu0 %v504
      %1694 = vmatprep.subr.mxu0 0.0
      %1695 = vmatpush1.msra.mxu0 %v505
      %1696 = vmatprep.subr.mxu0 0.0
      %1697 = vmatpush1.msra.mxu0 %v506
      %1698 = vmatprep.subr.mxu0 0.0
      %1699 = vmatpush1.msra.mxu0 %v507
      %1700 = vmatprep.subr.mxu0 0.0
      %1701 = vmatpush1.msra.mxu0 %v508
      %1702 = vmatprep.subr.mxu0 0.0
      %1703 = vmatpush1.msra.mxu0 %v509
      %1704 = vmatprep.subr.mxu0 0.0
      %1705 = vmatpush1.msra.mxu0 %v510
      %1706 = vmatprep.subr.mxu0 0.0
      %1707 = vmatpush1.msra.mxu0 %v511
      %1708 = vmatprep.subr.mxu0 0.0
      %1709 = vmatpush1.msra.mxu0 0.0
      %1710 = vmatprep.subr.mxu0 0.0
      %1711 = vmatpush1.msra.mxu0 0.0
      %1712 = vmatprep.subr.mxu0 0.0
      %1713 = vmatpush1.msra.mxu0 0.0
      %1714 = vmatprep.subr.mxu0 0.0
      %1715 = vmatpush1.msra.mxu0 0.0
      %1716 = vmatprep.subr.mxu0 0.0
      %1717 = vmatpush1.msra.mxu0 0.0
      %1718 = vmatprep.subr.mxu0 0.0
      %1719 = vmatpush1.msra.mxu0 0.0
      %1720 = vmatprep.subr.mxu0 0.0
      %1721 = vmatpush1.msra.mxu0 0.0
      %1722 = vmatprep.subr.mxu0 0.0
      %1723 = vmatpush1.msra.mxu0 0.0
      %1724 = vmatprep.subr.mxu0 0.0
      %1725 = vmatpush1.msra.mxu0 0.0
      %1726 = vmatprep.subr.mxu0 0.0
      %1727 = vmatpush1.msra.mxu0 0.0
      %1728 = vmatprep.subr.mxu0 0.0
      %1729 = vmatpush1.msra.mxu0 0.0
      %1730 = vmatprep.subr.mxu0 0.0
      %1731 = vmatpush1.msra.mxu0 0.0
      %1732 = vmatprep.subr.mxu0 0.0
      %1733 = vmatpush1.msra.mxu0 0.0
      %1734 = vmatprep.subr.mxu0 0.0
      %1735 = vmatpush1.msra.mxu0 0.0
      %1736 = vmatprep.subr.mxu0 0.0
      %1737 = vmatpush1.msra.mxu0 0.0
      %1738 = vmatprep.subr.mxu0 0.0
      %1739 = vmatpush1.msra.mxu0 0.0
      %1740 = vmatprep.mubr.f32.mxu0 0.0
      %1741 = vmatmul.mubr.f32.gmra.mrb[0].mxu0 %v1675
      %v1742 = vpop.f32.mrb[0].mxu0
      %v1743 = vadd.f32 %v463, %v1742
      %v1744 = vpop.f32.mrb[0].mxu0
      %1745 = vdwg.mxu0
      %v1746 = vmul.f32 %v443, %v1483
      %v1747 = vmul.f32 %v455, %v1493
      %v1748 = vadd.f32 %v1746, %v1747
      %v1749 = vadd.f32 %v1748, 0.01
      %v1750 = vmul.f32 %v1489, 0.95122945
      %v1751 = vmul.f32 %v1743, 0.048770547
      %v1752 = vadd.f32 %v1750, %v1751
      %v1753 = vmul.f32 %v1749, %v1493
      %v1754 = vsub.f32 %v1752, %v1753
      %v1755 = vsub.f32 %v1754, %v1749
      %vm1756 = vcmp.gt.f32.partialorder %v1755, 0.0
      %v1757 = vsel %vm1756, 1, 0
      %v1758 = vcvt.s32.f32 %v1757
      %v1760 = vsel %vm402, %v1758, 0
      %1762 = vmatprep.subr.mxu0 0.0
      %1763 = vmatpush1.msra.mxu0 %v512
      %1764 = vmatprep.subr.mxu0 0.0
      %1765 = vmatpush1.msra.mxu0 %v513
      %1766 = vmatprep.subr.mxu0 0.0
      %1767 = vmatpush1.msra.mxu0 %v514
      %1768 = vmatprep.subr.mxu0 0.0
      %1769 = vmatpush1.msra.mxu0 %v515
      %1770 = vmatprep.subr.mxu0 0.0
      %1771 = vmatpush1.msra.mxu0 %v516
      %1772 = vmatprep.subr.mxu0 0.0
      %1773 = vmatpush1.msra.mxu0 %v517
      %1774 = vmatprep.subr.mxu0 0.0
      %1775 = vmatpush1.msra.mxu0 %v518
      %1776 = vmatprep.subr.mxu0 0.0
      %1777 = vmatpush1.msra.mxu0 %v519
      %1778 = vmatprep.subr.mxu0 0.0
      %1779 = vmatpush1.msra.mxu0 0.0
      %1780 = vmatprep.subr.mxu0 0.0
      %1781 = vmatpush1.msra.mxu0 0.0
      %1782 = vmatprep.subr.mxu0 0.0
      %1783 = vmatpush1.msra.mxu0 0.0
      %1784 = vmatprep.subr.mxu0 0.0
      %1785 = vmatpush1.msra.mxu0 0.0
      %1786 = vmatprep.subr.mxu0 0.0
      %1787 = vmatpush1.msra.mxu0 0.0
      %1788 = vmatprep.subr.mxu0 0.0
      %1789 = vmatpush1.msra.mxu0 0.0
      %1790 = vmatprep.subr.mxu0 0.0
      %1791 = vmatpush1.msra.mxu0 0.0
      %1792 = vmatprep.subr.mxu0 0.0
      %1793 = vmatpush1.msra.mxu0 0.0
      %1794 = vmatprep.subr.mxu0 0.0
      %1795 = vmatpush1.msra.mxu0 0.0
      %1796 = vmatprep.subr.mxu0 0.0
      %1797 = vmatpush1.msra.mxu0 0.0
      %1798 = vmatprep.subr.mxu0 0.0
      %1799 = vmatpush1.msra.mxu0 0.0
      %1800 = vmatprep.subr.mxu0 0.0
      %1801 = vmatpush1.msra.mxu0 0.0
      %1802 = vmatprep.subr.mxu0 0.0
      %1803 = vmatpush1.msra.mxu0 0.0
      %1804 = vmatprep.subr.mxu0 0.0
      %1805 = vmatpush1.msra.mxu0 0.0
      %1806 = vmatprep.subr.mxu0 0.0
      %1807 = vmatpush1.msra.mxu0 0.0
      %1808 = vmatprep.subr.mxu0 0.0
      %1809 = vmatpush1.msra.mxu0 0.0
      %1810 = vmatprep.subr.mxu0 0.0
      %1811 = vmatpush1.msra.mxu0 0.0
      %1812 = vmatprep.subr.mxu0 0.0
      %1813 = vmatpush1.msra.mxu0 0.0
      %1814 = vmatprep.subr.mxu0 0.0
      %1815 = vmatpush1.msra.mxu0 0.0
      %1816 = vmatprep.subr.mxu0 0.0
      %1817 = vmatpush1.msra.mxu0 0.0
      %1818 = vmatprep.subr.mxu0 0.0
      %1819 = vmatpush1.msra.mxu0 0.0
      %1820 = vmatprep.subr.mxu0 0.0
      %1821 = vmatpush1.msra.mxu0 0.0
      %1822 = vmatprep.subr.mxu0 0.0
      %1823 = vmatpush1.msra.mxu0 0.0
      %1824 = vmatprep.subr.mxu0 0.0
      %1825 = vmatpush1.msra.mxu0 0.0
      %1826 = vmatprep.mubr.f32.mxu0 0.0
      %1827 = vmatmul.mubr.f32.gmra.mrb[0].mxu0 %v1760
      %v1828 = vpop.f32.mrb[0].mxu0
      %v1829 = vadd.f32 %v470, %v1828
      %v1830 = vpop.f32.mrb[0].mxu0
      %1831 = vdwg.mxu0
      %v1832 = vmul.f32 %v450, %v1569
      %v1833 = vmul.f32 %v457, %v1579
      %v1834 = vadd.f32 %v1832, %v1833
      %v1835 = vadd.f32 %v1834, 0.01
      %v1836 = vmul.f32 %v1575, 0.95122945
      %v1837 = vmul.f32 %v1829, 0.048770547
      %v1838 = vadd.f32 %v1836, %v1837
      %v1839 = vmul.f32 %v1835, %v1579
      %v1840 = vsub.f32 %v1838, %v1839
      %v1841 = vsub.f32 %v1840, %v1835
      %vm1842 = vcmp.gt.f32.partialorder %v1841, 0.0
      %v1843 = vsel %vm1842, 1, 0
      %v1844 = vcvt.s32.f32 %v1843
      %v1845 = vadd.f32 %v1580, %v1844
      %s1846 = sadd.s32 %s785, 5
      %s1847 = smul.u32 %s1846, 8
      %s1848 = scalar_lea.vmem [#allocation2], %s1847
      %v1849 = vld [vmem:[%s1848] sm:$0xff]
      %v1851 = vsel %vm402, %v1671, 0
      %1853 = vmatprep.subr.mxu0 0.0
      %1854 = vmatpush1.msra.mxu0 %v488
      %1855 = vmatprep.subr.mxu0 0.0
      %1856 = vmatpush1.msra.mxu0 %v489
      %1857 = vmatprep.subr.mxu0 0.0
      %1858 = vmatpush1.msra.mxu0 %v490
      %1859 = vmatprep.subr.mxu0 0.0
      %1860 = vmatpush1.msra.mxu0 %v491
      %1861 = vmatprep.subr.mxu0 0.0
      %1862 = vmatpush1.msra.mxu0 %v492
      %1863 = vmatprep.subr.mxu0 0.0
      %1864 = vmatpush1.msra.mxu0 %v493
      %1865 = vmatprep.subr.mxu0 0.0
      %1866 = vmatpush1.msra.mxu0 %v494
      %1867 = vmatprep.subr.mxu0 0.0
      %1868 = vmatpush1.msra.mxu0 %v495
      %1869 = vmatprep.subr.mxu0 0.0
      %1870 = vmatpush1.msra.mxu0 0.0
      %1871 = vmatprep.subr.mxu0 0.0
      %1872 = vmatpush1.msra.mxu0 0.0
      %1873 = vmatprep.subr.mxu0 0.0
      %1874 = vmatpush1.msra.mxu0 0.0
      %1875 = vmatprep.subr.mxu0 0.0
      %1876 = vmatpush1.msra.mxu0 0.0
      %1877 = vmatprep.subr.mxu0 0.0
      %1878 = vmatpush1.msra.mxu0 0.0
      %1879 = vmatprep.subr.mxu0 0.0
      %1880 = vmatpush1.msra.mxu0 0.0
      %1881 = vmatprep.subr.mxu0 0.0
      %1882 = vmatpush1.msra.mxu0 0.0
      %1883 = vmatprep.subr.mxu0 0.0
      %1884 = vmatpush1.msra.mxu0 0.0
      %1885 = vmatprep.subr.mxu0 0.0
      %1886 = vmatpush1.msra.mxu0 0.0
      %1887 = vmatprep.subr.mxu0 0.0
      %1888 = vmatpush1.msra.mxu0 0.0
      %1889 = vmatprep.subr.mxu0 0.0
      %1890 = vmatpush1.msra.mxu0 0.0
      %1891 = vmatprep.subr.mxu0 0.0
      %1892 = vmatpush1.msra.mxu0 0.0
      %1893 = vmatprep.subr.mxu0 0.0
      %1894 = vmatpush1.msra.mxu0 0.0
      %1895 = vmatprep.subr.mxu0 0.0
      %1896 = vmatpush1.msra.mxu0 0.0
      %1897 = vmatprep.subr.mxu0 0.0
      %1898 = vmatpush1.msra.mxu0 0.0
      %1899 = vmatprep.subr.mxu0 0.0
      %1900 = vmatpush1.msra.mxu0 0.0
      %1901 = vmatprep.subr.mxu0 0.0
      %1902 = vmatpush1.msra.mxu0 0.0
      %1903 = vmatprep.subr.mxu0 0.0
      %1904 = vmatpush1.msra.mxu0 0.0
      %1905 = vmatprep.subr.mxu0 0.0
      %1906 = vmatpush1.msra.mxu0 0.0
      %1907 = vmatprep.subr.mxu0 0.0
      %1908 = vmatpush1.msra.mxu0 0.0
      %1909 = vmatprep.subr.mxu0 0.0
      %1910 = vmatpush1.msra.mxu0 0.0
      %1911 = vmatprep.subr.mxu0 0.0
      %1912 = vmatpush1.msra.mxu0 0.0
      %1913 = vmatprep.subr.mxu0 0.0
      %1914 = vmatpush1.msra.mxu0 0.0
      %1915 = vmatprep.subr.mxu0 0.0
      %1916 = vmatpush1.msra.mxu0 0.0
      %1917 = vmatprep.mubr.f32.mxu0 0.0
      %1918 = vmatmul.mubr.f32.gmra.mrb[0].mxu0 %v1851
      %v1919 = vpop.f32.mrb[0].mxu0
      %v1920 = vadd.f32 0.0, %v1919
      %v1921 = vpop.f32.mrb[0].mxu0
      %1922 = vdwg.mxu0
      %v1923 = vadd.f32 %v1849, %v1920
      %v1924 = vmul.f32 %v436, %v1661
      %v1925 = vmul.f32 %v453, %v1671
      %v1926 = vadd.f32 %v1924, %v1925
      %v1927 = vadd.f32 %v1926, 0.01
      %v1928 = vmul.f32 %v1667, 0.95122945
      %v1929 = vmul.f32 %v1923, 0.048770547
      %v1930 = vadd.f32 %v1928, %v1929
      %v1931 = vmul.f32 %v1927, %v1671
      %v1932 = vsub.f32 %v1930, %v1931
      %v1933 = vsub.f32 %v1932, %v1927
      %vm1934 = vcmp.gt.f32.partialorder %v1933, 0.0
      %v1935 = vsel %vm1934, 1, 0
      %v1936 = vcvt.s32.f32 %v1935
      %1937 = vrot.lane.b32.xlu0 %v1758, 64
      %v1938 = vpop.permute.xlu0 %1937
      %v1940 = vsel %vm402, %v1936, %v1938
      %1941 = vmatprep.subr.mxu0 0.0
      %1942 = vmatpush1.msra.mxu0 %v496
      %1943 = vmatprep.subr.mxu0 0.0
      %1944 = vmatpush1.msra.mxu0 %v497
      %1945 = vmatprep.subr.mxu0 0.0
      %1946 = vmatpush1.msra.mxu0 %v498
      %1947 = vmatprep.subr.mxu0 0.0
      %1948 = vmatpush1.msra.mxu0 %v499
      %1949 = vmatprep.subr.mxu0 0.0
      %1950 = vmatpush1.msra.mxu0 %v500
      %1951 = vmatprep.subr.mxu0 0.0
      %1952 = vmatpush1.msra.mxu0 %v501
      %1953 = vmatprep.subr.mxu0 0.0
      %1954 = vmatpush1.msra.mxu0 %v502
      %1955 = vmatprep.subr.mxu0 0.0
      %1956 = vmatpush1.msra.mxu0 %v503
      %1957 = vmatprep.subr.mxu0 0.0
      %1958 = vmatpush1.msra.mxu0 %v504
      %1959 = vmatprep.subr.mxu0 0.0
      %1960 = vmatpush1.msra.mxu0 %v505
      %1961 = vmatprep.subr.mxu0 0.0
      %1962 = vmatpush1.msra.mxu0 %v506
      %1963 = vmatprep.subr.mxu0 0.0
      %1964 = vmatpush1.msra.mxu0 %v507
      %1965 = vmatprep.subr.mxu0 0.0
      %1966 = vmatpush1.msra.mxu0 %v508
      %1967 = vmatprep.subr.mxu0 0.0
      %1968 = vmatpush1.msra.mxu0 %v509
      %1969 = vmatprep.subr.mxu0 0.0
      %1970 = vmatpush1.msra.mxu0 %v510
      %1971 = vmatprep.subr.mxu0 0.0
      %1972 = vmatpush1.msra.mxu0 %v511
      %1973 = vmatprep.subr.mxu0 0.0
      %1974 = vmatpush1.msra.mxu0 0.0
      %1975 = vmatprep.subr.mxu0 0.0
      %1976 = vmatpush1.msra.mxu0 0.0
      %1977 = vmatprep.subr.mxu0 0.0
      %1978 = vmatpush1.msra.mxu0 0.0
      %1979 = vmatprep.subr.mxu0 0.0
      %1980 = vmatpush1.msra.mxu0 0.0
      %1981 = vmatprep.subr.mxu0 0.0
      %1982 = vmatpush1.msra.mxu0 0.0
      %1983 = vmatprep.subr.mxu0 0.0
      %1984 = vmatpush1.msra.mxu0 0.0
      %1985 = vmatprep.subr.mxu0 0.0
      %1986 = vmatpush1.msra.mxu0 0.0
      %1987 = vmatprep.subr.mxu0 0.0
      %1988 = vmatpush1.msra.mxu0 0.0
      %1989 = vmatprep.subr.mxu0 0.0
      %1990 = vmatpush1.msra.mxu0 0.0
      %1991 = vmatprep.subr.mxu0 0.0
      %1992 = vmatpush1.msra.mxu0 0.0
      %1993 = vmatprep.subr.mxu0 0.0
      %1994 = vmatpush1.msra.mxu0 0.0
      %1995 = vmatprep.subr.mxu0 0.0
      %1996 = vmatpush1.msra.mxu0 0.0
      %1997 = vmatprep.subr.mxu0 0.0
      %1998 = vmatpush1.msra.mxu0 0.0
      %1999 = vmatprep.subr.mxu0 0.0
      %2000 = vmatpush1.msra.mxu0 0.0
      %2001 = vmatprep.subr.mxu0 0.0
      %2002 = vmatpush1.msra.mxu0 0.0
      %2003 = vmatprep.subr.mxu0 0.0
      %2004 = vmatpush1.msra.mxu0 0.0
      %2005 = vmatprep.mubr.f32.mxu0 0.0
      %2006 = vmatmul.mubr.f32.gmra.mrb[0].mxu0 %v1940
      %v2007 = vpop.f32.mrb[0].mxu0
      %v2008 = vadd.f32 %v463, %v2007
      %v2009 = vpop.f32.mrb[0].mxu0
      %2010 = vdwg.mxu0
      %v2011 = vmul.f32 %v443, %v1748
      %v2012 = vmul.f32 %v455, %v1758
      %v2013 = vadd.f32 %v2011, %v2012
      %v2014 = vadd.f32 %v2013, 0.01
      %v2015 = vmul.f32 %v1754, 0.95122945
      %v2016 = vmul.f32 %v2008, 0.048770547
      %v2017 = vadd.f32 %v2015, %v2016
      %v2018 = vmul.f32 %v2014, %v1758
      %v2019 = vsub.f32 %v2017, %v2018
      %v2020 = vsub.f32 %v2019, %v2014
      %vm2021 = vcmp.gt.f32.partialorder %v2020, 0.0
      %v2022 = vsel %vm2021, 1, 0
      %v2023 = vcvt.s32.f32 %v2022
      %v2025 = vsel %vm402, %v2023, 0
      %2027 = vmatprep.subr.mxu0 0.0
      %2028 = vmatpush1.msra.mxu0 %v512
      %2029 = vmatprep.subr.mxu0 0.0
      %2030 = vmatpush1.msra.mxu0 %v513
      %2031 = vmatprep.subr.mxu0 0.0
      %2032 = vmatpush1.msra.mxu0 %v514
      %2033 = vmatprep.subr.mxu0 0.0
      %2034 = vmatpush1.msra.mxu0 %v515
      %2035 = vmatprep.subr.mxu0 0.0
      %2036 = vmatpush1.msra.mxu0 %v516
      %2037 = vmatprep.subr.mxu0 0.0
      %2038 = vmatpush1.msra.mxu0 %v517
      %2039 = vmatprep.subr.mxu0 0.0
      %2040 = vmatpush1.msra.mxu0 %v518
      %2041 = vmatprep.subr.mxu0 0.0
      %2042 = vmatpush1.msra.mxu0 %v519
      %2043 = vmatprep.subr.mxu0 0.0
      %2044 = vmatpush1.msra.mxu0 0.0
      %2045 = vmatprep.subr.mxu0 0.0
      %2046 = vmatpush1.msra.mxu0 0.0
      %2047 = vmatprep.subr.mxu0 0.0
      %2048 = vmatpush1.msra.mxu0 0.0
      %2049 = vmatprep.subr.mxu0 0.0
      %2050 = vmatpush1.msra.mxu0 0.0
      %2051 = vmatprep.subr.mxu0 0.0
      %2052 = vmatpush1.msra.mxu0 0.0
      %2053 = vmatprep.subr.mxu0 0.0
      %2054 = vmatpush1.msra.mxu0 0.0
      %2055 = vmatprep.subr.mxu0 0.0
      %2056 = vmatpush1.msra.mxu0 0.0
      %2057 = vmatprep.subr.mxu0 0.0
      %2058 = vmatpush1.msra.mxu0 0.0
      %2059 = vmatprep.subr.mxu0 0.0
      %2060 = vmatpush1.msra.mxu0 0.0
      %2061 = vmatprep.subr.mxu0 0.0
      %2062 = vmatpush1.msra.mxu0 0.0
      %2063 = vmatprep.subr.mxu0 0.0
      %2064 = vmatpush1.msra.mxu0 0.0
      %2065 = vmatprep.subr.mxu0 0.0
      %2066 = vmatpush1.msra.mxu0 0.0
      %2067 = vmatprep.subr.mxu0 0.0
      %2068 = vmatpush1.msra.mxu0 0.0
      %2069 = vmatprep.subr.mxu0 0.0
      %2070 = vmatpush1.msra.mxu0 0.0
      %2071 = vmatprep.subr.mxu0 0.0
      %2072 = vmatpush1.msra.mxu0 0.0
      %2073 = vmatprep.subr.mxu0 0.0
      %2074 = vmatpush1.msra.mxu0 0.0
      %2075 = vmatprep.subr.mxu0 0.0
      %2076 = vmatpush1.msra.mxu0 0.0
      %2077 = vmatprep.subr.mxu0 0.0
      %2078 = vmatpush1.msra.mxu0 0.0
      %2079 = vmatprep.subr.mxu0 0.0
      %2080 = vmatpush1.msra.mxu0 0.0
      %2081 = vmatprep.subr.mxu0 0.0
      %2082 = vmatpush1.msra.mxu0 0.0
      %2083 = vmatprep.subr.mxu0 0.0
      %2084 = vmatpush1.msra.mxu0 0.0
      %2085 = vmatprep.subr.mxu0 0.0
      %2086 = vmatpush1.msra.mxu0 0.0
      %2087 = vmatprep.subr.mxu0 0.0
      %2088 = vmatpush1.msra.mxu0 0.0
      %2089 = vmatprep.subr.mxu0 0.0
      %2090 = vmatpush1.msra.mxu0 0.0
      %2091 = vmatprep.mubr.f32.mxu0 0.0
      %2092 = vmatmul.mubr.f32.gmra.mrb[0].mxu0 %v2025
      %v2093 = vpop.f32.mrb[0].mxu0
      %v2094 = vadd.f32 %v470, %v2093
      %v2095 = vpop.f32.mrb[0].mxu0
      %2096 = vdwg.mxu0
      %v2097 = vmul.f32 %v450, %v1834
      %v2098 = vmul.f32 %v457, %v1844
      %v2099 = vadd.f32 %v2097, %v2098
      %v2100 = vadd.f32 %v2099, 0.01
      %v2101 = vmul.f32 %v1840, 0.95122945
      %v2102 = vmul.f32 %v2094, 0.048770547
      %v2103 = vadd.f32 %v2101, %v2102
      %v2104 = vmul.f32 %v2100, %v1844
      %v2105 = vsub.f32 %v2103, %v2104
      %v2106 = vsub.f32 %v2105, %v2100
      %vm2107 = vcmp.gt.f32.partialorder %v2106, 0.0
      %v2108 = vsel %vm2107, 1, 0
      %v2109 = vcvt.s32.f32 %v2108
      %v2110 = vadd.f32 %v1845, %v2109
      %s2111 = sadd.s32 %s785, 6
      %s2112 = smul.u32 %s2111, 8
      %s2113 = scalar_lea.vmem [#allocation2], %s2112
      %v2114 = vld [vmem:[%s2113] sm:$0xff]
      %v2116 = vsel %vm402, %v1936, 0
      %2118 = vmatprep.subr.mxu0 0.0
      %2119 = vmatpush1.msra.mxu0 %v488
      %2120 = vmatprep.subr.mxu0 0.0
      %2121 = vmatpush1.msra.mxu0 %v489
      %2122 = vmatprep.subr.mxu0 0.0
      %2123 = vmatpush1.msra.mxu0 %v490
      %2124 = vmatprep.subr.mxu0 0.0
      %2125 = vmatpush1.msra.mxu0 %v491
      %2126 = vmatprep.subr.mxu0 0.0
      %2127 = vmatpush1.msra.mxu0 %v492
      %2128 = vmatprep.subr.mxu0 0.0
      %2129 = vmatpush1.msra.mxu0 %v493
      %2130 = vmatprep.subr.mxu0 0.0
      %2131 = vmatpush1.msra.mxu0 %v494
      %2132 = vmatprep.subr.mxu0 0.0
      %2133 = vmatpush1.msra.mxu0 %v495
      %2134 = vmatprep.subr.mxu0 0.0
      %2135 = vmatpush1.msra.mxu0 0.0
      %2136 = vmatprep.subr.mxu0 0.0
      %2137 = vmatpush1.msra.mxu0 0.0
      %2138 = vmatprep.subr.mxu0 0.0
      %2139 = vmatpush1.msra.mxu0 0.0
      %2140 = vmatprep.subr.mxu0 0.0
      %2141 = vmatpush1.msra.mxu0 0.0
      %2142 = vmatprep.subr.mxu0 0.0
      %2143 = vmatpush1.msra.mxu0 0.0
      %2144 = vmatprep.subr.mxu0 0.0
      %2145 = vmatpush1.msra.mxu0 0.0
      %2146 = vmatprep.subr.mxu0 0.0
      %2147 = vmatpush1.msra.mxu0 0.0
      %2148 = vmatprep.subr.mxu0 0.0
      %2149 = vmatpush1.msra.mxu0 0.0
      %2150 = vmatprep.subr.mxu0 0.0
      %2151 = vmatpush1.msra.mxu0 0.0
      %2152 = vmatprep.subr.mxu0 0.0
      %2153 = vmatpush1.msra.mxu0 0.0
      %2154 = vmatprep.subr.mxu0 0.0
      %2155 = vmatpush1.msra.mxu0 0.0
      %2156 = vmatprep.subr.mxu0 0.0
      %2157 = vmatpush1.msra.mxu0 0.0
      %2158 = vmatprep.subr.mxu0 0.0
      %2159 = vmatpush1.msra.mxu0 0.0
      %2160 = vmatprep.subr.mxu0 0.0
      %2161 = vmatpush1.msra.mxu0 0.0
      %2162 = vmatprep.subr.mxu0 0.0
      %2163 = vmatpush1.msra.mxu0 0.0
      %2164 = vmatprep.subr.mxu0 0.0
      %2165 = vmatpush1.msra.mxu0 0.0
      %2166 = vmatprep.subr.mxu0 0.0
      %2167 = vmatpush1.msra.mxu0 0.0
      %2168 = vmatprep.subr.mxu0 0.0
      %2169 = vmatpush1.msra.mxu0 0.0
      %2170 = vmatprep.subr.mxu0 0.0
      %2171 = vmatpush1.msra.mxu0 0.0
      %2172 = vmatprep.subr.mxu0 0.0
      %2173 = vmatpush1.msra.mxu0 0.0
      %2174 = vmatprep.subr.mxu0 0.0
      %2175 = vmatpush1.msra.mxu0 0.0
      %2176 = vmatprep.subr.mxu0 0.0
      %2177 = vmatpush1.msra.mxu0 0.0
      %2178 = vmatprep.subr.mxu0 0.0
      %2179 = vmatpush1.msra.mxu0 0.0
      %2180 = vmatprep.subr.mxu0 0.0
      %2181 = vmatpush1.msra.mxu0 0.0
      %2182 = vmatprep.mubr.f32.mxu0 0.0
      %2183 = vmatmul.mubr.f32.gmra.mrb[0].mxu0 %v2116
      %v2184 = vpop.f32.mrb[0].mxu0
      %v2185 = vadd.f32 0.0, %v2184
      %v2186 = vpop.f32.mrb[0].mxu0
      %2187 = vdwg.mxu0
      %v2188 = vadd.f32 %v2114, %v2185
      %v2189 = vmul.f32 %v436, %v1926
      %v2190 = vmul.f32 %v453, %v1936
      %v2191 = vadd.f32 %v2189, %v2190
      %v2192 = vadd.f32 %v2191, 0.01
      %v2193 = vmul.f32 %v1932, 0.95122945
      %v2194 = vmul.f32 %v2188, 0.048770547
      %v2195 = vadd.f32 %v2193, %v2194
      %v2196 = vmul.f32 %v2192, %v1936
      %v2197 = vsub.f32 %v2195, %v2196
      %v2198 = vsub.f32 %v2197, %v2192
      %vm2199 = vcmp.gt.f32.partialorder %v2198, 0.0
      %v2200 = vsel %vm2199, 1, 0
      %v2201 = vcvt.s32.f32 %v2200
      %2202 = vrot.lane.b32.xlu0 %v2023, 64
      %v2203 = vpop.permute.xlu0 %2202
      %v2205 = vsel %vm402, %v2201, %v2203
      %2206 = vmatprep.subr.mxu0 0.0
      %2207 = vmatpush1.msra.mxu0 %v496
      %2208 = vmatprep.subr.mxu0 0.0
      %2209 = vmatpush1.msra.mxu0 %v497
      %2210 = vmatprep.subr.mxu0 0.0
      %2211 = vmatpush1.msra.mxu0 %v498
      %2212 = vmatprep.subr.mxu0 0.0
      %2213 = vmatpush1.msra.mxu0 %v499
      %2214 = vmatprep.subr.mxu0 0.0
      %2215 = vmatpush1.msra.mxu0 %v500
      %2216 = vmatprep.subr.mxu0 0.0
      %2217 = vmatpush1.msra.mxu0 %v501
      %2218 = vmatprep.subr.mxu0 0.0
      %2219 = vmatpush1.msra.mxu0 %v502
      %2220 = vmatprep.subr.mxu0 0.0
      %2221 = vmatpush1.msra.mxu0 %v503
      %2222 = vmatprep.subr.mxu0 0.0
      %2223 = vmatpush1.msra.mxu0 %v504
      %2224 = vmatprep.subr.mxu0 0.0
      %2225 = vmatpush1.msra.mxu0 %v505
      %2226 = vmatprep.subr.mxu0 0.0
      %2227 = vmatpush1.msra.mxu0 %v506
      %2228 = vmatprep.subr.mxu0 0.0
      %2229 = vmatpush1.msra.mxu0 %v507
      %2230 = vmatprep.subr.mxu0 0.0
      %2231 = vmatpush1.msra.mxu0 %v508
      %2232 = vmatprep.subr.mxu0 0.0
      %2233 = vmatpush1.msra.mxu0 %v509
      %2234 = vmatprep.subr.mxu0 0.0
      %2235 = vmatpush1.msra.mxu0 %v510
      %2236 = vmatprep.subr.mxu0 0.0
      %2237 = vmatpush1.msra.mxu0 %v511
      %2238 = vmatprep.subr.mxu0 0.0
      %2239 = vmatpush1.msra.mxu0 0.0
      %2240 = vmatprep.subr.mxu0 0.0
      %2241 = vmatpush1.msra.mxu0 0.0
      %2242 = vmatprep.subr.mxu0 0.0
      %2243 = vmatpush1.msra.mxu0 0.0
      %2244 = vmatprep.subr.mxu0 0.0
      %2245 = vmatpush1.msra.mxu0 0.0
      %2246 = vmatprep.subr.mxu0 0.0
      %2247 = vmatpush1.msra.mxu0 0.0
      %2248 = vmatprep.subr.mxu0 0.0
      %2249 = vmatpush1.msra.mxu0 0.0
      %2250 = vmatprep.subr.mxu0 0.0
      %2251 = vmatpush1.msra.mxu0 0.0
      %2252 = vmatprep.subr.mxu0 0.0
      %2253 = vmatpush1.msra.mxu0 0.0
      %2254 = vmatprep.subr.mxu0 0.0
      %2255 = vmatpush1.msra.mxu0 0.0
      %2256 = vmatprep.subr.mxu0 0.0
      %2257 = vmatpush1.msra.mxu0 0.0
      %2258 = vmatprep.subr.mxu0 0.0
      %2259 = vmatpush1.msra.mxu0 0.0
      %2260 = vmatprep.subr.mxu0 0.0
      %2261 = vmatpush1.msra.mxu0 0.0
      %2262 = vmatprep.subr.mxu0 0.0
      %2263 = vmatpush1.msra.mxu0 0.0
      %2264 = vmatprep.subr.mxu0 0.0
      %2265 = vmatpush1.msra.mxu0 0.0
      %2266 = vmatprep.subr.mxu0 0.0
      %2267 = vmatpush1.msra.mxu0 0.0
      %2268 = vmatprep.subr.mxu0 0.0
      %2269 = vmatpush1.msra.mxu0 0.0
      %2270 = vmatprep.mubr.f32.mxu0 0.0
      %2271 = vmatmul.mubr.f32.gmra.mrb[0].mxu0 %v2205
      %v2272 = vpop.f32.mrb[0].mxu0
      %v2273 = vadd.f32 %v463, %v2272
      %v2274 = vpop.f32.mrb[0].mxu0
      %2275 = vdwg.mxu0
      %v2276 = vmul.f32 %v443, %v2013
      %v2277 = vmul.f32 %v455, %v2023
      %v2278 = vadd.f32 %v2276, %v2277
      %v2279 = vadd.f32 %v2278, 0.01
      %v2280 = vmul.f32 %v2019, 0.95122945
      %v2281 = vmul.f32 %v2273, 0.048770547
      %v2282 = vadd.f32 %v2280, %v2281
      %v2283 = vmul.f32 %v2279, %v2023
      %v2284 = vsub.f32 %v2282, %v2283
      %v2285 = vsub.f32 %v2284, %v2279
      %vm2286 = vcmp.gt.f32.partialorder %v2285, 0.0
      %v2287 = vsel %vm2286, 1, 0
      %v2288 = vcvt.s32.f32 %v2287
      %v2290 = vsel %vm402, %v2288, 0
      %2292 = vmatprep.subr.mxu0 0.0
      %2293 = vmatpush1.msra.mxu0 %v512
      %2294 = vmatprep.subr.mxu0 0.0
      %2295 = vmatpush1.msra.mxu0 %v513
      %2296 = vmatprep.subr.mxu0 0.0
      %2297 = vmatpush1.msra.mxu0 %v514
      %2298 = vmatprep.subr.mxu0 0.0
      %2299 = vmatpush1.msra.mxu0 %v515
      %2300 = vmatprep.subr.mxu0 0.0
      %2301 = vmatpush1.msra.mxu0 %v516
      %2302 = vmatprep.subr.mxu0 0.0
      %2303 = vmatpush1.msra.mxu0 %v517
      %2304 = vmatprep.subr.mxu0 0.0
      %2305 = vmatpush1.msra.mxu0 %v518
      %2306 = vmatprep.subr.mxu0 0.0
      %2307 = vmatpush1.msra.mxu0 %v519
      %2308 = vmatprep.subr.mxu0 0.0
      %2309 = vmatpush1.msra.mxu0 0.0
      %2310 = vmatprep.subr.mxu0 0.0
      %2311 = vmatpush1.msra.mxu0 0.0
      %2312 = vmatprep.subr.mxu0 0.0
      %2313 = vmatpush1.msra.mxu0 0.0
      %2314 = vmatprep.subr.mxu0 0.0
      %2315 = vmatpush1.msra.mxu0 0.0
      %2316 = vmatprep.subr.mxu0 0.0
      %2317 = vmatpush1.msra.mxu0 0.0
      %2318 = vmatprep.subr.mxu0 0.0
      %2319 = vmatpush1.msra.mxu0 0.0
      %2320 = vmatprep.subr.mxu0 0.0
      %2321 = vmatpush1.msra.mxu0 0.0
      %2322 = vmatprep.subr.mxu0 0.0
      %2323 = vmatpush1.msra.mxu0 0.0
      %2324 = vmatprep.subr.mxu0 0.0
      %2325 = vmatpush1.msra.mxu0 0.0
      %2326 = vmatprep.subr.mxu0 0.0
      %2327 = vmatpush1.msra.mxu0 0.0
      %2328 = vmatprep.subr.mxu0 0.0
      %2329 = vmatpush1.msra.mxu0 0.0
      %2330 = vmatprep.subr.mxu0 0.0
      %2331 = vmatpush1.msra.mxu0 0.0
      %2332 = vmatprep.subr.mxu0 0.0
      %2333 = vmatpush1.msra.mxu0 0.0
      %2334 = vmatprep.subr.mxu0 0.0
      %2335 = vmatpush1.msra.mxu0 0.0
      %2336 = vmatprep.subr.mxu0 0.0
      %2337 = vmatpush1.msra.mxu0 0.0
      %2338 = vmatprep.subr.mxu0 0.0
      %2339 = vmatpush1.msra.mxu0 0.0
      %2340 = vmatprep.subr.mxu0 0.0
      %2341 = vmatpush1.msra.mxu0 0.0
      %2342 = vmatprep.subr.mxu0 0.0
      %2343 = vmatpush1.msra.mxu0 0.0
      %2344 = vmatprep.subr.mxu0 0.0
      %2345 = vmatpush1.msra.mxu0 0.0
      %2346 = vmatprep.subr.mxu0 0.0
      %2347 = vmatpush1.msra.mxu0 0.0
      %2348 = vmatprep.subr.mxu0 0.0
      %2349 = vmatpush1.msra.mxu0 0.0
      %2350 = vmatprep.subr.mxu0 0.0
      %2351 = vmatpush1.msra.mxu0 0.0
      %2352 = vmatprep.subr.mxu0 0.0
      %2353 = vmatpush1.msra.mxu0 0.0
      %2354 = vmatprep.subr.mxu0 0.0
      %2355 = vmatpush1.msra.mxu0 0.0
      %2356 = vmatprep.mubr.f32.mxu0 0.0
      %2357 = vmatmul.mubr.f32.gmra.mrb[0].mxu0 %v2290
      %v2358 = vpop.f32.mrb[0].mxu0
      %v2359 = vadd.f32 %v470, %v2358
      %v2360 = vpop.f32.mrb[0].mxu0
      %2361 = vdwg.mxu0
      %v2362 = vmul.f32 %v450, %v2099
      %v2363 = vmul.f32 %v457, %v2109
      %v2364 = vadd.f32 %v2362, %v2363
      %v2365 = vadd.f32 %v2364, 0.01
      %v2366 = vmul.f32 %v2105, 0.95122945
      %v2367 = vmul.f32 %v2359, 0.048770547
      %v2368 = vadd.f32 %v2366, %v2367
      %v2369 = vmul.f32 %v2365, %v2109
      %v2370 = vsub.f32 %v2368, %v2369
      %v2371 = vsub.f32 %v2370, %v2365
      %vm2372 = vcmp.gt.f32.partialorder %v2371, 0.0
      %v2373 = vsel %vm2372, 1, 0
      %v2374 = vcvt.s32.f32 %v2373
      %v2375 = vadd.f32 %v2110, %v2374
    $region66: #{lsnn_forward.1} parent=1 // loop_footer
      %s477 = sadd.s32 1, %s473
    $region67: #{lsnn_forward.1} parent=1 // loop_footer_branch
      %472 = sbr.rel target = $region63
    $region68: #{lsnn_forward.1} parent=1 // loop_exit
      _
    %v2376 = vld [vmem:[%s8] sm:$0xff]
    %v2377 = vld [vmem:[%s8 + $0x8] sm:$0xff]
    %v2378 = vld [vmem:[%s8 + $0x10] sm:$0xff]
    %v2379 = vld [vmem:[%s8 + $0x18] sm:$0xff]
    %v2380 = vld [vmem:[%s8 + $0x20] sm:$0xff]
    %v2381 = vld [vmem:[%s8 + $0x28] sm:$0xff]
    %v2382 = vld [vmem:[%s8 + $0x30] sm:$0xff]
    %v2383 = vld [vmem:[%s8 + $0x38] sm:$0xff]
    %v2385 = vsel %vm402, %v487, 0
    %2387 = vmatprep.subr.mxu0 0.0
    %2388 = vmatpush1.msra.mxu0 %v2376
    %2389 = vmatprep.subr.mxu0 0.0
    %2390 = vmatpush1.msra.mxu0 %v2377
    %2391 = vmatprep.subr.mxu0 0.0
    %2392 = vmatpush1.msra.mxu0 %v2378
    %2393 = vmatprep.subr.mxu0 0.0
    %2394 = vmatpush1.msra.mxu0 %v2379
    %2395 = vmatprep.subr.mxu0 0.0
    %2396 = vmatpush1.msra.mxu0 %v2380
    %2397 = vmatprep.subr.mxu0 0.0
    %2398 = vmatpush1.msra.mxu0 %v2381
    %2399 = vmatprep.subr.mxu0 0.0
    %2400 = vmatpush1.msra.mxu0 %v2382
    %2401 = vmatprep.subr.mxu0 0.0
    %2402 = vmatpush1.msra.mxu0 %v2383
    %2403 = vmatprep.subr.mxu0 0.0
    %2404 = vmatpush1.msra.mxu0 0.0
    %2405 = vmatprep.subr.mxu0 0.0
    %2406 = vmatpush1.msra.mxu0 0.0
    %2407 = vmatprep.subr.mxu0 0.0
    %2408 = vmatpush1.msra.mxu0 0.0
    %2409 = vmatprep.subr.mxu0 0.0
    %2410 = vmatpush1.msra.mxu0 0.0
    %2411 = vmatprep.subr.mxu0 0.0
    %2412 = vmatpush1.msra.mxu0 0.0
    %2413 = vmatprep.subr.mxu0 0.0
    %2414 = vmatpush1.msra.mxu0 0.0
    %2415 = vmatprep.subr.mxu0 0.0
    %2416 = vmatpush1.msra.mxu0 0.0
    %2417 = vmatprep.subr.mxu0 0.0
    %2418 = vmatpush1.msra.mxu0 0.0
    %2419 = vmatprep.subr.mxu0 0.0
    %2420 = vmatpush1.msra.mxu0 0.0
    %2421 = vmatprep.subr.mxu0 0.0
    %2422 = vmatpush1.msra.mxu0 0.0
    %2423 = vmatprep.subr.mxu0 0.0
    %2424 = vmatpush1.msra.mxu0 0.0
    %2425 = vmatprep.subr.mxu0 0.0
    %2426 = vmatpush1.msra.mxu0 0.0
    %2427 = vmatprep.subr.mxu0 0.0
    %2428 = vmatpush1.msra.mxu0 0.0
    %2429 = vmatprep.subr.mxu0 0.0
    %2430 = vmatpush1.msra.mxu0 0.0
    %2431 = vmatprep.subr.mxu0 0.0
    %2432 = vmatpush1.msra.mxu0 0.0
    %2433 = vmatprep.subr.mxu0 0.0
    %2434 = vmatpush1.msra.mxu0 0.0
    %2435 = vmatprep.subr.mxu0 0.0
    %2436 = vmatpush1.msra.mxu0 0.0
    %2437 = vmatprep.subr.mxu0 0.0
    %2438 = vmatpush1.msra.mxu0 0.0
    %2439 = vmatprep.subr.mxu0 0.0
    %2440 = vmatpush1.msra.mxu0 0.0
    %2441 = vmatprep.subr.mxu0 0.0
    %2442 = vmatpush1.msra.mxu0 0.0
    %2443 = vmatprep.subr.mxu0 0.0
    %2444 = vmatpush1.msra.mxu0 0.0
    %2445 = vmatprep.subr.mxu0 0.0
    %2446 = vmatpush1.msra.mxu0 0.0
    %2447 = vmatprep.subr.mxu0 0.0
    %2448 = vmatpush1.msra.mxu0 0.0
    %2449 = vmatprep.subr.mxu0 0.0
    %2450 = vmatpush1.msra.mxu0 0.0
    %2451 = vmatprep.mubr.f32.mxu0 0.0
    %2452 = vmatmul.mubr.f32.gmra.mrb[0].mxu0 %v2385
    %v2453 = vpop.f32.mrb[0].mxu0
    %v2454 = vadd.f32 0.0, %v2453
    %v2455 = vpop.f32.mrb[0].mxu0
    %2456 = vdwg.mxu0
    %v2457 = vmul.f32 %v2454, 0.035714287
    %v2458 = vld [vmem:[#allocation6] sm:$0x1]
    %v2460 = vlaneseq
    %v2461 = vshrl.u32 %v2460, 7
    %v2462 = vsub.s32 0, %v2461
    %v2463 = vrot.slane %v2458, %v2462
    %v2465 = vadd.f32 %v2457, %v2463
    %vm2466 = vcmask 80896
    %2467 = vst.msk [vmem:[#allocation8] sm:$0xff] %vm2466, %v2465
    // Predicated region
    $region69: #{lsnn_forward.1} parent=1 // pred_check
      _
    $region70: #{lsnn_forward.1} parent=1 // pred_check_branch
      %2469 = sbr.rel (0) target = $region72
    $region71: #{lsnn_forward.1} parent=1 // pred_region
      %s2471 = ssub.s32 128, 128
      %2472 = vsyncadd [#allocation5], %s2471
      %s2474 = sshll.u32 [#allocation8], 4
      %s2475 = int_to_ptr.vmem [resolvable:$true] %s2474
      %2477 = dma.vmem_to_hbm [thread:$0]  %s2475, 128, %s13, [#allocation5]
    $region72: #{lsnn_forward.1} parent=1 // pred_fallthru
      _
    // Predicated region
    $region73: #{lsnn_forward.1} parent=1 // pred_check
      _
    $region74: #{lsnn_forward.1} parent=1 // pred_check_branch
      %2479 = sbr.rel (0) target = $region76
    $region75: #{lsnn_forward.1} parent=1 // pred_region
      %2480 = dma.done [#allocation5], 128
    $region76: #{lsnn_forward.1} parent=1 // pred_fallthru
      _
    %2481 = vsyncpa [#allocation4], 1
    %2482 = vsyncpa [#allocation7], 1
    %2483 = vsyncpa [#allocation5], 1

</llo_original>
